<compile_context>
chip_gen: v6e
topology: v6e:2x2x1
jax: 0.10.0
libtpu: 0.0.40
codegen_flags: <defaults>
</compile_context>

<pallas_src>
import jax
import jax.numpy as jnp
from jax.experimental import pallas as pl
from jax.experimental.pallas import tpu as pltpu

# Original layer sizes (encoder then decoder).
SIZES = [28 * 28, 256, 128, 64, 32, 44, 64, 80, 28 * 28]
# ReLU after every Linear except the encoder's last and the decoder's last.
RELU_AFTER = [True, True, True, False, True, True, True, False]
N_LAYERS = len(SIZES) - 1

LANE = 128


def _round_up(n, m):
    return ((n + m - 1) // m) * m


# Kernel-side feature sizes: interior dims padded to lane multiples; the input
# (784) and output (784) keep their true widths (block dim == full array dim,
# so no wrapper-side pad or post-kernel slice is needed).
# -> [784, 256, 128, 128, 128, 128, 128, 128, 784]
KSIZES = [SIZES[0]] + [_round_up(s, LANE) for s in SIZES[1:-1]] + [SIZES[-1]]


def _pick_batch_tile(batch):
    """Batch tile: big enough to fill the 256-row MXU (v6e/v7x) and amortize
    per-grid-step overhead, but keep >= 2 grid steps when the batch allows so
    the 'parallel' batch axis can shard across both v7x TensorCores."""
    if batch >= 1024:
        return 512
    if batch >= 512:
        return 256
    return 128


def autoencoder_kernel(x_ref, *param_and_out_refs):
    """x_ref: (TB, 784) f32; params: (w, b) x 8 (bf16 / f32); o_ref: (TB, 784)."""
    param_refs = param_and_out_refs[:-1]
    o_ref = param_and_out_refs[-1]

    # f32 -> bf16 cast on the VMEM tile (no extra wrapper HBM pass).
    h = x_ref[...].astype(jnp.bfloat16)
    for l in range(N_LAYERS):
        w = param_refs[2 * l][...]        # (KSIZES[l], KSIZES[l+1]) bf16
        b = param_refs[2 * l + 1][...]    # (1, KSIZES[l+1])         f32
        # bf16 x bf16 MXU matmul with f32 accumulation; bias/ReLU in f32.
        h = jnp.dot(h, w, preferred_element_type=jnp.float32) + b
        if RELU_AFTER[l]:
            h = jnp.maximum(h, 0.0)
        if l < N_LAYERS - 1:
            h = h.astype(jnp.bfloat16)
    o_ref[...] = h.astype(o_ref.dtype)


def prepare_params(params):
    """Pad/cast PyTorch-layout params to the kernel's lane-dense forms.

    Call once and reuse (keeps the per-call jitted path free of these 16 small
    pad/cast ops).  Padding is exact: zero weight cols + zero bias entries make
    the padded activation columns zero, and zero weight rows in the next layer
    ignore them."""
    kern_params = []
    for l in range(N_LAYERS):
        w, b = params[2 * l], params[2 * l + 1]
        pin, pout = KSIZES[l], KSIZES[l + 1]
        wp = jnp.pad(w, ((0, pin - w.shape[0]), (0, pout - w.shape[1])))
        bp = jnp.pad(b.reshape(1, -1), ((0, 0), (0, pout - b.shape[-1])))
        kern_params += [wp.astype(jnp.bfloat16), bp.astype(jnp.float32)]
    return kern_params


@jax.jit
def deep_autoencoder(x_nchw, kern_params):
    """x_nchw: (B, 1, 28, 28) f32.  kern_params: output of prepare_params()."""
    B = x_nchw.shape[0]
    x = x_nchw.reshape(B, SIZES[0]).astype(jnp.float32)  # free (metadata) reshape

    TB = _pick_batch_tile(B)
    grid = (pl.cdiv(B, TB),)  # partial last block: Pallas masks the store

    # Input/output tiles march over the batch; each parameter block is the
    # whole (small) array, constant across the grid (fetched only once).
    # TODO(synk): pipeline_mode=pl.Buffered(1) on the constant param blocks
    # would save ~1 MiB of double-buffer VMEM; skipped since it is negligible
    # here and its TPU lowering support is version-dependent.
    in_specs = [pl.BlockSpec((TB, SIZES[0]), lambda i: (i, 0))]
    for l in range(N_LAYERS):
        pin, pout = KSIZES[l], KSIZES[l + 1]
        in_specs.append(pl.BlockSpec((pin, pout), lambda i: (0, 0)))  # weight
        in_specs.append(pl.BlockSpec((1, pout), lambda i: (0, 0)))    # bias
    out_spec = pl.BlockSpec((TB, SIZES[-1]), lambda i: (i, 0))

    # Advisory cost hint for XLA's scheduler (kernel is HBM-bandwidth bound).
    flops = 2 * B * sum(KSIZES[l] * KSIZES[l + 1] for l in range(N_LAYERS))
    param_bytes = sum(KSIZES[l] * KSIZES[l + 1] * 2 + KSIZES[l + 1] * 4
                      for l in range(N_LAYERS))
    bytes_accessed = B * SIZES[0] * 4 + B * SIZES[-1] * 4 + param_bytes

    return pl.pallas_call(
        autoencoder_kernel,
        out_shape=jax.ShapeDtypeStruct((B, SIZES[-1]), jnp.float32),
        grid=grid,
        in_specs=in_specs,
        out_specs=out_spec,
        compiler_params=pltpu.CompilerParams(
            dimension_semantics=("parallel",),
            vmem_limit_bytes=32 << 20,
        ),
        cost_estimate=pl.CostEstimate(
            flops=flops, transcendentals=0, bytes_accessed=bytes_accessed),
    )(x, *kern_params)


def init_params(key):
    """Deterministic PyTorch-Linear-style init: U(-1/sqrt(in), 1/sqrt(in))."""
    params = []
    for l in range(N_LAYERS):
        din, dout = SIZES[l], SIZES[l + 1]
        key, kw, kb = jax.random.split(key, 3)
        bound = 1.0 / jnp.sqrt(float(din))
        w = jax.random.uniform(kw, (din, dout), jnp.float32, -bound, bound)
        b = jax.random.uniform(kb, (1, dout), jnp.float32, -bound, bound)
        params += [w, b]
    return params


def reference(x_nchw, params):
    """Plain-JAX f32 reference matching the PyTorch forward."""
    h = x_nchw.reshape(x_nchw.shape[0], -1)
    for l in range(N_LAYERS):
        w, b = params[2 * l], params[2 * l + 1]
        h = h @ w + b
        if RELU_AFTER[l]:
            h = jnp.maximum(h, 0.0)
    return h


if __name__ == "__main__":
    key = jax.random.PRNGKey(0)
    key, kx = jax.random.split(key)
    # B=200 -> TB=128, grid=(2,) with a masked partial last block: exercises
    # the multi-step "parallel" grid and the boundary-masking path while
    # staying small.
    B = 200
    x = jax.random.normal(kx, (B, 1, 28, 28), jnp.float32)
    params = init_params(key)

    kern_params = prepare_params(params)  # one-time pad/cast, outside jit path
    out = jax.block_until_ready(deep_autoencoder(x, kern_params))
    ref = reference(x, params)

    assert out.shape == (B, 28 * 28)
    # bf16 matmul inputs with f32 accumulation vs an f32 reference: observed
    # error is well inside this bound.
    assert jnp.allclose(out, ref, atol=5e-2, rtol=5e-2), "mismatch vs reference"

    print("KERNEL_OK")
</pallas_src>

<mosaic_0001>
module attributes {stable_mosaic.version = 11 : i64} {
  func.func @autoencoder_kernel(%arg0: i32, %arg1: memref<128x784xf32, #tpu.memory_space<vmem>>, %arg2: memref<784x256xbf16, #tpu.memory_space<vmem>>, %arg3: memref<1x256xf32, #tpu.memory_space<vmem>>, %arg4: memref<256x128xbf16, #tpu.memory_space<vmem>>, %arg5: memref<1x128xf32, #tpu.memory_space<vmem>>, %arg6: memref<128x128xbf16, #tpu.memory_space<vmem>>, %arg7: memref<1x128xf32, #tpu.memory_space<vmem>>, %arg8: memref<128x128xbf16, #tpu.memory_space<vmem>>, %arg9: memref<1x128xf32, #tpu.memory_space<vmem>>, %arg10: memref<128x128xbf16, #tpu.memory_space<vmem>>, %arg11: memref<1x128xf32, #tpu.memory_space<vmem>>, %arg12: memref<128x128xbf16, #tpu.memory_space<vmem>>, %arg13: memref<1x128xf32, #tpu.memory_space<vmem>>, %arg14: memref<128x128xbf16, #tpu.memory_space<vmem>>, %arg15: memref<1x128xf32, #tpu.memory_space<vmem>>, %arg16: memref<128x784xbf16, #tpu.memory_space<vmem>>, %arg17: memref<1x784xf32, #tpu.memory_space<vmem>>, %arg18: memref<128x784xf32, #tpu.memory_space<vmem>>) attributes {dimension_semantics = [#tpu.dimension_semantics<parallel>], iteration_bounds = array<i64: 2>, scalar_prefetch = 0 : i64, scratch_operands = 0 : i64, tpu.core_type = #tpu.core_type<tc>, window_params = [{transform_indices = @transform_0, window_bounds = array<i64: 128, 784>}, {pipeline_mode = #tpu.pipeline_mode<synchronous>, transform_indices = @transform_1, window_bounds = array<i64: 784, 256>}, {pipeline_mode = #tpu.pipeline_mode<synchronous>, transform_indices = @transform_2, window_bounds = array<i64: 1, 256>}, {pipeline_mode = #tpu.pipeline_mode<synchronous>, transform_indices = @transform_3, window_bounds = array<i64: 256, 128>}, {pipeline_mode = #tpu.pipeline_mode<synchronous>, transform_indices = @transform_4, window_bounds = array<i64: 1, 128>}, {pipeline_mode = #tpu.pipeline_mode<synchronous>, transform_indices = @transform_5, window_bounds = array<i64: 128, 128>}, {pipeline_mode = #tpu.pipeline_mode<synchronous>, transform_indices = @transform_6, window_bounds = array<i64: 1, 128>}, {pipeline_mode = #tpu.pipeline_mode<synchronous>, transform_indices = @transform_7, window_bounds = array<i64: 128, 128>}, {pipeline_mode = #tpu.pipeline_mode<synchronous>, transform_indices = @transform_8, window_bounds = array<i64: 1, 128>}, {pipeline_mode = #tpu.pipeline_mode<synchronous>, transform_indices = @transform_9, window_bounds = array<i64: 128, 128>}, {pipeline_mode = #tpu.pipeline_mode<synchronous>, transform_indices = @transform_10, window_bounds = array<i64: 1, 128>}, {pipeline_mode = #tpu.pipeline_mode<synchronous>, transform_indices = @transform_11, window_bounds = array<i64: 128, 128>}, {pipeline_mode = #tpu.pipeline_mode<synchronous>, transform_indices = @transform_12, window_bounds = array<i64: 1, 128>}, {pipeline_mode = #tpu.pipeline_mode<synchronous>, transform_indices = @transform_13, window_bounds = array<i64: 128, 128>}, {pipeline_mode = #tpu.pipeline_mode<synchronous>, transform_indices = @transform_14, window_bounds = array<i64: 1, 128>}, {pipeline_mode = #tpu.pipeline_mode<synchronous>, transform_indices = @transform_15, window_bounds = array<i64: 128, 784>}, {pipeline_mode = #tpu.pipeline_mode<synchronous>, transform_indices = @transform_16, window_bounds = array<i64: 1, 784>}, {transform_indices = @transform_17, window_bounds = array<i64: 128, 784>}]} {
    %c0 = arith.constant 0 : index
    %c0_0 = arith.constant 0 : index
    %0 = vector.load %arg1[%c0, %c0_0] : memref<128x784xf32, #tpu.memory_space<vmem>>, vector<128x784xf32>
    %1 = arith.truncf %0 : vector<128x784xf32> to vector<128x784xbf16>
    %c0_1 = arith.constant 0 : index
    %c0_2 = arith.constant 0 : index
    %2 = vector.load %arg2[%c0_1, %c0_2] : memref<784x256xbf16, #tpu.memory_space<vmem>>, vector<784x256xbf16>
    %c0_3 = arith.constant 0 : index
    %c0_4 = arith.constant 0 : index
    %3 = vector.load %arg3[%c0_3, %c0_4] : memref<1x256xf32, #tpu.memory_space<vmem>>, vector<1x256xf32>
    %cst = arith.constant dense<0.000000e+00> : vector<128x256xf32>
    %4 = tpu.matmul %1, %2, %cst {dimension_numbers = #tpu.dot_dimension_numbers<[1], [0], [0], [1], [0, 0, 1, 1], [], []>} : vector<128x784xbf16>, vector<784x256xbf16>, vector<128x256xf32> -> vector<128x256xf32>
    %5 = vector.broadcast %3 : vector<1x256xf32> to vector<128x256xf32>
    %6 = arith.addf %4, %5 : vector<128x256xf32>
    %cst_5 = arith.constant 0.000000e+00 : f32
    %7 = vector.broadcast %cst_5 : f32 to vector<128x256xf32>
    %8 = arith.maximumf %6, %7 : vector<128x256xf32>
    %9 = arith.truncf %8 : vector<128x256xf32> to vector<128x256xbf16>
    %c0_6 = arith.constant 0 : index
    %c0_7 = arith.constant 0 : index
    %10 = vector.load %arg4[%c0_6, %c0_7] : memref<256x128xbf16, #tpu.memory_space<vmem>>, vector<256x128xbf16>
    %c0_8 = arith.constant 0 : index
    %c0_9 = arith.constant 0 : index
    %11 = vector.load %arg5[%c0_8, %c0_9] : memref<1x128xf32, #tpu.memory_space<vmem>>, vector<1x128xf32>
    %cst_10 = arith.constant dense<0.000000e+00> : vector<128x128xf32>
    %12 = tpu.matmul %9, %10, %cst_10 {dimension_numbers = #tpu.dot_dimension_numbers<[1], [0], [0], [1], [0, 0, 1, 1], [], []>} : vector<128x256xbf16>, vector<256x128xbf16>, vector<128x128xf32> -> vector<128x128xf32>
    %13 = vector.broadcast %11 : vector<1x128xf32> to vector<128x128xf32>
    %14 = arith.addf %12, %13 : vector<128x128xf32>
    %cst_11 = arith.constant 0.000000e+00 : f32
    %15 = vector.broadcast %cst_11 : f32 to vector<128x128xf32>
    %16 = arith.maximumf %14, %15 : vector<128x128xf32>
    %17 = arith.truncf %16 : vector<128x128xf32> to vector<128x128xbf16>
    %c0_12 = arith.constant 0 : index
    %c0_13 = arith.constant 0 : index
    %18 = vector.load %arg6[%c0_12, %c0_13] : memref<128x128xbf16, #tpu.memory_space<vmem>>, vector<128x128xbf16>
    %c0_14 = arith.constant 0 : index
    %c0_15 = arith.constant 0 : index
    %19 = vector.load %arg7[%c0_14, %c0_15] : memref<1x128xf32, #tpu.memory_space<vmem>>, vector<1x128xf32>
    %cst_16 = arith.constant dense<0.000000e+00> : vector<128x128xf32>
    %20 = tpu.matmul %17, %18, %cst_16 {dimension_numbers = #tpu.dot_dimension_numbers<[1], [0], [0], [1], [0, 0, 1, 1], [], []>} : vector<128x128xbf16>, vector<128x128xbf16>, vector<128x128xf32> -> vector<128x128xf32>
    %21 = vector.broadcast %19 : vector<1x128xf32> to vector<128x128xf32>
    %22 = arith.addf %20, %21 : vector<128x128xf32>
    %cst_17 = arith.constant 0.000000e+00 : f32
    %23 = vector.broadcast %cst_17 : f32 to vector<128x128xf32>
    %24 = arith.maximumf %22, %23 : vector<128x128xf32>
    %25 = arith.truncf %24 : vector<128x128xf32> to vector<128x128xbf16>
    %c0_18 = arith.constant 0 : index
    %c0_19 = arith.constant 0 : index
    %26 = vector.load %arg8[%c0_18, %c0_19] : memref<128x128xbf16, #tpu.memory_space<vmem>>, vector<128x128xbf16>
    %c0_20 = arith.constant 0 : index
    %c0_21 = arith.constant 0 : index
    %27 = vector.load %arg9[%c0_20, %c0_21] : memref<1x128xf32, #tpu.memory_space<vmem>>, vector<1x128xf32>
    %cst_22 = arith.constant dense<0.000000e+00> : vector<128x128xf32>
    %28 = tpu.matmul %25, %26, %cst_22 {dimension_numbers = #tpu.dot_dimension_numbers<[1], [0], [0], [1], [0, 0, 1, 1], [], []>} : vector<128x128xbf16>, vector<128x128xbf16>, vector<128x128xf32> -> vector<128x128xf32>
    %29 = vector.broadcast %27 : vector<1x128xf32> to vector<128x128xf32>
    %30 = arith.addf %28, %29 : vector<128x128xf32>
    %31 = arith.truncf %30 : vector<128x128xf32> to vector<128x128xbf16>
    %c0_23 = arith.constant 0 : index
    %c0_24 = arith.constant 0 : index
    %32 = vector.load %arg10[%c0_23, %c0_24] : memref<128x128xbf16, #tpu.memory_space<vmem>>, vector<128x128xbf16>
    %c0_25 = arith.constant 0 : index
    %c0_26 = arith.constant 0 : index
    %33 = vector.load %arg11[%c0_25, %c0_26] : memref<1x128xf32, #tpu.memory_space<vmem>>, vector<1x128xf32>
    %cst_27 = arith.constant dense<0.000000e+00> : vector<128x128xf32>
    %34 = tpu.matmul %31, %32, %cst_27 {dimension_numbers = #tpu.dot_dimension_numbers<[1], [0], [0], [1], [0, 0, 1, 1], [], []>} : vector<128x128xbf16>, vector<128x128xbf16>, vector<128x128xf32> -> vector<128x128xf32>
    %35 = vector.broadcast %33 : vector<1x128xf32> to vector<128x128xf32>
    %36 = arith.addf %34, %35 : vector<128x128xf32>
    %cst_28 = arith.constant 0.000000e+00 : f32
    %37 = vector.broadcast %cst_28 : f32 to vector<128x128xf32>
    %38 = arith.maximumf %36, %37 : vector<128x128xf32>
    %39 = arith.truncf %38 : vector<128x128xf32> to vector<128x128xbf16>
    %c0_29 = arith.constant 0 : index
    %c0_30 = arith.constant 0 : index
    %40 = vector.load %arg12[%c0_29, %c0_30] : memref<128x128xbf16, #tpu.memory_space<vmem>>, vector<128x128xbf16>
    %c0_31 = arith.constant 0 : index
    %c0_32 = arith.constant 0 : index
    %41 = vector.load %arg13[%c0_31, %c0_32] : memref<1x128xf32, #tpu.memory_space<vmem>>, vector<1x128xf32>
    %cst_33 = arith.constant dense<0.000000e+00> : vector<128x128xf32>
    %42 = tpu.matmul %39, %40, %cst_33 {dimension_numbers = #tpu.dot_dimension_numbers<[1], [0], [0], [1], [0, 0, 1, 1], [], []>} : vector<128x128xbf16>, vector<128x128xbf16>, vector<128x128xf32> -> vector<128x128xf32>
    %43 = vector.broadcast %41 : vector<1x128xf32> to vector<128x128xf32>
    %44 = arith.addf %42, %43 : vector<128x128xf32>
    %cst_34 = arith.constant 0.000000e+00 : f32
    %45 = vector.broadcast %cst_34 : f32 to vector<128x128xf32>
    %46 = arith.maximumf %44, %45 : vector<128x128xf32>
    %47 = arith.truncf %46 : vector<128x128xf32> to vector<128x128xbf16>
    %c0_35 = arith.constant 0 : index
    %c0_36 = arith.constant 0 : index
    %48 = vector.load %arg14[%c0_35, %c0_36] : memref<128x128xbf16, #tpu.memory_space<vmem>>, vector<128x128xbf16>
    %c0_37 = arith.constant 0 : index
    %c0_38 = arith.constant 0 : index
    %49 = vector.load %arg15[%c0_37, %c0_38] : memref<1x128xf32, #tpu.memory_space<vmem>>, vector<1x128xf32>
    %cst_39 = arith.constant dense<0.000000e+00> : vector<128x128xf32>
    %50 = tpu.matmul %47, %48, %cst_39 {dimension_numbers = #tpu.dot_dimension_numbers<[1], [0], [0], [1], [0, 0, 1, 1], [], []>} : vector<128x128xbf16>, vector<128x128xbf16>, vector<128x128xf32> -> vector<128x128xf32>
    %51 = vector.broadcast %49 : vector<1x128xf32> to vector<128x128xf32>
    %52 = arith.addf %50, %51 : vector<128x128xf32>
    %cst_40 = arith.constant 0.000000e+00 : f32
    %53 = vector.broadcast %cst_40 : f32 to vector<128x128xf32>
    %54 = arith.maximumf %52, %53 : vector<128x128xf32>
    %55 = arith.truncf %54 : vector<128x128xf32> to vector<128x128xbf16>
    %c0_41 = arith.constant 0 : index
    %c0_42 = arith.constant 0 : index
    %56 = vector.load %arg16[%c0_41, %c0_42] : memref<128x784xbf16, #tpu.memory_space<vmem>>, vector<128x784xbf16>
    %c0_43 = arith.constant 0 : index
    %c0_44 = arith.constant 0 : index
    %57 = vector.load %arg17[%c0_43, %c0_44] : memref<1x784xf32, #tpu.memory_space<vmem>>, vector<1x784xf32>
    %cst_45 = arith.constant dense<0.000000e+00> : vector<128x784xf32>
    %58 = tpu.matmul %55, %56, %cst_45 {dimension_numbers = #tpu.dot_dimension_numbers<[1], [0], [0], [1], [0, 0, 1, 1], [], []>} : vector<128x128xbf16>, vector<128x784xbf16>, vector<128x784xf32> -> vector<128x784xf32>
    %59 = vector.broadcast %57 : vector<1x784xf32> to vector<128x784xf32>
    %60 = arith.addf %58, %59 : vector<128x784xf32>
    %c0_46 = arith.constant 0 : index
    %c0_47 = arith.constant 0 : index
    %61 = vector.load %arg18[%c0_46, %c0_47] : memref<128x784xf32, #tpu.memory_space<vmem>>, vector<128x784xf32>
    tpu.vector_store %arg18[%c0_46, %c0_47], %60 {strides = array<i32>} : memref<128x784xf32, #tpu.memory_space<vmem>>, vector<128x784xf32>,
    return
  }
  func.func @transform_0(%arg0: i32) -> (i32, i32) {
    %c0_i32 = arith.constant 0 : i32
    %c0_i32_0 = arith.constant 0 : i32
    return %arg0, %c0_i32 : i32, i32
  }
  func.func @transform_1(%arg0: i32) -> (i32, i32) {
    %c0_i32 = arith.constant 0 : i32
    %c0_i32_0 = arith.constant 0 : i32
    %c0_i32_1 = arith.constant 0 : i32
    return %c0_i32, %c0_i32_0 : i32, i32
  }
  func.func @transform_2(%arg0: i32) -> (i32, i32) {
    %c0_i32 = arith.constant 0 : i32
    %c0_i32_0 = arith.constant 0 : i32
    %c0_i32_1 = arith.constant 0 : i32
    return %c0_i32, %c0_i32_0 : i32, i32
  }
  func.func @transform_3(%arg0: i32) -> (i32, i32) {
    %c0_i32 = arith.constant 0 : i32
    %c0_i32_0 = arith.constant 0 : i32
    %c0_i32_1 = arith.constant 0 : i32
    return %c0_i32, %c0_i32_0 : i32, i32
  }
  func.func @transform_4(%arg0: i32) -> (i32, i32) {
    %c0_i32 = arith.constant 0 : i32
    %c0_i32_0 = arith.constant 0 : i32
    %c0_i32_1 = arith.constant 0 : i32
    return %c0_i32, %c0_i32_0 : i32, i32
  }
  func.func @transform_5(%arg0: i32) -> (i32, i32) {
    %c0_i32 = arith.constant 0 : i32
    %c0_i32_0 = arith.constant 0 : i32
    %c0_i32_1 = arith.constant 0 : i32
    return %c0_i32, %c0_i32_0 : i32, i32
  }
  func.func @transform_6(%arg0: i32) -> (i32, i32) {
    %c0_i32 = arith.constant 0 : i32
    %c0_i32_0 = arith.constant 0 : i32
    %c0_i32_1 = arith.constant 0 : i32
    return %c0_i32, %c0_i32_0 : i32, i32
  }
  func.func @transform_7(%arg0: i32) -> (i32, i32) {
    %c0_i32 = arith.constant 0 : i32
    %c0_i32_0 = arith.constant 0 : i32
    %c0_i32_1 = arith.constant 0 : i32
    return %c0_i32, %c0_i32_0 : i32, i32
  }
  func.func @transform_8(%arg0: i32) -> (i32, i32) {
    %c0_i32 = arith.constant 0 : i32
    %c0_i32_0 = arith.constant 0 : i32
    %c0_i32_1 = arith.constant 0 : i32
    return %c0_i32, %c0_i32_0 : i32, i32
  }
  func.func @transform_9(%arg0: i32) -> (i32, i32) {
    %c0_i32 = arith.constant 0 : i32
    %c0_i32_0 = arith.constant 0 : i32
    %c0_i32_1 = arith.constant 0 : i32
    return %c0_i32, %c0_i32_0 : i32, i32
  }
  func.func @transform_10(%arg0: i32) -> (i32, i32) {
    %c0_i32 = arith.constant 0 : i32
    %c0_i32_0 = arith.constant 0 : i32
    %c0_i32_1 = arith.constant 0 : i32
    return %c0_i32, %c0_i32_0 : i32, i32
  }
  func.func @transform_11(%arg0: i32) -> (i32, i32) {
    %c0_i32 = arith.constant 0 : i32
    %c0_i32_0 = arith.constant 0 : i32
    %c0_i32_1 = arith.constant 0 : i32
    return %c0_i32, %c0_i32_0 : i32, i32
  }
  func.func @transform_12(%arg0: i32) -> (i32, i32) {
    %c0_i32 = arith.constant 0 : i32
    %c0_i32_0 = arith.constant 0 : i32
    %c0_i32_1 = arith.constant 0 : i32
    return %c0_i32, %c0_i32_0 : i32, i32
  }
  func.func @transform_13(%arg0: i32) -> (i32, i32) {
    %c0_i32 = arith.constant 0 : i32
    %c0_i32_0 = arith.constant 0 : i32
    %c0_i32_1 = arith.constant 0 : i32
    return %c0_i32, %c0_i32_0 : i32, i32
  }
  func.func @transform_14(%arg0: i32) -> (i32, i32) {
    %c0_i32 = arith.constant 0 : i32
    %c0_i32_0 = arith.constant 0 : i32
    %c0_i32_1 = arith.constant 0 : i32
    return %c0_i32, %c0_i32_0 : i32, i32
  }
  func.func @transform_15(%arg0: i32) -> (i32, i32) {
    %c0_i32 = arith.constant 0 : i32
    %c0_i32_0 = arith.constant 0 : i32
    %c0_i32_1 = arith.constant 0 : i32
    return %c0_i32, %c0_i32_0 : i32, i32
  }
  func.func @transform_16(%arg0: i32) -> (i32, i32) {
    %c0_i32 = arith.constant 0 : i32
    %c0_i32_0 = arith.constant 0 : i32
    %c0_i32_1 = arith.constant 0 : i32
    return %c0_i32, %c0_i32_0 : i32, i32
  }
  func.func @transform_17(%arg0: i32) -> (i32, i32) {
    %c0_i32 = arith.constant 0 : i32
    %c0_i32_0 = arith.constant 0 : i32
    return %arg0, %c0_i32 : i32, i32
  }
}

</mosaic_0001>

<llo_original>
// kernel: deep_autoencoder.1
$region0: #{deep_autoencoder.1}
  #allocation0 [shape = 'u32[]', space=smem, size = 0x4, offset = 0x4, fixed_abs, tag = 'smem constant byte address 0x4 - core index']
  #allocation1 [shape = 'u32[144,128]{1,0:T(1,128)}', space=vmem, size = 0x12000, scoped, tag = 'internal scratch']
  %s0 = inlined_call_operand.vmem [shape: f32[200,784], index: 0, kind: input, shape index: {}]
  %s1 = inlined_call_operand.vmem [shape: bf16[784,256], index: 1, kind: input, shape index: {}]
  %s2 = inlined_call_operand.vmem [shape: f32[1,256], index: 2, kind: input, shape index: {}]
  %s3 = inlined_call_operand.vmem [shape: bf16[256,128], index: 3, kind: input, shape index: {}]
  %s4 = inlined_call_operand.vmem [shape: f32[1,128], index: 4, kind: input, shape index: {}]
  %s5 = inlined_call_operand.vmem [shape: bf16[128,128], index: 5, kind: input, shape index: {}]
  %s6 = inlined_call_operand.vmem [shape: f32[1,128], index: 6, kind: input, shape index: {}]
  %s7 = inlined_call_operand.vmem [shape: bf16[128,128], index: 7, kind: input, shape index: {}]
  %s8 = inlined_call_operand.vmem [shape: f32[1,128], index: 8, kind: input, shape index: {}]
  %s9 = inlined_call_operand.vmem [shape: bf16[128,128], index: 9, kind: input, shape index: {}]
  %s10 = inlined_call_operand.vmem [shape: f32[1,128], index: 10, kind: input, shape index: {}]
  %s11 = inlined_call_operand.vmem [shape: bf16[128,128], index: 11, kind: input, shape index: {}]
  %s12 = inlined_call_operand.vmem [shape: f32[1,128], index: 12, kind: input, shape index: {}]
  %s13 = inlined_call_operand.vmem [shape: bf16[128,128], index: 13, kind: input, shape index: {}]
  %s14 = inlined_call_operand.vmem [shape: f32[1,128], index: 14, kind: input, shape index: {}]
  %s15 = inlined_call_operand.vmem [shape: bf16[128,784], index: 15, kind: input, shape index: {}]
  %s16 = inlined_call_operand.vmem [shape: f32[1,784], index: 16, kind: input, shape index: {}]
  %s17 = inlined_call_operand.hbm [shape: f32[200,784], index: 17, kind: output, shape index: {}]
  %s18 = sld [smem:[#allocation0]]
  $region101: #{deep_autoencoder.1} parent=0
    _
  %s20 = ssub.s32 1, %s18
  %s21 = scalar_select 0, %s20, %s18
  $region1: #{deep_autoencoder.1} parent=0
    #allocation2 [shape = 'u8[917504]{0}', space=vmem, size = 0xe0000, scoped, tag = 'output window, operand 0']
    #allocation3 [shape = 's32[2]{0}', space=sflag, size = 0x8, scoped, tag = 'scoped memory for deep_autoencoder.1']
    %22 = vsyncpa [#allocation3], 0
    %s23 = scalar_lea.sflag [#allocation3], 1
    %24 = vsyncpa %s23, 0
    loop: start=0, step=1, limit=4
    $region2: #{deep_autoencoder.1} parent=1 // loop_pre_header
      _
    $region3: #{deep_autoencoder.1} parent=1 // loop_header
      %s26 = sphi 0, %s30
      %p27 = scmp.ge.s32.totalorder %s26, 4
      %s36 = sphi 0, %s38
      %s39 = sphi 0, %s36
      %s40 = sphi 0, %s39
      %s56 = sphi 0, %s40
      %s60 = sphi 0, %s60
      %s62 = sphi 0, %s60
      %s63 = sphi 0, %s62
      %s77 = sphi 0, %s63
      %s81 = sphi 0, %s81
      %s83 = sphi 0, %s81
      %s84 = sphi 0, %s83
      %s98 = sphi 0, %s84
      %s102 = sphi 0, %s102
      %s104 = sphi 0, %s102
      %s105 = sphi 0, %s104
      %s119 = sphi 0, %s105
      %s123 = sphi 0, %s123
      %s125 = sphi 0, %s123
      %s126 = sphi 0, %s125
      %s140 = sphi 0, %s126
      %s144 = sphi 0, %s144
      %s146 = sphi 0, %s144
      %s147 = sphi 0, %s146
      %s161 = sphi 0, %s147
      %s165 = sphi 0, %s165
      %s167 = sphi 0, %s165
      %s168 = sphi 0, %s167
      %s182 = sphi 0, %s168
      %s186 = sphi 0, %s186
      %s188 = sphi 0, %s186
      %s189 = sphi 0, %s188
      %s203 = sphi 0, %s189
      %s207 = sphi 0, %s207
      %s209 = sphi 0, %s207
      %s210 = sphi 0, %s209
      %s224 = sphi 0, %s210
      %s228 = sphi 0, %s228
      %s230 = sphi 0, %s228
      %s231 = sphi 0, %s230
      %s245 = sphi 0, %s231
      %s249 = sphi 0, %s249
      %s251 = sphi 0, %s249
      %s252 = sphi 0, %s251
      %s266 = sphi 0, %s252
      %s270 = sphi 0, %s270
      %s272 = sphi 0, %s270
      %s273 = sphi 0, %s272
      %s287 = sphi 0, %s273
      %s291 = sphi 0, %s291
      %s293 = sphi 0, %s291
      %s294 = sphi 0, %s293
      %s308 = sphi 0, %s294
      %s312 = sphi 0, %s312
      %s314 = sphi 0, %s312
      %s315 = sphi 0, %s314
      %s329 = sphi 0, %s315
      %s333 = sphi 0, %s333
      %s335 = sphi 0, %s333
      %s336 = sphi 0, %s335
      %s350 = sphi 0, %s336
      %s354 = sphi 0, %s354
      %s356 = sphi 0, %s354
      %s357 = sphi 0, %s356
      %s371 = sphi 0, %s357
      %s375 = sphi 0, %s375
      %s377 = sphi 0, %s375
      %s378 = sphi 0, %s377
      %s392 = sphi 0, %s378
      %s398 = sphi 0, %s400
      %s401 = sphi 0, %s398
      %s402 = sphi 0, %s401
      %s418 = sphi 0, %s402
    $region4: #{deep_autoencoder.1} parent=1 // loop_header_branch
      %29 = sbr.rel (%p27) target = $region8
    $region5: #{deep_autoencoder.1} parent=1 // loop_body
      %s31 = ssub.s32 %s26, 1
      %s32 = ssub.s32 %s26, 2
      %s33 = sadd.s32 %s26, 1
      %s34 = ssub.s32 %s26, %s33
      %p35 = scmp.eq.s32.totalorder %s34, 0
      %s37 = sadd.s32 %s36, 1
      %s38 = scalar_select %p35, %s36, %s37
      %p41 = pneg %p35
      %p42 = scmp.eq.s32.totalorder %s26, 1
      %p43 = por %p41, %p42
      %p44 = scmp.ne.s32.totalorder %s36, %s39
      %p45 = scmp.eq.s32.totalorder %s26, 0
      %p46 = por %p44, %p45
      %p47 = scmp.ne.s32.totalorder %s36, %s39
      %p48 = scmp.eq.s32.totalorder %s31, 1
      %p49 = por %p47, %p48
      %p50 = scmp.ne.s32.totalorder %s39, %s40
      %p51 = scmp.eq.s32.totalorder %s31, 0
      %p52 = por %p50, %p51
      %p53 = scmp.ne.s32.totalorder %s39, %s40
      %p54 = scmp.eq.s32.totalorder %s32, 1
      %p55 = por %p53, %p54
      %p57 = scmp.ne.s32.totalorder %s40, %s56
      %p58 = scmp.eq.s32.totalorder %s32, 0
      %p59 = por %p57, %p58
      %s61 = sadd.s32 %s60, 1
      %p64 = scmp.eq.s32.totalorder %s26, 1
      %p65 = scmp.ne.s32.totalorder %s60, %s62
      %p66 = scmp.eq.s32.totalorder %s26, 0
      %p67 = por %p65, %p66
      %p68 = scmp.ne.s32.totalorder %s60, %s62
      %p69 = scmp.eq.s32.totalorder %s31, 1
      %p70 = por %p68, %p69
      %p71 = scmp.ne.s32.totalorder %s62, %s63
      %p72 = scmp.eq.s32.totalorder %s31, 0
      %p73 = por %p71, %p72
      %p74 = scmp.ne.s32.totalorder %s62, %s63
      %p75 = scmp.eq.s32.totalorder %s32, 1
      %p76 = por %p74, %p75
      %p78 = scmp.ne.s32.totalorder %s63, %s77
      %p79 = scmp.eq.s32.totalorder %s32, 0
      %p80 = por %p78, %p79
      %s82 = sadd.s32 %s81, 1
      %p85 = scmp.eq.s32.totalorder %s26, 1
      %p86 = scmp.ne.s32.totalorder %s81, %s83
      %p87 = scmp.eq.s32.totalorder %s26, 0
      %p88 = por %p86, %p87
      %p89 = scmp.ne.s32.totalorder %s81, %s83
      %p90 = scmp.eq.s32.totalorder %s31, 1
      %p91 = por %p89, %p90
      %p92 = scmp.ne.s32.totalorder %s83, %s84
      %p93 = scmp.eq.s32.totalorder %s31, 0
      %p94 = por %p92, %p93
      %p95 = scmp.ne.s32.totalorder %s83, %s84
      %p96 = scmp.eq.s32.totalorder %s32, 1
      %p97 = por %p95, %p96
      %p99 = scmp.ne.s32.totalorder %s84, %s98
      %p100 = scmp.eq.s32.totalorder %s32, 0
      %p101 = por %p99, %p100
      %s103 = sadd.s32 %s102, 1
      %p106 = scmp.eq.s32.totalorder %s26, 1
      %p107 = scmp.ne.s32.totalorder %s102, %s104
      %p108 = scmp.eq.s32.totalorder %s26, 0
      %p109 = por %p107, %p108
      %p110 = scmp.ne.s32.totalorder %s102, %s104
      %p111 = scmp.eq.s32.totalorder %s31, 1
      %p112 = por %p110, %p111
      %p113 = scmp.ne.s32.totalorder %s104, %s105
      %p114 = scmp.eq.s32.totalorder %s31, 0
      %p115 = por %p113, %p114
      %p116 = scmp.ne.s32.totalorder %s104, %s105
      %p117 = scmp.eq.s32.totalorder %s32, 1
      %p118 = por %p116, %p117
      %p120 = scmp.ne.s32.totalorder %s105, %s119
      %p121 = scmp.eq.s32.totalorder %s32, 0
      %p122 = por %p120, %p121
      %s124 = sadd.s32 %s123, 1
      %p127 = scmp.eq.s32.totalorder %s26, 1
      %p128 = scmp.ne.s32.totalorder %s123, %s125
      %p129 = scmp.eq.s32.totalorder %s26, 0
      %p130 = por %p128, %p129
      %p131 = scmp.ne.s32.totalorder %s123, %s125
      %p132 = scmp.eq.s32.totalorder %s31, 1
      %p133 = por %p131, %p132
      %p134 = scmp.ne.s32.totalorder %s125, %s126
      %p135 = scmp.eq.s32.totalorder %s31, 0
      %p136 = por %p134, %p135
      %p137 = scmp.ne.s32.totalorder %s125, %s126
      %p138 = scmp.eq.s32.totalorder %s32, 1
      %p139 = por %p137, %p138
      %p141 = scmp.ne.s32.totalorder %s126, %s140
      %p142 = scmp.eq.s32.totalorder %s32, 0
      %p143 = por %p141, %p142
      %s145 = sadd.s32 %s144, 1
      %p148 = scmp.eq.s32.totalorder %s26, 1
      %p149 = scmp.ne.s32.totalorder %s144, %s146
      %p150 = scmp.eq.s32.totalorder %s26, 0
      %p151 = por %p149, %p150
      %p152 = scmp.ne.s32.totalorder %s144, %s146
      %p153 = scmp.eq.s32.totalorder %s31, 1
      %p154 = por %p152, %p153
      %p155 = scmp.ne.s32.totalorder %s146, %s147
      %p156 = scmp.eq.s32.totalorder %s31, 0
      %p157 = por %p155, %p156
      %p158 = scmp.ne.s32.totalorder %s146, %s147
      %p159 = scmp.eq.s32.totalorder %s32, 1
      %p160 = por %p158, %p159
      %p162 = scmp.ne.s32.totalorder %s147, %s161
      %p163 = scmp.eq.s32.totalorder %s32, 0
      %p164 = por %p162, %p163
      %s166 = sadd.s32 %s165, 1
      %p169 = scmp.eq.s32.totalorder %s26, 1
      %p170 = scmp.ne.s32.totalorder %s165, %s167
      %p171 = scmp.eq.s32.totalorder %s26, 0
      %p172 = por %p170, %p171
      %p173 = scmp.ne.s32.totalorder %s165, %s167
      %p174 = scmp.eq.s32.totalorder %s31, 1
      %p175 = por %p173, %p174
      %p176 = scmp.ne.s32.totalorder %s167, %s168
      %p177 = scmp.eq.s32.totalorder %s31, 0
      %p178 = por %p176, %p177
      %p179 = scmp.ne.s32.totalorder %s167, %s168
      %p180 = scmp.eq.s32.totalorder %s32, 1
      %p181 = por %p179, %p180
      %p183 = scmp.ne.s32.totalorder %s168, %s182
      %p184 = scmp.eq.s32.totalorder %s32, 0
      %p185 = por %p183, %p184
      %s187 = sadd.s32 %s186, 1
      %p190 = scmp.eq.s32.totalorder %s26, 1
      %p191 = scmp.ne.s32.totalorder %s186, %s188
      %p192 = scmp.eq.s32.totalorder %s26, 0
      %p193 = por %p191, %p192
      %p194 = scmp.ne.s32.totalorder %s186, %s188
      %p195 = scmp.eq.s32.totalorder %s31, 1
      %p196 = por %p194, %p195
      %p197 = scmp.ne.s32.totalorder %s188, %s189
      %p198 = scmp.eq.s32.totalorder %s31, 0
      %p199 = por %p197, %p198
      %p200 = scmp.ne.s32.totalorder %s188, %s189
      %p201 = scmp.eq.s32.totalorder %s32, 1
      %p202 = por %p200, %p201
      %p204 = scmp.ne.s32.totalorder %s189, %s203
      %p205 = scmp.eq.s32.totalorder %s32, 0
      %p206 = por %p204, %p205
      %s208 = sadd.s32 %s207, 1
      %p211 = scmp.eq.s32.totalorder %s26, 1
      %p212 = scmp.ne.s32.totalorder %s207, %s209
      %p213 = scmp.eq.s32.totalorder %s26, 0
      %p214 = por %p212, %p213
      %p215 = scmp.ne.s32.totalorder %s207, %s209
      %p216 = scmp.eq.s32.totalorder %s31, 1
      %p217 = por %p215, %p216
      %p218 = scmp.ne.s32.totalorder %s209, %s210
      %p219 = scmp.eq.s32.totalorder %s31, 0
      %p220 = por %p218, %p219
      %p221 = scmp.ne.s32.totalorder %s209, %s210
      %p222 = scmp.eq.s32.totalorder %s32, 1
      %p223 = por %p221, %p222
      %p225 = scmp.ne.s32.totalorder %s210, %s224
      %p226 = scmp.eq.s32.totalorder %s32, 0
      %p227 = por %p225, %p226
      %s229 = sadd.s32 %s228, 1
      %p232 = scmp.eq.s32.totalorder %s26, 1
      %p233 = scmp.ne.s32.totalorder %s228, %s230
      %p234 = scmp.eq.s32.totalorder %s26, 0
      %p235 = por %p233, %p234
      %p236 = scmp.ne.s32.totalorder %s228, %s230
      %p237 = scmp.eq.s32.totalorder %s31, 1
      %p238 = por %p236, %p237
      %p239 = scmp.ne.s32.totalorder %s230, %s231
      %p240 = scmp.eq.s32.totalorder %s31, 0
      %p241 = por %p239, %p240
      %p242 = scmp.ne.s32.totalorder %s230, %s231
      %p243 = scmp.eq.s32.totalorder %s32, 1
      %p244 = por %p242, %p243
      %p246 = scmp.ne.s32.totalorder %s231, %s245
      %p247 = scmp.eq.s32.totalorder %s32, 0
      %p248 = por %p246, %p247
      %s250 = sadd.s32 %s249, 1
      %p253 = scmp.eq.s32.totalorder %s26, 1
      %p254 = scmp.ne.s32.totalorder %s249, %s251
      %p255 = scmp.eq.s32.totalorder %s26, 0
      %p256 = por %p254, %p255
      %p257 = scmp.ne.s32.totalorder %s249, %s251
      %p258 = scmp.eq.s32.totalorder %s31, 1
      %p259 = por %p257, %p258
      %p260 = scmp.ne.s32.totalorder %s251, %s252
      %p261 = scmp.eq.s32.totalorder %s31, 0
      %p262 = por %p260, %p261
      %p263 = scmp.ne.s32.totalorder %s251, %s252
      %p264 = scmp.eq.s32.totalorder %s32, 1
      %p265 = por %p263, %p264
      %p267 = scmp.ne.s32.totalorder %s252, %s266
      %p268 = scmp.eq.s32.totalorder %s32, 0
      %p269 = por %p267, %p268
      %s271 = sadd.s32 %s270, 1
      %p274 = scmp.eq.s32.totalorder %s26, 1
      %p275 = scmp.ne.s32.totalorder %s270, %s272
      %p276 = scmp.eq.s32.totalorder %s26, 0
      %p277 = por %p275, %p276
      %p278 = scmp.ne.s32.totalorder %s270, %s272
      %p279 = scmp.eq.s32.totalorder %s31, 1
      %p280 = por %p278, %p279
      %p281 = scmp.ne.s32.totalorder %s272, %s273
      %p282 = scmp.eq.s32.totalorder %s31, 0
      %p283 = por %p281, %p282
      %p284 = scmp.ne.s32.totalorder %s272, %s273
      %p285 = scmp.eq.s32.totalorder %s32, 1
      %p286 = por %p284, %p285
      %p288 = scmp.ne.s32.totalorder %s273, %s287
      %p289 = scmp.eq.s32.totalorder %s32, 0
      %p290 = por %p288, %p289
      %s292 = sadd.s32 %s291, 1
      %p295 = scmp.eq.s32.totalorder %s26, 1
      %p296 = scmp.ne.s32.totalorder %s291, %s293
      %p297 = scmp.eq.s32.totalorder %s26, 0
      %p298 = por %p296, %p297
      %p299 = scmp.ne.s32.totalorder %s291, %s293
      %p300 = scmp.eq.s32.totalorder %s31, 1
      %p301 = por %p299, %p300
      %p302 = scmp.ne.s32.totalorder %s293, %s294
      %p303 = scmp.eq.s32.totalorder %s31, 0
      %p304 = por %p302, %p303
      %p305 = scmp.ne.s32.totalorder %s293, %s294
      %p306 = scmp.eq.s32.totalorder %s32, 1
      %p307 = por %p305, %p306
      %p309 = scmp.ne.s32.totalorder %s294, %s308
      %p310 = scmp.eq.s32.totalorder %s32, 0
      %p311 = por %p309, %p310
      %s313 = sadd.s32 %s312, 1
      %p316 = scmp.eq.s32.totalorder %s26, 1
      %p317 = scmp.ne.s32.totalorder %s312, %s314
      %p318 = scmp.eq.s32.totalorder %s26, 0
      %p319 = por %p317, %p318
      %p320 = scmp.ne.s32.totalorder %s312, %s314
      %p321 = scmp.eq.s32.totalorder %s31, 1
      %p322 = por %p320, %p321
      %p323 = scmp.ne.s32.totalorder %s314, %s315
      %p324 = scmp.eq.s32.totalorder %s31, 0
      %p325 = por %p323, %p324
      %p326 = scmp.ne.s32.totalorder %s314, %s315
      %p327 = scmp.eq.s32.totalorder %s32, 1
      %p328 = por %p326, %p327
      %p330 = scmp.ne.s32.totalorder %s315, %s329
      %p331 = scmp.eq.s32.totalorder %s32, 0
      %p332 = por %p330, %p331
      %s334 = sadd.s32 %s333, 1
      %p337 = scmp.eq.s32.totalorder %s26, 1
      %p338 = scmp.ne.s32.totalorder %s333, %s335
      %p339 = scmp.eq.s32.totalorder %s26, 0
      %p340 = por %p338, %p339
      %p341 = scmp.ne.s32.totalorder %s333, %s335
      %p342 = scmp.eq.s32.totalorder %s31, 1
      %p343 = por %p341, %p342
      %p344 = scmp.ne.s32.totalorder %s335, %s336
      %p345 = scmp.eq.s32.totalorder %s31, 0
      %p346 = por %p344, %p345
      %p347 = scmp.ne.s32.totalorder %s335, %s336
      %p348 = scmp.eq.s32.totalorder %s32, 1
      %p349 = por %p347, %p348
      %p351 = scmp.ne.s32.totalorder %s336, %s350
      %p352 = scmp.eq.s32.totalorder %s32, 0
      %p353 = por %p351, %p352
      %s355 = sadd.s32 %s354, 1
      %p358 = scmp.eq.s32.totalorder %s26, 1
      %p359 = scmp.ne.s32.totalorder %s354, %s356
      %p360 = scmp.eq.s32.totalorder %s26, 0
      %p361 = por %p359, %p360
      %p362 = scmp.ne.s32.totalorder %s354, %s356
      %p363 = scmp.eq.s32.totalorder %s31, 1
      %p364 = por %p362, %p363
      %p365 = scmp.ne.s32.totalorder %s356, %s357
      %p366 = scmp.eq.s32.totalorder %s31, 0
      %p367 = por %p365, %p366
      %p368 = scmp.ne.s32.totalorder %s356, %s357
      %p369 = scmp.eq.s32.totalorder %s32, 1
      %p370 = por %p368, %p369
      %p372 = scmp.ne.s32.totalorder %s357, %s371
      %p373 = scmp.eq.s32.totalorder %s32, 0
      %p374 = por %p372, %p373
      %s376 = sadd.s32 %s375, 1
      %p379 = scmp.eq.s32.totalorder %s26, 1
      %p380 = scmp.ne.s32.totalorder %s375, %s377
      %p381 = scmp.eq.s32.totalorder %s26, 0
      %p382 = por %p380, %p381
      %p383 = scmp.ne.s32.totalorder %s375, %s377
      %p384 = scmp.eq.s32.totalorder %s31, 1
      %p385 = por %p383, %p384
      %p386 = scmp.ne.s32.totalorder %s377, %s378
      %p387 = scmp.eq.s32.totalorder %s31, 0
      %p388 = por %p386, %p387
      %p389 = scmp.ne.s32.totalorder %s377, %s378
      %p390 = scmp.eq.s32.totalorder %s32, 1
      %p391 = por %p389, %p390
      %p393 = scmp.ne.s32.totalorder %s378, %s392
      %p394 = scmp.eq.s32.totalorder %s32, 0
      %p395 = por %p393, %p394
      %s396 = ssub.s32 %s26, %s33
      %p397 = scmp.eq.s32.totalorder %s396, 0
      %s399 = sadd.s32 %s398, 1
      %s400 = scalar_select %p397, %s398, %s399
      %p403 = pneg %p397
      %p404 = scmp.eq.s32.totalorder %s26, 1
      %p405 = por %p403, %p404
      %p406 = scmp.ne.s32.totalorder %s398, %s401
      %p407 = scmp.eq.s32.totalorder %s26, 0
      %p408 = por %p406, %p407
      %p409 = scmp.ne.s32.totalorder %s398, %s401
      %p410 = scmp.eq.s32.totalorder %s31, 1
      %p411 = por %p409, %p410
      %p412 = scmp.ne.s32.totalorder %s401, %s402
      %p413 = scmp.eq.s32.totalorder %s31, 0
      %p414 = por %p412, %p413
      %p415 = scmp.ne.s32.totalorder %s401, %s402
      %p416 = scmp.eq.s32.totalorder %s32, 1
      %p417 = por %p415, %p416
      %p419 = scmp.ne.s32.totalorder %s402, %s418
      %p420 = scmp.eq.s32.totalorder %s32, 0
      %p421 = por %p419, %p420
      %p422 = scmp.le.s32.totalorder 1, %s26
      %p423 = scmp.lt.s32.totalorder %s26, 3
      %p424 = pnand %p422, %p423
      %p425 = pneg %p424
      // Predicated region
      $region9: #{deep_autoencoder.1} parent=5 // pred_check
        _
      $region10: #{deep_autoencoder.1} parent=5 // pred_check_branch
        %427 = sbr.rel (%p424) target = $region12
      $region11: #{deep_autoencoder.1} parent=5 // pred_region
        %s428 = ssub.s32 %s26, 1
        // Predicated region
        $region13: #{deep_autoencoder.1} parent=11 // pred_check
          %p429 = pneg %p73
        $region14: #{deep_autoencoder.1} parent=11 // pred_check_branch
          %431 = sbr.rel (%p429) target = $region16
        $region15: #{deep_autoencoder.1} parent=11 // pred_region
          _
        $region16: #{deep_autoencoder.1} parent=11 // pred_fallthru
          _
        // Predicated region
        $region17: #{deep_autoencoder.1} parent=11 // pred_check
          %p432 = pneg %p94
        $region18: #{deep_autoencoder.1} parent=11 // pred_check_branch
          %434 = sbr.rel (%p432) target = $region20
        $region19: #{deep_autoencoder.1} parent=11 // pred_region
          _
        $region20: #{deep_autoencoder.1} parent=11 // pred_fallthru
          _
        // Predicated region
        $region21: #{deep_autoencoder.1} parent=11 // pred_check
          %p435 = pneg %p115
        $region22: #{deep_autoencoder.1} parent=11 // pred_check_branch
          %437 = sbr.rel (%p435) target = $region24
        $region23: #{deep_autoencoder.1} parent=11 // pred_region
          _
        $region24: #{deep_autoencoder.1} parent=11 // pred_fallthru
          _
        // Predicated region
        $region25: #{deep_autoencoder.1} parent=11 // pred_check
          %p438 = pneg %p136
        $region26: #{deep_autoencoder.1} parent=11 // pred_check_branch
          %440 = sbr.rel (%p438) target = $region28
        $region27: #{deep_autoencoder.1} parent=11 // pred_region
          _
        $region28: #{deep_autoencoder.1} parent=11 // pred_fallthru
          _
        // Predicated region
        $region29: #{deep_autoencoder.1} parent=11 // pred_check
          %p441 = pneg %p157
        $region30: #{deep_autoencoder.1} parent=11 // pred_check_branch
          %443 = sbr.rel (%p441) target = $region32
        $region31: #{deep_autoencoder.1} parent=11 // pred_region
          _
        $region32: #{deep_autoencoder.1} parent=11 // pred_fallthru
          _
        // Predicated region
        $region33: #{deep_autoencoder.1} parent=11 // pred_check
          %p444 = pneg %p178
        $region34: #{deep_autoencoder.1} parent=11 // pred_check_branch
          %446 = sbr.rel (%p444) target = $region36
        $region35: #{deep_autoencoder.1} parent=11 // pred_region
          _
        $region36: #{deep_autoencoder.1} parent=11 // pred_fallthru
          _
        // Predicated region
        $region37: #{deep_autoencoder.1} parent=11 // pred_check
          %p447 = pneg %p199
        $region38: #{deep_autoencoder.1} parent=11 // pred_check_branch
          %449 = sbr.rel (%p447) target = $region40
        $region39: #{deep_autoencoder.1} parent=11 // pred_region
          _
        $region40: #{deep_autoencoder.1} parent=11 // pred_fallthru
          _
        // Predicated region
        $region41: #{deep_autoencoder.1} parent=11 // pred_check
          %p450 = pneg %p220
        $region42: #{deep_autoencoder.1} parent=11 // pred_check_branch
          %452 = sbr.rel (%p450) target = $region44
        $region43: #{deep_autoencoder.1} parent=11 // pred_region
          _
        $region44: #{deep_autoencoder.1} parent=11 // pred_fallthru
          _
        // Predicated region
        $region45: #{deep_autoencoder.1} parent=11 // pred_check
          %p453 = pneg %p241
        $region46: #{deep_autoencoder.1} parent=11 // pred_check_branch
          %455 = sbr.rel (%p453) target = $region48
        $region47: #{deep_autoencoder.1} parent=11 // pred_region
          _
        $region48: #{deep_autoencoder.1} parent=11 // pred_fallthru
          _
        // Predicated region
        $region49: #{deep_autoencoder.1} parent=11 // pred_check
          %p456 = pneg %p262
        $region50: #{deep_autoencoder.1} parent=11 // pred_check_branch
          %458 = sbr.rel (%p456) target = $region52
        $region51: #{deep_autoencoder.1} parent=11 // pred_region
          _
        $region52: #{deep_autoencoder.1} parent=11 // pred_fallthru
          _
        // Predicated region
        $region53: #{deep_autoencoder.1} parent=11 // pred_check
          %p459 = pneg %p283
        $region54: #{deep_autoencoder.1} parent=11 // pred_check_branch
          %461 = sbr.rel (%p459) target = $region56
        $region55: #{deep_autoencoder.1} parent=11 // pred_region
          _
        $region56: #{deep_autoencoder.1} parent=11 // pred_fallthru
          _
        // Predicated region
        $region57: #{deep_autoencoder.1} parent=11 // pred_check
          %p462 = pneg %p304
        $region58: #{deep_autoencoder.1} parent=11 // pred_check_branch
          %464 = sbr.rel (%p462) target = $region60
        $region59: #{deep_autoencoder.1} parent=11 // pred_region
          _
        $region60: #{deep_autoencoder.1} parent=11 // pred_fallthru
          _
        // Predicated region
        $region61: #{deep_autoencoder.1} parent=11 // pred_check
          %p465 = pneg %p325
        $region62: #{deep_autoencoder.1} parent=11 // pred_check_branch
          %467 = sbr.rel (%p465) target = $region64
        $region63: #{deep_autoencoder.1} parent=11 // pred_region
          _
        $region64: #{deep_autoencoder.1} parent=11 // pred_fallthru
          _
        // Predicated region
        $region65: #{deep_autoencoder.1} parent=11 // pred_check
          %p468 = pneg %p346
        $region66: #{deep_autoencoder.1} parent=11 // pred_check_branch
          %470 = sbr.rel (%p468) target = $region68
        $region67: #{deep_autoencoder.1} parent=11 // pred_region
          _
        $region68: #{deep_autoencoder.1} parent=11 // pred_fallthru
          _
        // Predicated region
        $region69: #{deep_autoencoder.1} parent=11 // pred_check
          %p471 = pneg %p367
        $region70: #{deep_autoencoder.1} parent=11 // pred_check_branch
          %473 = sbr.rel (%p471) target = $region72
        $region71: #{deep_autoencoder.1} parent=11 // pred_region
          _
        $region72: #{deep_autoencoder.1} parent=11 // pred_fallthru
          _
        // Predicated region
        $region73: #{deep_autoencoder.1} parent=11 // pred_check
          %p474 = pneg %p388
        $region74: #{deep_autoencoder.1} parent=11 // pred_check_branch
          %476 = sbr.rel (%p474) target = $region76
        $region75: #{deep_autoencoder.1} parent=11 // pred_region
          _
        $region76: #{deep_autoencoder.1} parent=11 // pred_fallthru
          _
      $region12: #{deep_autoencoder.1} parent=5 // pred_fallthru
        _
      %p477 = scmp.lt.s32.totalorder %s26, 2
      // Predicated region
      $region77: #{deep_autoencoder.1} parent=5 // pred_check
        %p478 = pneg %p477
      $region78: #{deep_autoencoder.1} parent=5 // pred_check_branch
        %480 = sbr.rel (%p478) target = $region80
      $region79: #{deep_autoencoder.1} parent=5 // pred_region
        // Predicated region
        $region81: #{deep_autoencoder.1} parent=79 // pred_check
          %p481 = pneg %p46
        $region82: #{deep_autoencoder.1} parent=79 // pred_check_branch
          %483 = sbr.rel (%p481) target = $region84
        $region83: #{deep_autoencoder.1} parent=79 // pred_region
          %s484 = smul.u32 16, %s26
          %s485 = ssub.s32 25, %s484
          %p486 = scmp.lt.s32.totalorder %s485, 16
          %s487 = scalar_select %p486, %s485, 16
          %s488 = smul.u32 128, %s487
          %s489 = smul.u32 %s488, 7
          %p490 = scmp.lt.s32.totalorder %s484, 24
          %s491 = scalar_select %p490, %s484, 24
          %s492 = smul.addr %s491, 7
          %s493 = smul.addr %s492, 8
          %s494 = scalar_lea.vmem %s0, %s493
          %s495 = smul.u32 16, %s26
          %s496 = ssub.s32 25, %s495
          %p497 = scmp.lt.s32.totalorder %s496, 16
          %s498 = scalar_select %p497, %s496, 16
          %s499 = smul.u32 128, %s498
          %s500 = smul.u32 %s499, 7
        $region84: #{deep_autoencoder.1} parent=79 // pred_fallthru
          _
      $region80: #{deep_autoencoder.1} parent=5 // pred_fallthru
        _
      %p501 = scmp.le.s32.totalorder 1, %s26
      %p502 = scmp.lt.s32.totalorder %s26, 3
      %p503 = pnand %p501, %p502
      %p504 = pneg %p503
      // Predicated region
      $region85: #{deep_autoencoder.1} parent=5 // pred_check
        _
      $region86: #{deep_autoencoder.1} parent=5 // pred_check_branch
        %506 = sbr.rel (%p503) target = $region88
      $region87: #{deep_autoencoder.1} parent=5 // pred_region
        %s507 = ssub.s32 %s26, 1
        %s508 = smul.u32 16, %s31
        %s509 = ssub.s32 25, %s508
        %p510 = scmp.lt.s32.totalorder %s509, 16
        %s511 = scalar_select %p510, %s509, 16
        %s512 = smul.u32 128, %s511
        %s513 = smul.u32 %s512, 7
        %p514 = scmp.lt.s32.totalorder %s508, 24
        %s515 = scalar_select %p514, %s508, 24
        %s516 = smul.addr %s515, 7
        %s517 = smul.addr %s516, 8
        %s518 = scalar_lea.vmem %s0, %s517
        %p519 = pneg %p52
        %p520 = pneg %p49
        %p521 = pneg %p73
        %p522 = pneg %p70
        %p523 = pneg %p94
        %p524 = pneg %p91
        %p525 = pneg %p115
        %p526 = pneg %p112
        %p527 = pneg %p136
        %p528 = pneg %p133
        %p529 = pneg %p157
        %p530 = pneg %p154
        %p531 = pneg %p178
        %p532 = pneg %p175
        %p533 = pneg %p199
        %p534 = pneg %p196
        %p535 = pneg %p220
        %p536 = pneg %p217
        %p537 = pneg %p241
        %p538 = pneg %p238
        %p539 = pneg %p262
        %p540 = pneg %p259
        %p541 = pneg %p283
        %p542 = pneg %p280
        %p543 = pneg %p304
        %p544 = pneg %p301
        %p545 = pneg %p325
        %p546 = pneg %p322
        %p547 = pneg %p346
        %p548 = pneg %p343
        %p549 = pneg %p367
        %p550 = pneg %p364
        %p551 = pneg %p388
        %p552 = pneg %p385
        %p553 = pneg %p414
        %p554 = pneg %p411
        %s555 = sand.u32 %s401, 1
        %s556 = scalar_lea.sflag [#allocation3], %s555
        %s557 = sand.u32 %s401, 1
        %s558 = smul.addr %s557, 896
        %s559 = scalar_lea.vmem [#allocation2], %s558
        %s560 = smul.u32 16, %s31
        %s561 = ssub.s32 25, %s560
        %p562 = scmp.lt.s32.totalorder %s561, 16
        %s563 = scalar_select %p562, %s561, 16
        %s564 = smul.u32 128, %s563
        %s565 = smul.u32 %s564, 7
        %p566 = scmp.lt.s32.totalorder %s560, 24
        %s567 = scalar_select %p566, %s560, 24
        %s568 = smul.addr %s567, 7
        %s569 = smul.addr %s568, 8
        %s570 = scalar_lea.vmem %s0, %s569
        %s571 = smul.u32 16, %s31
        %s572 = ssub.s32 25, %s571
        %p573 = scmp.lt.s32.totalorder %s572, 16
        %s574 = scalar_select %p573, %s572, 16
        %s575 = smul.u32 128, %s574
        %s576 = smul.u32 %s575, 7
        %s577 = smul.u32 16, %s31
        %s578 = ssub.s32 25, %s577
        %p579 = scmp.lt.s32.totalorder %s578, 16
        %s580 = scalar_select %p579, %s578, 16
        %s581 = smul.u32 128, %s580
        %s582 = smul.u32 %s581, 7
        %v584 = vld [vmem:[%s570] sm:$0xff]
        %v585 = vld [vmem:[%s570 + $0x8] sm:$0xff]
        %v586 = vld [vmem:[%s570 + $0x10] sm:$0xff]
        %v587 = vld [vmem:[%s570 + $0x18] sm:$0xff]
        %v588 = vld [vmem:[%s570 + $0x20] sm:$0xff]
        %v589 = vld [vmem:[%s570 + $0x28] sm:$0xff]
        %v590 = vld [vmem:[%s570 + $0x30] sm:$0xff]
        %v591 = vld [vmem:[%s570 + $0x38] sm:$0xff]
        %v592 = vld [vmem:[%s570 + $0x40] sm:$0xff]
        %v593 = vld [vmem:[%s570 + $0x48] sm:$0xff]
        %v594 = vld [vmem:[%s570 + $0x50] sm:$0xff]
        %v595 = vld [vmem:[%s570 + $0x58] sm:$0xff]
        %v596 = vld [vmem:[%s570 + $0x60] sm:$0xff]
        %v597 = vld [vmem:[%s570 + $0x68] sm:$0xff]
        %v598 = vld [vmem:[%s570 + $0x70] sm:$0xff]
        %v599 = vld [vmem:[%s570 + $0x78] sm:$0xff]
        %v600 = vld [vmem:[%s570 + $0x80] sm:$0xff]
        %v601 = vld [vmem:[%s570 + $0x88] sm:$0xff]
        %v602 = vld [vmem:[%s570 + $0x90] sm:$0xff]
        %v603 = vld [vmem:[%s570 + $0x98] sm:$0xff]
        %v604 = vld [vmem:[%s570 + $0xa0] sm:$0xff]
        %v605 = vld [vmem:[%s570 + $0xa8] sm:$0xff]
        %v606 = vld [vmem:[%s570 + $0xb0] sm:$0xff]
        %v607 = vld [vmem:[%s570 + $0xb8] sm:$0xff]
        %v608 = vld [vmem:[%s570 + $0xc0] sm:$0xff]
        %v609 = vld [vmem:[%s570 + $0xc8] sm:$0xff]
        %v610 = vld [vmem:[%s570 + $0xd0] sm:$0xff]
        %v611 = vld [vmem:[%s570 + $0xd8] sm:$0xff]
        %v612 = vld [vmem:[%s570 + $0xe0] sm:$0xff]
        %v613 = vld [vmem:[%s570 + $0xe8] sm:$0xff]
        %v614 = vld [vmem:[%s570 + $0xf0] sm:$0xff]
        %v615 = vld [vmem:[%s570 + $0xf8] sm:$0xff]
        %v616 = vld [vmem:[%s570 + $0x100] sm:$0xff]
        %v617 = vld [vmem:[%s570 + $0x108] sm:$0xff]
        %v618 = vld [vmem:[%s570 + $0x110] sm:$0xff]
        %v619 = vld [vmem:[%s570 + $0x118] sm:$0xff]
        %v620 = vld [vmem:[%s570 + $0x120] sm:$0xff]
        %v621 = vld [vmem:[%s570 + $0x128] sm:$0xff]
        %v622 = vld [vmem:[%s570 + $0x130] sm:$0xff]
        %v623 = vld [vmem:[%s570 + $0x138] sm:$0xff]
        %v624 = vld [vmem:[%s570 + $0x140] sm:$0xff]
        %v625 = vld [vmem:[%s570 + $0x148] sm:$0xff]
        %v626 = vld [vmem:[%s570 + $0x150] sm:$0xff]
        %v627 = vld [vmem:[%s570 + $0x158] sm:$0xff]
        %v628 = vld [vmem:[%s570 + $0x160] sm:$0xff]
        %v629 = vld [vmem:[%s570 + $0x168] sm:$0xff]
        %v630 = vld [vmem:[%s570 + $0x170] sm:$0xff]
        %v631 = vld [vmem:[%s570 + $0x178] sm:$0xff]
        %v632 = vld [vmem:[%s570 + $0x180] sm:$0xff]
        %v633 = vld [vmem:[%s570 + $0x188] sm:$0xff]
        %v634 = vld [vmem:[%s570 + $0x190] sm:$0xff]
        %v635 = vld [vmem:[%s570 + $0x198] sm:$0xff]
        %v636 = vld [vmem:[%s570 + $0x1a0] sm:$0xff]
        %v637 = vld [vmem:[%s570 + $0x1a8] sm:$0xff]
        %v638 = vld [vmem:[%s570 + $0x1b0] sm:$0xff]
        %v639 = vld [vmem:[%s570 + $0x1b8] sm:$0xff]
        %v640 = vld [vmem:[%s570 + $0x1c0] sm:$0xff]
        %v641 = vld [vmem:[%s570 + $0x1c8] sm:$0xff]
        %v642 = vld [vmem:[%s570 + $0x1d0] sm:$0xff]
        %v643 = vld [vmem:[%s570 + $0x1d8] sm:$0xff]
        %v644 = vld [vmem:[%s570 + $0x1e0] sm:$0xff]
        %v645 = vld [vmem:[%s570 + $0x1e8] sm:$0xff]
        %v646 = vld [vmem:[%s570 + $0x1f0] sm:$0xff]
        %v647 = vld [vmem:[%s570 + $0x1f8] sm:$0xff]
        %v648 = vld [vmem:[%s570 + $0x200] sm:$0xff]
        %v649 = vld [vmem:[%s570 + $0x208] sm:$0xff]
        %v650 = vld [vmem:[%s570 + $0x210] sm:$0xff]
        %v651 = vld [vmem:[%s570 + $0x218] sm:$0xff]
        %v652 = vld [vmem:[%s570 + $0x220] sm:$0xff]
        %v653 = vld [vmem:[%s570 + $0x228] sm:$0xff]
        %v654 = vld [vmem:[%s570 + $0x230] sm:$0xff]
        %v655 = vld [vmem:[%s570 + $0x238] sm:$0xff]
        %v656 = vld [vmem:[%s570 + $0x240] sm:$0xff]
        %v657 = vld [vmem:[%s570 + $0x248] sm:$0xff]
        %v658 = vld [vmem:[%s570 + $0x250] sm:$0xff]
        %v659 = vld [vmem:[%s570 + $0x258] sm:$0xff]
        %v660 = vld [vmem:[%s570 + $0x260] sm:$0xff]
        %v661 = vld [vmem:[%s570 + $0x268] sm:$0xff]
        %v662 = vld [vmem:[%s570 + $0x270] sm:$0xff]
        %v663 = vld [vmem:[%s570 + $0x278] sm:$0xff]
        %v664 = vld [vmem:[%s570 + $0x280] sm:$0xff]
        %v665 = vld [vmem:[%s570 + $0x288] sm:$0xff]
        %v666 = vld [vmem:[%s570 + $0x290] sm:$0xff]
        %v667 = vld [vmem:[%s570 + $0x298] sm:$0xff]
        %v668 = vld [vmem:[%s570 + $0x2a0] sm:$0xff]
        %v669 = vld [vmem:[%s570 + $0x2a8] sm:$0xff]
        %v670 = vld [vmem:[%s570 + $0x2b0] sm:$0xff]
        %v671 = vld [vmem:[%s570 + $0x2b8] sm:$0xff]
        %v672 = vld [vmem:[%s570 + $0x2c0] sm:$0xff]
        %v673 = vld [vmem:[%s570 + $0x2c8] sm:$0xff]
        %v674 = vld [vmem:[%s570 + $0x2d0] sm:$0xff]
        %v675 = vld [vmem:[%s570 + $0x2d8] sm:$0xff]
        %v676 = vld [vmem:[%s570 + $0x2e0] sm:$0xff]
        %v677 = vld [vmem:[%s570 + $0x2e8] sm:$0xff]
        %v678 = vld [vmem:[%s570 + $0x2f0] sm:$0xff]
        %v679 = vld [vmem:[%s570 + $0x2f8] sm:$0xff]
        %v680 = vld [vmem:[%s570 + $0x300] sm:$0xff]
        %v681 = vld [vmem:[%s570 + $0x308] sm:$0xff]
        %v682 = vld [vmem:[%s570 + $0x310] sm:$0xff]
        %v683 = vld [vmem:[%s570 + $0x318] sm:$0xff]
        %v684 = vld [vmem:[%s570 + $0x320] sm:$0xff]
        %v685 = vld [vmem:[%s570 + $0x328] sm:$0xff]
        %v686 = vld [vmem:[%s570 + $0x330] sm:$0xff]
        %v687 = vld [vmem:[%s570 + $0x338] sm:$0xff]
        %v688 = vld [vmem:[%s570 + $0x340] sm:$0xff]
        %v689 = vld [vmem:[%s570 + $0x348] sm:$0xff]
        %v690 = vld [vmem:[%s570 + $0x350] sm:$0xff]
        %v691 = vld [vmem:[%s570 + $0x358] sm:$0xff]
        %v692 = vld [vmem:[%s570 + $0x360] sm:$0xff]
        %v693 = vld [vmem:[%s570 + $0x368] sm:$0xff]
        %v694 = vld [vmem:[%s570 + $0x370] sm:$0xff]
        %v695 = vld [vmem:[%s570 + $0x378] sm:$0xff]
        %v696 = vpack.c.bf16 %v591, %v584
        %v697 = vpack.c.bf16 %v592, %v585
        %v698 = vpack.c.bf16 %v593, %v586
        %v699 = vpack.c.bf16 %v594, %v587
        %v700 = vpack.c.bf16 %v595, %v588
        %v701 = vpack.c.bf16 %v596, %v589
        %v702 = vpack.c.bf16 %v597, %v590
        %v703 = vpack.c.bf16 %v605, %v598
        %v704 = vpack.c.bf16 %v606, %v599
        %v705 = vpack.c.bf16 %v607, %v600
        %v706 = vpack.c.bf16 %v608, %v601
        %v707 = vpack.c.bf16 %v609, %v602
        %v708 = vpack.c.bf16 %v610, %v603
        %v709 = vpack.c.bf16 %v611, %v604
        %v710 = vpack.c.bf16 %v619, %v612
        %v711 = vpack.c.bf16 %v620, %v613
        %v712 = vpack.c.bf16 %v621, %v614
        %v713 = vpack.c.bf16 %v622, %v615
        %v714 = vpack.c.bf16 %v623, %v616
        %v715 = vpack.c.bf16 %v624, %v617
        %v716 = vpack.c.bf16 %v625, %v618
        %v717 = vpack.c.bf16 %v633, %v626
        %v718 = vpack.c.bf16 %v634, %v627
        %v719 = vpack.c.bf16 %v635, %v628
        %v720 = vpack.c.bf16 %v636, %v629
        %v721 = vpack.c.bf16 %v637, %v630
        %v722 = vpack.c.bf16 %v638, %v631
        %v723 = vpack.c.bf16 %v639, %v632
        %v724 = vpack.c.bf16 %v647, %v640
        %v725 = vpack.c.bf16 %v648, %v641
        %v726 = vpack.c.bf16 %v649, %v642
        %v727 = vpack.c.bf16 %v650, %v643
        %v728 = vpack.c.bf16 %v651, %v644
        %v729 = vpack.c.bf16 %v652, %v645
        %v730 = vpack.c.bf16 %v653, %v646
        %v731 = vpack.c.bf16 %v661, %v654
        %v732 = vpack.c.bf16 %v662, %v655
        %v733 = vpack.c.bf16 %v663, %v656
        %v734 = vpack.c.bf16 %v664, %v657
        %v735 = vpack.c.bf16 %v665, %v658
        %v736 = vpack.c.bf16 %v666, %v659
        %v737 = vpack.c.bf16 %v667, %v660
        %v738 = vpack.c.bf16 %v675, %v668
        %v739 = vpack.c.bf16 %v676, %v669
        %v740 = vpack.c.bf16 %v677, %v670
        %v741 = vpack.c.bf16 %v678, %v671
        %v742 = vpack.c.bf16 %v679, %v672
        %v743 = vpack.c.bf16 %v680, %v673
        %v744 = vpack.c.bf16 %v681, %v674
        %v745 = vpack.c.bf16 %v689, %v682
        %v746 = vpack.c.bf16 %v690, %v683
        %v747 = vpack.c.bf16 %v691, %v684
        %v748 = vpack.c.bf16 %v692, %v685
        %v749 = vpack.c.bf16 %v693, %v686
        %v750 = vpack.c.bf16 %v694, %v687
        %v751 = vpack.c.bf16 %v695, %v688
        %v752 = vld [vmem:[%s1] sm:$0xff]
        %v753 = vld [vmem:[%s1 + $0x8] sm:$0xff]
        %v754 = vld [vmem:[%s1 + $0x10] sm:$0xff]
        %v755 = vld [vmem:[%s1 + $0x18] sm:$0xff]
        %v756 = vld [vmem:[%s1 + $0x20] sm:$0xff]
        %v757 = vld [vmem:[%s1 + $0x28] sm:$0xff]
        %v758 = vld [vmem:[%s1 + $0x30] sm:$0xff]
        %v759 = vld [vmem:[%s1 + $0x38] sm:$0xff]
        %v760 = vld [vmem:[%s1 + $0x40] sm:$0xff]
        %v761 = vld [vmem:[%s1 + $0x48] sm:$0xff]
        %v762 = vld [vmem:[%s1 + $0x50] sm:$0xff]
        %v763 = vld [vmem:[%s1 + $0x58] sm:$0xff]
        %v764 = vld [vmem:[%s1 + $0x60] sm:$0xff]
        %v765 = vld [vmem:[%s1 + $0x68] sm:$0xff]
        %v766 = vld [vmem:[%s1 + $0x70] sm:$0xff]
        %v767 = vld [vmem:[%s1 + $0x78] sm:$0xff]
        %v768 = vld [vmem:[%s1 + $0x80] sm:$0xff]
        %v769 = vld [vmem:[%s1 + $0x88] sm:$0xff]
        %v770 = vld [vmem:[%s1 + $0x90] sm:$0xff]
        %v771 = vld [vmem:[%s1 + $0x98] sm:$0xff]
        %v772 = vld [vmem:[%s1 + $0xa0] sm:$0xff]
        %v773 = vld [vmem:[%s1 + $0xa8] sm:$0xff]
        %v774 = vld [vmem:[%s1 + $0xb0] sm:$0xff]
        %v775 = vld [vmem:[%s1 + $0xb8] sm:$0xff]
        %v776 = vld [vmem:[%s1 + $0xc0] sm:$0xff]
        %v777 = vld [vmem:[%s1 + $0xc8] sm:$0xff]
        %v778 = vld [vmem:[%s1 + $0xd0] sm:$0xff]
        %v779 = vld [vmem:[%s1 + $0xd8] sm:$0xff]
        %v780 = vld [vmem:[%s1 + $0xe0] sm:$0xff]
        %v781 = vld [vmem:[%s1 + $0xe8] sm:$0xff]
        %v782 = vld [vmem:[%s1 + $0xf0] sm:$0xff]
        %v783 = vld [vmem:[%s1 + $0xf8] sm:$0xff]
        %v784 = vld [vmem:[%s1 + $0x100] sm:$0xff]
        %v785 = vld [vmem:[%s1 + $0x108] sm:$0xff]
        %v786 = vld [vmem:[%s1 + $0x110] sm:$0xff]
        %v787 = vld [vmem:[%s1 + $0x118] sm:$0xff]
        %v788 = vld [vmem:[%s1 + $0x120] sm:$0xff]
        %v789 = vld [vmem:[%s1 + $0x128] sm:$0xff]
        %v790 = vld [vmem:[%s1 + $0x130] sm:$0xff]
        %v791 = vld [vmem:[%s1 + $0x138] sm:$0xff]
        %v792 = vld [vmem:[%s1 + $0x140] sm:$0xff]
        %v793 = vld [vmem:[%s1 + $0x148] sm:$0xff]
        %v794 = vld [vmem:[%s1 + $0x150] sm:$0xff]
        %v795 = vld [vmem:[%s1 + $0x158] sm:$0xff]
        %v796 = vld [vmem:[%s1 + $0x160] sm:$0xff]
        %v797 = vld [vmem:[%s1 + $0x168] sm:$0xff]
        %v798 = vld [vmem:[%s1 + $0x170] sm:$0xff]
        %v799 = vld [vmem:[%s1 + $0x178] sm:$0xff]
        %v800 = vld [vmem:[%s1 + $0x180] sm:$0xff]
        %v801 = vld [vmem:[%s1 + $0x188] sm:$0xff]
        %v802 = vld [vmem:[%s1 + $0x190] sm:$0xff]
        %v803 = vld [vmem:[%s1 + $0x198] sm:$0xff]
        %v804 = vld [vmem:[%s1 + $0x1a0] sm:$0xff]
        %v805 = vld [vmem:[%s1 + $0x1a8] sm:$0xff]
        %v806 = vld [vmem:[%s1 + $0x1b0] sm:$0xff]
        %v807 = vld [vmem:[%s1 + $0x1b8] sm:$0xff]
        %v808 = vld [vmem:[%s1 + $0x1c0] sm:$0xff]
        %v809 = vld [vmem:[%s1 + $0x1c8] sm:$0xff]
        %v810 = vld [vmem:[%s1 + $0x1d0] sm:$0xff]
        %v811 = vld [vmem:[%s1 + $0x1d8] sm:$0xff]
        %v812 = vld [vmem:[%s1 + $0x1e0] sm:$0xff]
        %v813 = vld [vmem:[%s1 + $0x1e8] sm:$0xff]
        %v814 = vld [vmem:[%s1 + $0x1f0] sm:$0xff]
        %v815 = vld [vmem:[%s1 + $0x1f8] sm:$0xff]
        %v816 = vld [vmem:[%s1 + $0x200] sm:$0xff]
        %v817 = vld [vmem:[%s1 + $0x208] sm:$0xff]
        %v818 = vld [vmem:[%s1 + $0x210] sm:$0xff]
        %v819 = vld [vmem:[%s1 + $0x218] sm:$0xff]
        %v820 = vld [vmem:[%s1 + $0x220] sm:$0xff]
        %v821 = vld [vmem:[%s1 + $0x228] sm:$0xff]
        %v822 = vld [vmem:[%s1 + $0x230] sm:$0xff]
        %v823 = vld [vmem:[%s1 + $0x238] sm:$0xff]
        %v824 = vld [vmem:[%s1 + $0x240] sm:$0xff]
        %v825 = vld [vmem:[%s1 + $0x248] sm:$0xff]
        %v826 = vld [vmem:[%s1 + $0x250] sm:$0xff]
        %v827 = vld [vmem:[%s1 + $0x258] sm:$0xff]
        %v828 = vld [vmem:[%s1 + $0x260] sm:$0xff]
        %v829 = vld [vmem:[%s1 + $0x268] sm:$0xff]
        %v830 = vld [vmem:[%s1 + $0x270] sm:$0xff]
        %v831 = vld [vmem:[%s1 + $0x278] sm:$0xff]
        %v832 = vld [vmem:[%s1 + $0x280] sm:$0xff]
        %v833 = vld [vmem:[%s1 + $0x288] sm:$0xff]
        %v834 = vld [vmem:[%s1 + $0x290] sm:$0xff]
        %v835 = vld [vmem:[%s1 + $0x298] sm:$0xff]
        %v836 = vld [vmem:[%s1 + $0x2a0] sm:$0xff]
        %v837 = vld [vmem:[%s1 + $0x2a8] sm:$0xff]
        %v838 = vld [vmem:[%s1 + $0x2b0] sm:$0xff]
        %v839 = vld [vmem:[%s1 + $0x2b8] sm:$0xff]
        %v840 = vld [vmem:[%s1 + $0x2c0] sm:$0xff]
        %v841 = vld [vmem:[%s1 + $0x2c8] sm:$0xff]
        %v842 = vld [vmem:[%s1 + $0x2d0] sm:$0xff]
        %v843 = vld [vmem:[%s1 + $0x2d8] sm:$0xff]
        %v844 = vld [vmem:[%s1 + $0x2e0] sm:$0xff]
        %v845 = vld [vmem:[%s1 + $0x2e8] sm:$0xff]
        %v846 = vld [vmem:[%s1 + $0x2f0] sm:$0xff]
        %v847 = vld [vmem:[%s1 + $0x2f8] sm:$0xff]
        %v848 = vld [vmem:[%s1 + $0x300] sm:$0xff]
        %v849 = vld [vmem:[%s1 + $0x308] sm:$0xff]
        %v850 = vld [vmem:[%s2] sm:$0x3]
        %v852 = vlaneseq
        %v853 = vshrl.u32 %v852, 7
        %v854 = vsub.s32 0, %v853
        %v855 = vrot.slane %v850, %v854
        %v856 = vlaneseq
        %v857 = vshrl.u32 %v856, 7
        %v858 = vsub.s32 1, %v857
        %v859 = vrot.slane %v850, %v858
        %v960 = vunpack.c.l.b16 %v752
        %v961 = vunpack.c.h.b16 %v752
        %v962 = vunpack.c.l.b16 %v753
        %v963 = vunpack.c.h.b16 %v753
        %v964 = vunpack.c.l.b16 %v754
        %v965 = vunpack.c.h.b16 %v754
        %v966 = vunpack.c.l.b16 %v755
        %v967 = vunpack.c.h.b16 %v755
        %v968 = vunpack.c.l.b16 %v756
        %v969 = vunpack.c.h.b16 %v756
        %v970 = vunpack.c.l.b16 %v757
        %v971 = vunpack.c.h.b16 %v757
        %v972 = vunpack.c.l.b16 %v758
        %v973 = vunpack.c.h.b16 %v758
        %v974 = vunpack.c.l.b16 %v759
        %v975 = vunpack.c.h.b16 %v759
        %v976 = vunpack.c.l.b16 %v760
        %v977 = vunpack.c.h.b16 %v760
        %v978 = vunpack.c.l.b16 %v761
        %v979 = vunpack.c.h.b16 %v761
        %v980 = vunpack.c.l.b16 %v762
        %v981 = vunpack.c.h.b16 %v762
        %v982 = vunpack.c.l.b16 %v763
        %v983 = vunpack.c.h.b16 %v763
        %v984 = vunpack.c.l.b16 %v764
        %v985 = vunpack.c.h.b16 %v764
        %v986 = vunpack.c.l.b16 %v765
        %v987 = vunpack.c.h.b16 %v765
        %v988 = vunpack.c.l.b16 %v766
        %v989 = vunpack.c.h.b16 %v766
        %v990 = vunpack.c.l.b16 %v767
        %v991 = vunpack.c.h.b16 %v767
        %v992 = vunpack.c.l.b16 %v768
        %v993 = vunpack.c.h.b16 %v768
        %v994 = vunpack.c.l.b16 %v769
        %v995 = vunpack.c.h.b16 %v769
        %v996 = vunpack.c.l.b16 %v770
        %v997 = vunpack.c.h.b16 %v770
        %v998 = vunpack.c.l.b16 %v771
        %v999 = vunpack.c.h.b16 %v771
        %v1000 = vunpack.c.l.b16 %v772
        %v1001 = vunpack.c.h.b16 %v772
        %v1002 = vunpack.c.l.b16 %v773
        %v1003 = vunpack.c.h.b16 %v773
        %v1004 = vunpack.c.l.b16 %v774
        %v1005 = vunpack.c.h.b16 %v774
        %v1006 = vunpack.c.l.b16 %v775
        %v1007 = vunpack.c.h.b16 %v775
        %v1008 = vunpack.c.l.b16 %v776
        %v1009 = vunpack.c.h.b16 %v776
        %v1010 = vunpack.c.l.b16 %v777
        %v1011 = vunpack.c.h.b16 %v777
        %v1012 = vunpack.c.l.b16 %v778
        %v1013 = vunpack.c.h.b16 %v778
        %v1014 = vunpack.c.l.b16 %v779
        %v1015 = vunpack.c.h.b16 %v779
        %v1016 = vunpack.c.l.b16 %v780
        %v1017 = vunpack.c.h.b16 %v780
        %v1018 = vunpack.c.l.b16 %v781
        %v1019 = vunpack.c.h.b16 %v781
        %v1020 = vunpack.c.l.b16 %v782
        %v1021 = vunpack.c.h.b16 %v782
        %v1022 = vunpack.c.l.b16 %v783
        %v1023 = vunpack.c.h.b16 %v783
        %v1024 = vunpack.c.l.b16 %v784
        %v1025 = vunpack.c.h.b16 %v784
        %v1026 = vunpack.c.l.b16 %v785
        %v1027 = vunpack.c.h.b16 %v785
        %v1028 = vunpack.c.l.b16 %v786
        %v1029 = vunpack.c.h.b16 %v786
        %v1030 = vunpack.c.l.b16 %v787
        %v1031 = vunpack.c.h.b16 %v787
        %v1032 = vunpack.c.l.b16 %v788
        %v1033 = vunpack.c.h.b16 %v788
        %v1034 = vunpack.c.l.b16 %v789
        %v1035 = vunpack.c.h.b16 %v789
        %v1036 = vunpack.c.l.b16 %v790
        %v1037 = vunpack.c.h.b16 %v790
        %v1038 = vunpack.c.l.b16 %v791
        %v1039 = vunpack.c.h.b16 %v791
        %v1040 = vunpack.c.l.b16 %v792
        %v1041 = vunpack.c.h.b16 %v792
        %v1042 = vunpack.c.l.b16 %v793
        %v1043 = vunpack.c.h.b16 %v793
        %v1044 = vunpack.c.l.b16 %v794
        %v1045 = vunpack.c.h.b16 %v794
        %v1046 = vunpack.c.l.b16 %v795
        %v1047 = vunpack.c.h.b16 %v795
        %v1048 = vunpack.c.l.b16 %v796
        %v1049 = vunpack.c.h.b16 %v796
        %v1050 = vunpack.c.l.b16 %v797
        %v1051 = vunpack.c.h.b16 %v797
        %v1052 = vunpack.c.l.b16 %v798
        %v1053 = vunpack.c.h.b16 %v798
        %v1054 = vunpack.c.l.b16 %v799
        %v1055 = vunpack.c.h.b16 %v799
        %v1056 = vunpack.c.l.b16 %v800
        %v1057 = vunpack.c.h.b16 %v800
        %v1058 = vunpack.c.l.b16 %v801
        %v1059 = vunpack.c.h.b16 %v801
        %v1060 = vunpack.c.l.b16 %v802
        %v1061 = vunpack.c.h.b16 %v802
        %v1062 = vunpack.c.l.b16 %v803
        %v1063 = vunpack.c.h.b16 %v803
        %v1064 = vunpack.c.l.b16 %v804
        %v1065 = vunpack.c.h.b16 %v804
        %v1066 = vunpack.c.l.b16 %v805
        %v1067 = vunpack.c.h.b16 %v805
        %v1068 = vunpack.c.l.b16 %v806
        %v1069 = vunpack.c.h.b16 %v806
        %v1070 = vunpack.c.l.b16 %v807
        %v1071 = vunpack.c.h.b16 %v807
        %v1072 = vunpack.c.l.b16 %v808
        %v1073 = vunpack.c.h.b16 %v808
        %v1074 = vunpack.c.l.b16 %v809
        %v1075 = vunpack.c.h.b16 %v809
        %v1076 = vunpack.c.l.b16 %v810
        %v1077 = vunpack.c.h.b16 %v810
        %v1078 = vunpack.c.l.b16 %v811
        %v1079 = vunpack.c.h.b16 %v811
        %v1080 = vunpack.c.l.b16 %v812
        %v1081 = vunpack.c.h.b16 %v812
        %v1082 = vunpack.c.l.b16 %v813
        %v1083 = vunpack.c.h.b16 %v813
        %v1084 = vunpack.c.l.b16 %v814
        %v1085 = vunpack.c.h.b16 %v814
        %v1086 = vunpack.c.l.b16 %v815
        %v1087 = vunpack.c.h.b16 %v815
        %v1088 = vunpack.c.l.b16 %v816
        %v1089 = vunpack.c.h.b16 %v816
        %v1090 = vunpack.c.l.b16 %v817
        %v1091 = vunpack.c.h.b16 %v817
        %v1092 = vunpack.c.l.b16 %v818
        %v1093 = vunpack.c.h.b16 %v818
        %v1094 = vunpack.c.l.b16 %v819
        %v1095 = vunpack.c.h.b16 %v819
        %v1096 = vunpack.c.l.b16 %v820
        %v1097 = vunpack.c.h.b16 %v820
        %v1098 = vunpack.c.l.b16 %v821
        %v1099 = vunpack.c.h.b16 %v821
        %v1100 = vunpack.c.l.b16 %v822
        %v1101 = vunpack.c.h.b16 %v822
        %v1102 = vunpack.c.l.b16 %v823
        %v1103 = vunpack.c.h.b16 %v823
        %v1104 = vunpack.c.l.b16 %v824
        %v1105 = vunpack.c.h.b16 %v824
        %v1106 = vunpack.c.l.b16 %v825
        %v1107 = vunpack.c.h.b16 %v825
        %v1108 = vunpack.c.l.b16 %v826
        %v1109 = vunpack.c.h.b16 %v826
        %v1110 = vunpack.c.l.b16 %v827
        %v1111 = vunpack.c.h.b16 %v827
        %v1112 = vunpack.c.l.b16 %v828
        %v1113 = vunpack.c.h.b16 %v828
        %v1114 = vunpack.c.l.b16 %v829
        %v1115 = vunpack.c.h.b16 %v829
        %v1116 = vunpack.c.l.b16 %v830
        %v1117 = vunpack.c.h.b16 %v830
        %v1118 = vunpack.c.l.b16 %v831
        %v1119 = vunpack.c.h.b16 %v831
        %v1120 = vunpack.c.l.b16 %v832
        %v1121 = vunpack.c.h.b16 %v832
        %v1122 = vunpack.c.l.b16 %v833
        %v1123 = vunpack.c.h.b16 %v833
        %v1124 = vunpack.c.l.b16 %v834
        %v1125 = vunpack.c.h.b16 %v834
        %v1126 = vunpack.c.l.b16 %v835
        %v1127 = vunpack.c.h.b16 %v835
        %v1128 = vunpack.c.l.b16 %v836
        %v1129 = vunpack.c.h.b16 %v836
        %v1130 = vunpack.c.l.b16 %v837
        %v1131 = vunpack.c.h.b16 %v837
        %v1132 = vunpack.c.l.b16 %v838
        %v1133 = vunpack.c.h.b16 %v838
        %v1134 = vunpack.c.l.b16 %v839
        %v1135 = vunpack.c.h.b16 %v839
        %v1136 = vunpack.c.l.b16 %v840
        %v1137 = vunpack.c.h.b16 %v840
        %v1138 = vunpack.c.l.b16 %v841
        %v1139 = vunpack.c.h.b16 %v841
        %v1140 = vunpack.c.l.b16 %v842
        %v1141 = vunpack.c.h.b16 %v842
        %v1142 = vunpack.c.l.b16 %v843
        %v1143 = vunpack.c.h.b16 %v843
        %v1144 = vunpack.c.l.b16 %v844
        %v1145 = vunpack.c.h.b16 %v844
        %v1146 = vunpack.c.l.b16 %v845
        %v1147 = vunpack.c.h.b16 %v845
        %v1148 = vunpack.c.l.b16 %v846
        %v1149 = vunpack.c.h.b16 %v846
        %v1150 = vunpack.c.l.b16 %v847
        %v1151 = vunpack.c.h.b16 %v847
        %v1152 = vunpack.c.l.b16 %v848
        %v1153 = vunpack.c.h.b16 %v848
        %v1154 = vunpack.c.l.b16 %v849
        %v1155 = vunpack.c.h.b16 %v849
        %v1156 = vpack.c.b16 %v962, %v960
        %v1157 = vpack.c.b16 %v963, %v961
        %v1158 = vpack.c.b16 %v966, %v964
        %v1159 = vpack.c.b16 %v967, %v965
        %v1160 = vpack.c.b16 %v970, %v968
        %v1161 = vpack.c.b16 %v971, %v969
        %v1162 = vpack.c.b16 %v974, %v972
        %v1163 = vpack.c.b16 %v975, %v973
        %v1164 = vpack.c.b16 %v978, %v976
        %v1165 = vpack.c.b16 %v979, %v977
        %v1166 = vpack.c.b16 %v982, %v980
        %v1167 = vpack.c.b16 %v983, %v981
        %v1168 = vpack.c.b16 %v986, %v984
        %v1169 = vpack.c.b16 %v987, %v985
        %v1170 = vpack.c.b16 %v990, %v988
        %v1171 = vpack.c.b16 %v991, %v989
        %v1172 = vpack.c.b16 %v994, %v992
        %v1173 = vpack.c.b16 %v995, %v993
        %v1174 = vpack.c.b16 %v998, %v996
        %v1175 = vpack.c.b16 %v999, %v997
        %v1176 = vpack.c.b16 %v1002, %v1000
        %v1177 = vpack.c.b16 %v1003, %v1001
        %v1178 = vpack.c.b16 %v1006, %v1004
        %v1179 = vpack.c.b16 %v1007, %v1005
        %v1180 = vpack.c.b16 %v1010, %v1008
        %v1181 = vpack.c.b16 %v1011, %v1009
        %v1182 = vpack.c.b16 %v1014, %v1012
        %v1183 = vpack.c.b16 %v1015, %v1013
        %v1184 = vpack.c.b16 %v1018, %v1016
        %v1185 = vpack.c.b16 %v1019, %v1017
        %v1186 = vpack.c.b16 %v1022, %v1020
        %v1187 = vpack.c.b16 %v1023, %v1021
        %v1188 = vpack.c.b16 %v1026, %v1024
        %v1189 = vpack.c.b16 %v1027, %v1025
        %v1190 = vpack.c.b16 %v1030, %v1028
        %v1191 = vpack.c.b16 %v1031, %v1029
        %v1192 = vpack.c.b16 %v1034, %v1032
        %v1193 = vpack.c.b16 %v1035, %v1033
        %v1194 = vpack.c.b16 %v1038, %v1036
        %v1195 = vpack.c.b16 %v1039, %v1037
        %v1196 = vpack.c.b16 %v1042, %v1040
        %v1197 = vpack.c.b16 %v1043, %v1041
        %v1198 = vpack.c.b16 %v1046, %v1044
        %v1199 = vpack.c.b16 %v1047, %v1045
        %v1200 = vpack.c.b16 %v1050, %v1048
        %v1201 = vpack.c.b16 %v1051, %v1049
        %v1202 = vpack.c.b16 %v1054, %v1052
        %v1203 = vpack.c.b16 %v1055, %v1053
        %v1204 = vpack.c.b16 %v1058, %v1056
        %v1205 = vpack.c.b16 %v1059, %v1057
        %v1206 = vpack.c.b16 %v1062, %v1060
        %v1207 = vpack.c.b16 %v1063, %v1061
        %v1208 = vpack.c.b16 %v1066, %v1064
        %v1209 = vpack.c.b16 %v1067, %v1065
        %v1210 = vpack.c.b16 %v1070, %v1068
        %v1211 = vpack.c.b16 %v1071, %v1069
        %v1212 = vpack.c.b16 %v1074, %v1072
        %v1213 = vpack.c.b16 %v1075, %v1073
        %v1214 = vpack.c.b16 %v1078, %v1076
        %v1215 = vpack.c.b16 %v1079, %v1077
        %v1216 = vpack.c.b16 %v1082, %v1080
        %v1217 = vpack.c.b16 %v1083, %v1081
        %v1218 = vpack.c.b16 %v1086, %v1084
        %v1219 = vpack.c.b16 %v1087, %v1085
        %v1220 = vpack.c.b16 %v1090, %v1088
        %v1221 = vpack.c.b16 %v1091, %v1089
        %v1222 = vpack.c.b16 %v1094, %v1092
        %v1223 = vpack.c.b16 %v1095, %v1093
        %v1224 = vpack.c.b16 %v1098, %v1096
        %v1225 = vpack.c.b16 %v1099, %v1097
        %v1226 = vpack.c.b16 %v1102, %v1100
        %v1227 = vpack.c.b16 %v1103, %v1101
        %v1228 = vpack.c.b16 %v1106, %v1104
        %v1229 = vpack.c.b16 %v1107, %v1105
        %v1230 = vpack.c.b16 %v1110, %v1108
        %v1231 = vpack.c.b16 %v1111, %v1109
        %v1232 = vpack.c.b16 %v1114, %v1112
        %v1233 = vpack.c.b16 %v1115, %v1113
        %v1234 = vpack.c.b16 %v1118, %v1116
        %v1235 = vpack.c.b16 %v1119, %v1117
        %v1236 = vpack.c.b16 %v1122, %v1120
        %v1237 = vpack.c.b16 %v1123, %v1121
        %v1238 = vpack.c.b16 %v1126, %v1124
        %v1239 = vpack.c.b16 %v1127, %v1125
        %v1240 = vpack.c.b16 %v1130, %v1128
        %v1241 = vpack.c.b16 %v1131, %v1129
        %v1242 = vpack.c.b16 %v1134, %v1132
        %v1243 = vpack.c.b16 %v1135, %v1133
        %v1244 = vpack.c.b16 %v1138, %v1136
        %v1245 = vpack.c.b16 %v1139, %v1137
        %v1246 = vpack.c.b16 %v1142, %v1140
        %v1247 = vpack.c.b16 %v1143, %v1141
        %v1248 = vpack.c.b16 %v1146, %v1144
        %v1249 = vpack.c.b16 %v1147, %v1145
        %v1250 = vpack.c.b16 %v1150, %v1148
        %v1251 = vpack.c.b16 %v1151, %v1149
        %v1252 = vpack.c.b16 %v1154, %v1152
        %v1253 = vpack.c.b16 %v1155, %v1153
        %vm1352 = vcmask 130048
        %v1354 = vsel %vm1352, %v702, 0
        %v1357 = vsel %vm1352, %v709, 0
        %v1360 = vsel %vm1352, %v716, 0
        %v1363 = vsel %vm1352, %v723, 0
        %v1366 = vsel %vm1352, %v730, 0
        %v1369 = vsel %vm1352, %v737, 0
        %v1372 = vsel %vm1352, %v744, 0
        %v1375 = vsel %vm1352, %v751, 0
        %1377 = vmatprep.subr.bf16.mxu0 %v1171
        %1378 = vmatpush1.bf16.msra.mxu0 %v1170
        %1379 = vmatprep.subr.bf16.mxu0 %v1169
        %1380 = vmatpush1.bf16.msra.mxu0 %v1168
        %1381 = vmatprep.subr.bf16.mxu0 %v1167
        %1382 = vmatpush1.bf16.msra.mxu0 %v1166
        %1383 = vmatprep.subr.bf16.mxu0 %v1165
        %1384 = vmatpush1.bf16.msra.mxu0 %v1164
        %1385 = vmatprep.subr.bf16.mxu0 %v1163
        %1386 = vmatpush1.bf16.msra.mxu0 %v1162
        %1387 = vmatprep.subr.bf16.mxu0 %v1161
        %1388 = vmatpush1.bf16.msra.mxu0 %v1160
        %1389 = vmatprep.subr.bf16.mxu0 %v1159
        %1390 = vmatpush1.bf16.msra.mxu0 %v1158
        %1391 = vmatprep.subr.bf16.mxu0 %v1157
        %1392 = vmatpush1.bf16.msra.mxu0 %v1156
        %1393 = vmatprep.subr.bf16.mxu0 %v1187
        %1394 = vmatpush2.bf16.msra.mxu0 %v1186
        %1395 = vmatprep.subr.bf16.mxu0 %v1185
        %1396 = vmatpush2.bf16.msra.mxu0 %v1184
        %1397 = vmatprep.subr.bf16.mxu0 %v1183
        %1398 = vmatpush2.bf16.msra.mxu0 %v1182
        %1399 = vmatprep.subr.bf16.mxu0 %v1181
        %1400 = vmatpush2.bf16.msra.mxu0 %v1180
        %1401 = vmatprep.subr.bf16.mxu0 %v1179
        %1402 = vmatpush2.bf16.msra.mxu0 %v1178
        %1403 = vmatprep.subr.bf16.mxu0 %v1177
        %1404 = vmatpush2.bf16.msra.mxu0 %v1176
        %1405 = vmatprep.subr.bf16.mxu0 %v1175
        %1406 = vmatpush2.bf16.msra.mxu0 %v1174
        %1407 = vmatprep.subr.bf16.mxu0 %v1173
        %1408 = vmatpush2.bf16.msra.mxu0 %v1172
        %1409 = vmatprep.mubr.bf16.mxu0 %v697
        %1410 = vmatmul.mubr.bf16.gmra.mxu0 %v696
        %v1411 = vpop.f32.mrf.mxu0
        %v1412 = vadd.f32 %v855, %v1411
        %v1413 = vpop.f32.mrf.mxu0
        %v1414 = vadd.f32 %v859, %v1413
        %v1415 = vpop.f32.mrf.mxu0
        %v1416 = vadd.f32 %v855, %v1415
        %v1417 = vpop.f32.mrf.mxu0
        %v1418 = vadd.f32 %v859, %v1417
        %1419 = vmatprep.mubr.bf16.mxu0 %v704
        %1420 = vmatmul.mubr.bf16.gmra.mxu0 %v703
        %v1421 = vpop.f32.mrf.mxu0
        %v1422 = vadd.f32 %v855, %v1421
        %v1423 = vpop.f32.mrf.mxu0
        %v1424 = vadd.f32 %v859, %v1423
        %v1425 = vpop.f32.mrf.mxu0
        %v1426 = vadd.f32 %v855, %v1425
        %v1427 = vpop.f32.mrf.mxu0
        %v1428 = vadd.f32 %v859, %v1427
        %1429 = vmatprep.mubr.bf16.mxu0 %v711
        %1430 = vmatmul.mubr.bf16.gmra.mxu0 %v710
        %v1431 = vpop.f32.mrf.mxu0
        %v1432 = vadd.f32 %v855, %v1431
        %v1433 = vpop.f32.mrf.mxu0
        %v1434 = vadd.f32 %v859, %v1433
        %v1435 = vpop.f32.mrf.mxu0
        %v1436 = vadd.f32 %v855, %v1435
        %v1437 = vpop.f32.mrf.mxu0
        %v1438 = vadd.f32 %v859, %v1437
        %1439 = vmatprep.mubr.bf16.mxu0 %v718
        %1440 = vmatmul.mubr.bf16.gmra.mxu0 %v717
        %v1441 = vpop.f32.mrf.mxu0
        %v1442 = vadd.f32 %v855, %v1441
        %v1443 = vpop.f32.mrf.mxu0
        %v1444 = vadd.f32 %v859, %v1443
        %v1445 = vpop.f32.mrf.mxu0
        %v1446 = vadd.f32 %v855, %v1445
        %v1447 = vpop.f32.mrf.mxu0
        %v1448 = vadd.f32 %v859, %v1447
        %1449 = vmatprep.mubr.bf16.mxu0 %v725
        %1450 = vmatmul.mubr.bf16.gmra.mxu0 %v724
        %v1451 = vpop.f32.mrf.mxu0
        %v1452 = vadd.f32 %v855, %v1451
        %v1453 = vpop.f32.mrf.mxu0
        %v1454 = vadd.f32 %v859, %v1453
        %v1455 = vpop.f32.mrf.mxu0
        %v1456 = vadd.f32 %v855, %v1455
        %v1457 = vpop.f32.mrf.mxu0
        %v1458 = vadd.f32 %v859, %v1457
        %1459 = vmatprep.mubr.bf16.mxu0 %v732
        %1460 = vmatmul.mubr.bf16.gmra.mxu0 %v731
        %v1461 = vpop.f32.mrf.mxu0
        %v1462 = vadd.f32 %v855, %v1461
        %v1463 = vpop.f32.mrf.mxu0
        %v1464 = vadd.f32 %v859, %v1463
        %v1465 = vpop.f32.mrf.mxu0
        %v1466 = vadd.f32 %v855, %v1465
        %v1467 = vpop.f32.mrf.mxu0
        %v1468 = vadd.f32 %v859, %v1467
        %1469 = vmatprep.mubr.bf16.mxu0 %v739
        %1470 = vmatmul.mubr.bf16.gmra.mxu0 %v738
        %v1471 = vpop.f32.mrf.mxu0
        %v1472 = vadd.f32 %v855, %v1471
        %v1473 = vpop.f32.mrf.mxu0
        %v1474 = vadd.f32 %v859, %v1473
        %v1475 = vpop.f32.mrf.mxu0
        %v1476 = vadd.f32 %v855, %v1475
        %v1477 = vpop.f32.mrf.mxu0
        %v1478 = vadd.f32 %v859, %v1477
        %1479 = vmatprep.mubr.bf16.mxu0 %v746
        %1480 = vmatmul.mubr.bf16.gmra.mxu0 %v745
        %v1481 = vpop.f32.mrf.mxu0
        %v1482 = vadd.f32 %v855, %v1481
        %v1483 = vpop.f32.mrf.mxu0
        %v1484 = vadd.f32 %v859, %v1483
        %v1485 = vpop.f32.mrf.mxu0
        %v1486 = vadd.f32 %v855, %v1485
        %v1487 = vpop.f32.mrf.mxu0
        %v1488 = vadd.f32 %v859, %v1487
        %1489 = vdwg.mxu0
        %1490 = vmatprep.subr.bf16.mxu0 %v1203
        %1491 = vmatpush1.bf16.msra.mxu0 %v1202
        %1492 = vmatprep.subr.bf16.mxu0 %v1201
        %1493 = vmatpush1.bf16.msra.mxu0 %v1200
        %1494 = vmatprep.subr.bf16.mxu0 %v1199
        %1495 = vmatpush1.bf16.msra.mxu0 %v1198
        %1496 = vmatprep.subr.bf16.mxu0 %v1197
        %1497 = vmatpush1.bf16.msra.mxu0 %v1196
        %1498 = vmatprep.subr.bf16.mxu0 %v1195
        %1499 = vmatpush1.bf16.msra.mxu0 %v1194
        %1500 = vmatprep.subr.bf16.mxu0 %v1193
        %1501 = vmatpush1.bf16.msra.mxu0 %v1192
        %1502 = vmatprep.subr.bf16.mxu0 %v1191
        %1503 = vmatpush1.bf16.msra.mxu0 %v1190
        %1504 = vmatprep.subr.bf16.mxu0 %v1189
        %1505 = vmatpush1.bf16.msra.mxu0 %v1188
        %1506 = vmatprep.subr.bf16.mxu0 %v1219
        %1507 = vmatpush2.bf16.msra.mxu0 %v1218
        %1508 = vmatprep.subr.bf16.mxu0 %v1217
        %1509 = vmatpush2.bf16.msra.mxu0 %v1216
        %1510 = vmatprep.subr.bf16.mxu0 %v1215
        %1511 = vmatpush2.bf16.msra.mxu0 %v1214
        %1512 = vmatprep.subr.bf16.mxu0 %v1213
        %1513 = vmatpush2.bf16.msra.mxu0 %v1212
        %1514 = vmatprep.subr.bf16.mxu0 %v1211
        %1515 = vmatpush2.bf16.msra.mxu0 %v1210
        %1516 = vmatprep.subr.bf16.mxu0 %v1209
        %1517 = vmatpush2.bf16.msra.mxu0 %v1208
        %1518 = vmatprep.subr.bf16.mxu0 %v1207
        %1519 = vmatpush2.bf16.msra.mxu0 %v1206
        %1520 = vmatprep.subr.bf16.mxu0 %v1205
        %1521 = vmatpush2.bf16.msra.mxu0 %v1204
        %1522 = vmatprep.mubr.bf16.mxu0 %v699
        %1523 = vmatmul.mubr.bf16.gmra.mxu0 %v698
        %v1524 = vpop.f32.mrf.mxu0
        %v1525 = vadd.f32 %v1412, %v1524
        %v1526 = vpop.f32.mrf.mxu0
        %v1527 = vadd.f32 %v1414, %v1526
        %v1528 = vpop.f32.mrf.mxu0
        %v1529 = vadd.f32 %v1416, %v1528
        %v1530 = vpop.f32.mrf.mxu0
        %v1531 = vadd.f32 %v1418, %v1530
        %1532 = vmatprep.mubr.bf16.mxu0 %v706
        %1533 = vmatmul.mubr.bf16.gmra.mxu0 %v705
        %v1534 = vpop.f32.mrf.mxu0
        %v1535 = vadd.f32 %v1422, %v1534
        %v1536 = vpop.f32.mrf.mxu0
        %v1537 = vadd.f32 %v1424, %v1536
        %v1538 = vpop.f32.mrf.mxu0
        %v1539 = vadd.f32 %v1426, %v1538
        %v1540 = vpop.f32.mrf.mxu0
        %v1541 = vadd.f32 %v1428, %v1540
        %1542 = vmatprep.mubr.bf16.mxu0 %v713
        %1543 = vmatmul.mubr.bf16.gmra.mxu0 %v712
        %v1544 = vpop.f32.mrf.mxu0
        %v1545 = vadd.f32 %v1432, %v1544
        %v1546 = vpop.f32.mrf.mxu0
        %v1547 = vadd.f32 %v1434, %v1546
        %v1548 = vpop.f32.mrf.mxu0
        %v1549 = vadd.f32 %v1436, %v1548
        %v1550 = vpop.f32.mrf.mxu0
        %v1551 = vadd.f32 %v1438, %v1550
        %1552 = vmatprep.mubr.bf16.mxu0 %v720
        %1553 = vmatmul.mubr.bf16.gmra.mxu0 %v719
        %v1554 = vpop.f32.mrf.mxu0
        %v1555 = vadd.f32 %v1442, %v1554
        %v1556 = vpop.f32.mrf.mxu0
        %v1557 = vadd.f32 %v1444, %v1556
        %v1558 = vpop.f32.mrf.mxu0
        %v1559 = vadd.f32 %v1446, %v1558
        %v1560 = vpop.f32.mrf.mxu0
        %v1561 = vadd.f32 %v1448, %v1560
        %1562 = vmatprep.mubr.bf16.mxu0 %v727
        %1563 = vmatmul.mubr.bf16.gmra.mxu0 %v726
        %v1564 = vpop.f32.mrf.mxu0
        %v1565 = vadd.f32 %v1452, %v1564
        %v1566 = vpop.f32.mrf.mxu0
        %v1567 = vadd.f32 %v1454, %v1566
        %v1568 = vpop.f32.mrf.mxu0
        %v1569 = vadd.f32 %v1456, %v1568
        %v1570 = vpop.f32.mrf.mxu0
        %v1571 = vadd.f32 %v1458, %v1570
        %1572 = vmatprep.mubr.bf16.mxu0 %v734
        %1573 = vmatmul.mubr.bf16.gmra.mxu0 %v733
        %v1574 = vpop.f32.mrf.mxu0
        %v1575 = vadd.f32 %v1462, %v1574
        %v1576 = vpop.f32.mrf.mxu0
        %v1577 = vadd.f32 %v1464, %v1576
        %v1578 = vpop.f32.mrf.mxu0
        %v1579 = vadd.f32 %v1466, %v1578
        %v1580 = vpop.f32.mrf.mxu0
        %v1581 = vadd.f32 %v1468, %v1580
        %1582 = vmatprep.mubr.bf16.mxu0 %v741
        %1583 = vmatmul.mubr.bf16.gmra.mxu0 %v740
        %v1584 = vpop.f32.mrf.mxu0
        %v1585 = vadd.f32 %v1472, %v1584
        %v1586 = vpop.f32.mrf.mxu0
        %v1587 = vadd.f32 %v1474, %v1586
        %v1588 = vpop.f32.mrf.mxu0
        %v1589 = vadd.f32 %v1476, %v1588
        %v1590 = vpop.f32.mrf.mxu0
        %v1591 = vadd.f32 %v1478, %v1590
        %1592 = vmatprep.mubr.bf16.mxu0 %v748
        %1593 = vmatmul.mubr.bf16.gmra.mxu0 %v747
        %v1594 = vpop.f32.mrf.mxu0
        %v1595 = vadd.f32 %v1482, %v1594
        %v1596 = vpop.f32.mrf.mxu0
        %v1597 = vadd.f32 %v1484, %v1596
        %v1598 = vpop.f32.mrf.mxu0
        %v1599 = vadd.f32 %v1486, %v1598
        %v1600 = vpop.f32.mrf.mxu0
        %v1601 = vadd.f32 %v1488, %v1600
        %1602 = vdwg.mxu0
        %1603 = vmatprep.subr.bf16.mxu0 %v1235
        %1604 = vmatpush1.bf16.msra.mxu0 %v1234
        %1605 = vmatprep.subr.bf16.mxu0 %v1233
        %1606 = vmatpush1.bf16.msra.mxu0 %v1232
        %1607 = vmatprep.subr.bf16.mxu0 %v1231
        %1608 = vmatpush1.bf16.msra.mxu0 %v1230
        %1609 = vmatprep.subr.bf16.mxu0 %v1229
        %1610 = vmatpush1.bf16.msra.mxu0 %v1228
        %1611 = vmatprep.subr.bf16.mxu0 %v1227
        %1612 = vmatpush1.bf16.msra.mxu0 %v1226
        %1613 = vmatprep.subr.bf16.mxu0 %v1225
        %1614 = vmatpush1.bf16.msra.mxu0 %v1224
        %1615 = vmatprep.subr.bf16.mxu0 %v1223
        %1616 = vmatpush1.bf16.msra.mxu0 %v1222
        %1617 = vmatprep.subr.bf16.mxu0 %v1221
        %1618 = vmatpush1.bf16.msra.mxu0 %v1220
        %1619 = vmatprep.subr.bf16.mxu0 %v1251
        %1620 = vmatpush2.bf16.msra.mxu0 %v1250
        %1621 = vmatprep.subr.bf16.mxu0 %v1249
        %1622 = vmatpush2.bf16.msra.mxu0 %v1248
        %1623 = vmatprep.subr.bf16.mxu0 %v1247
        %1624 = vmatpush2.bf16.msra.mxu0 %v1246
        %1625 = vmatprep.subr.bf16.mxu0 %v1245
        %1626 = vmatpush2.bf16.msra.mxu0 %v1244
        %1627 = vmatprep.subr.bf16.mxu0 %v1243
        %1628 = vmatpush2.bf16.msra.mxu0 %v1242
        %1629 = vmatprep.subr.bf16.mxu0 %v1241
        %1630 = vmatpush2.bf16.msra.mxu0 %v1240
        %1631 = vmatprep.subr.bf16.mxu0 %v1239
        %1632 = vmatpush2.bf16.msra.mxu0 %v1238
        %1633 = vmatprep.subr.bf16.mxu0 %v1237
        %1634 = vmatpush2.bf16.msra.mxu0 %v1236
        %1635 = vmatprep.mubr.bf16.mxu0 %v701
        %1636 = vmatmul.mubr.bf16.gmra.mxu0 %v700
        %v1637 = vpop.f32.mrf.mxu0
        %v1638 = vadd.f32 %v1525, %v1637
        %v1639 = vpop.f32.mrf.mxu0
        %v1640 = vadd.f32 %v1527, %v1639
        %v1641 = vpop.f32.mrf.mxu0
        %v1642 = vadd.f32 %v1529, %v1641
        %v1643 = vpop.f32.mrf.mxu0
        %v1644 = vadd.f32 %v1531, %v1643
        %1645 = vmatprep.mubr.bf16.mxu0 %v708
        %1646 = vmatmul.mubr.bf16.gmra.mxu0 %v707
        %v1647 = vpop.f32.mrf.mxu0
        %v1648 = vadd.f32 %v1535, %v1647
        %v1649 = vpop.f32.mrf.mxu0
        %v1650 = vadd.f32 %v1537, %v1649
        %v1651 = vpop.f32.mrf.mxu0
        %v1652 = vadd.f32 %v1539, %v1651
        %v1653 = vpop.f32.mrf.mxu0
        %v1654 = vadd.f32 %v1541, %v1653
        %1655 = vmatprep.mubr.bf16.mxu0 %v715
        %1656 = vmatmul.mubr.bf16.gmra.mxu0 %v714
        %v1657 = vpop.f32.mrf.mxu0
        %v1658 = vadd.f32 %v1545, %v1657
        %v1659 = vpop.f32.mrf.mxu0
        %v1660 = vadd.f32 %v1547, %v1659
        %v1661 = vpop.f32.mrf.mxu0
        %v1662 = vadd.f32 %v1549, %v1661
        %v1663 = vpop.f32.mrf.mxu0
        %v1664 = vadd.f32 %v1551, %v1663
        %1665 = vmatprep.mubr.bf16.mxu0 %v722
        %1666 = vmatmul.mubr.bf16.gmra.mxu0 %v721
        %v1667 = vpop.f32.mrf.mxu0
        %v1668 = vadd.f32 %v1555, %v1667
        %v1669 = vpop.f32.mrf.mxu0
        %v1670 = vadd.f32 %v1557, %v1669
        %v1671 = vpop.f32.mrf.mxu0
        %v1672 = vadd.f32 %v1559, %v1671
        %v1673 = vpop.f32.mrf.mxu0
        %v1674 = vadd.f32 %v1561, %v1673
        %1675 = vmatprep.mubr.bf16.mxu0 %v729
        %1676 = vmatmul.mubr.bf16.gmra.mxu0 %v728
        %v1677 = vpop.f32.mrf.mxu0
        %v1678 = vadd.f32 %v1565, %v1677
        %v1679 = vpop.f32.mrf.mxu0
        %v1680 = vadd.f32 %v1567, %v1679
        %v1681 = vpop.f32.mrf.mxu0
        %v1682 = vadd.f32 %v1569, %v1681
        %v1683 = vpop.f32.mrf.mxu0
        %v1684 = vadd.f32 %v1571, %v1683
        %1685 = vmatprep.mubr.bf16.mxu0 %v736
        %1686 = vmatmul.mubr.bf16.gmra.mxu0 %v735
        %v1687 = vpop.f32.mrf.mxu0
        %v1688 = vadd.f32 %v1575, %v1687
        %v1689 = vpop.f32.mrf.mxu0
        %v1690 = vadd.f32 %v1577, %v1689
        %v1691 = vpop.f32.mrf.mxu0
        %v1692 = vadd.f32 %v1579, %v1691
        %v1693 = vpop.f32.mrf.mxu0
        %v1694 = vadd.f32 %v1581, %v1693
        %1695 = vmatprep.mubr.bf16.mxu0 %v743
        %1696 = vmatmul.mubr.bf16.gmra.mxu0 %v742
        %v1697 = vpop.f32.mrf.mxu0
        %v1698 = vadd.f32 %v1585, %v1697
        %v1699 = vpop.f32.mrf.mxu0
        %v1700 = vadd.f32 %v1587, %v1699
        %v1701 = vpop.f32.mrf.mxu0
        %v1702 = vadd.f32 %v1589, %v1701
        %v1703 = vpop.f32.mrf.mxu0
        %v1704 = vadd.f32 %v1591, %v1703
        %1705 = vmatprep.mubr.bf16.mxu0 %v750
        %1706 = vmatmul.mubr.bf16.gmra.mxu0 %v749
        %v1707 = vpop.f32.mrf.mxu0
        %v1708 = vadd.f32 %v1595, %v1707
        %v1709 = vpop.f32.mrf.mxu0
        %v1710 = vadd.f32 %v1597, %v1709
        %v1711 = vpop.f32.mrf.mxu0
        %v1712 = vadd.f32 %v1599, %v1711
        %v1713 = vpop.f32.mrf.mxu0
        %v1714 = vadd.f32 %v1601, %v1713
        %1715 = vdwg.mxu0
        %1716 = vmatprep.subr.bf16.mxu0 0
        %1717 = vmatpush1.bf16.msra.mxu0 0
        %1718 = vmatprep.subr.bf16.mxu0 0
        %1719 = vmatpush1.bf16.msra.mxu0 0
        %1720 = vmatprep.subr.bf16.mxu0 0
        %1721 = vmatpush1.bf16.msra.mxu0 0
        %1722 = vmatprep.subr.bf16.mxu0 0
        %1723 = vmatpush1.bf16.msra.mxu0 0
        %1724 = vmatprep.subr.bf16.mxu0 0
        %1725 = vmatpush1.bf16.msra.mxu0 0
        %1726 = vmatprep.subr.bf16.mxu0 0
        %1727 = vmatpush1.bf16.msra.mxu0 0
        %1728 = vmatprep.subr.bf16.mxu0 0
        %1729 = vmatpush1.bf16.msra.mxu0 0
        %1730 = vmatprep.subr.bf16.mxu0 %v1253
        %1731 = vmatpush1.bf16.msra.mxu0 %v1252
        %1732 = vmatprep.subr.bf16.mxu0 0
        %1733 = vmatpush2.bf16.msra.mxu0 0
        %1734 = vmatprep.subr.bf16.mxu0 0
        %1735 = vmatpush2.bf16.msra.mxu0 0
        %1736 = vmatprep.subr.bf16.mxu0 0
        %1737 = vmatpush2.bf16.msra.mxu0 0
        %1738 = vmatprep.subr.bf16.mxu0 0
        %1739 = vmatpush2.bf16.msra.mxu0 0
        %1740 = vmatprep.subr.bf16.mxu0 0
        %1741 = vmatpush2.bf16.msra.mxu0 0
        %1742 = vmatprep.subr.bf16.mxu0 0
        %1743 = vmatpush2.bf16.msra.mxu0 0
        %1744 = vmatprep.subr.bf16.mxu0 0
        %1745 = vmatpush2.bf16.msra.mxu0 0
        %1746 = vmatprep.subr.bf16.mxu0 0
        %1747 = vmatpush2.bf16.msra.mxu0 0
        %1748 = vmatprep.mubr.bf16.mxu0 0
        %1749 = vmatmul.mubr.bf16.gmra.mxu0 %v1354
        %v1750 = vpop.f32.mrf.mxu0
        %v1751 = vadd.f32 %v1638, %v1750
        %v1752 = vpop.f32.mrf.mxu0
        %v1753 = vadd.f32 %v1640, %v1752
        %v1754 = vpop.f32.mrf.mxu0
        %v1755 = vadd.f32 %v1642, %v1754
        %v1756 = vpop.f32.mrf.mxu0
        %v1757 = vadd.f32 %v1644, %v1756
        %1758 = vmatprep.mubr.bf16.mxu0 0
        %1759 = vmatmul.mubr.bf16.gmra.mxu0 %v1357
        %v1760 = vpop.f32.mrf.mxu0
        %v1761 = vadd.f32 %v1648, %v1760
        %v1762 = vpop.f32.mrf.mxu0
        %v1763 = vadd.f32 %v1650, %v1762
        %v1764 = vpop.f32.mrf.mxu0
        %v1765 = vadd.f32 %v1652, %v1764
        %v1766 = vpop.f32.mrf.mxu0
        %v1767 = vadd.f32 %v1654, %v1766
        %1768 = vmatprep.mubr.bf16.mxu0 0
        %1769 = vmatmul.mubr.bf16.gmra.mxu0 %v1360
        %v1770 = vpop.f32.mrf.mxu0
        %v1771 = vadd.f32 %v1658, %v1770
        %v1772 = vpop.f32.mrf.mxu0
        %v1773 = vadd.f32 %v1660, %v1772
        %v1774 = vpop.f32.mrf.mxu0
        %v1775 = vadd.f32 %v1662, %v1774
        %v1776 = vpop.f32.mrf.mxu0
        %v1777 = vadd.f32 %v1664, %v1776
        %1778 = vmatprep.mubr.bf16.mxu0 0
        %1779 = vmatmul.mubr.bf16.gmra.mxu0 %v1363
        %v1780 = vpop.f32.mrf.mxu0
        %v1781 = vadd.f32 %v1668, %v1780
        %v1782 = vpop.f32.mrf.mxu0
        %v1783 = vadd.f32 %v1670, %v1782
        %v1784 = vpop.f32.mrf.mxu0
        %v1785 = vadd.f32 %v1672, %v1784
        %v1786 = vpop.f32.mrf.mxu0
        %v1787 = vadd.f32 %v1674, %v1786
        %1788 = vmatprep.mubr.bf16.mxu0 0
        %1789 = vmatmul.mubr.bf16.gmra.mxu0 %v1366
        %v1790 = vpop.f32.mrf.mxu0
        %v1791 = vadd.f32 %v1678, %v1790
        %v1792 = vpop.f32.mrf.mxu0
        %v1793 = vadd.f32 %v1680, %v1792
        %v1794 = vpop.f32.mrf.mxu0
        %v1795 = vadd.f32 %v1682, %v1794
        %v1796 = vpop.f32.mrf.mxu0
        %v1797 = vadd.f32 %v1684, %v1796
        %1798 = vmatprep.mubr.bf16.mxu0 0
        %1799 = vmatmul.mubr.bf16.gmra.mxu0 %v1369
        %v1800 = vpop.f32.mrf.mxu0
        %v1801 = vadd.f32 %v1688, %v1800
        %v1802 = vpop.f32.mrf.mxu0
        %v1803 = vadd.f32 %v1690, %v1802
        %v1804 = vpop.f32.mrf.mxu0
        %v1805 = vadd.f32 %v1692, %v1804
        %v1806 = vpop.f32.mrf.mxu0
        %v1807 = vadd.f32 %v1694, %v1806
        %1808 = vmatprep.mubr.bf16.mxu0 0
        %1809 = vmatmul.mubr.bf16.gmra.mxu0 %v1372
        %v1810 = vpop.f32.mrf.mxu0
        %v1811 = vadd.f32 %v1698, %v1810
        %v1812 = vpop.f32.mrf.mxu0
        %v1813 = vadd.f32 %v1700, %v1812
        %v1814 = vpop.f32.mrf.mxu0
        %v1815 = vadd.f32 %v1702, %v1814
        %v1816 = vpop.f32.mrf.mxu0
        %v1817 = vadd.f32 %v1704, %v1816
        %1818 = vmatprep.mubr.bf16.mxu0 0
        %1819 = vmatmul.mubr.bf16.gmra.mxu0 %v1375
        %v1820 = vpop.f32.mrf.mxu0
        %v1821 = vadd.f32 %v1708, %v1820
        %v1822 = vpop.f32.mrf.mxu0
        %v1823 = vadd.f32 %v1710, %v1822
        %v1824 = vpop.f32.mrf.mxu0
        %v1825 = vadd.f32 %v1712, %v1824
        %v1826 = vpop.f32.mrf.mxu0
        %v1827 = vadd.f32 %v1714, %v1826
        %1828 = vdwg.mxu0
        %v1829 = vmax.f32 %v1751, 0.0
        %v1830 = vmax.f32 %v1753, 0.0
        %v1831 = vmax.f32 %v1755, 0.0
        %v1832 = vmax.f32 %v1757, 0.0
        %v1833 = vmax.f32 %v1761, 0.0
        %v1834 = vmax.f32 %v1763, 0.0
        %v1835 = vmax.f32 %v1765, 0.0
        %v1836 = vmax.f32 %v1767, 0.0
        %v1837 = vmax.f32 %v1771, 0.0
        %v1838 = vmax.f32 %v1773, 0.0
        %v1839 = vmax.f32 %v1775, 0.0
        %v1840 = vmax.f32 %v1777, 0.0
        %v1841 = vmax.f32 %v1781, 0.0
        %v1842 = vmax.f32 %v1783, 0.0
        %v1843 = vmax.f32 %v1785, 0.0
        %v1844 = vmax.f32 %v1787, 0.0
        %v1845 = vmax.f32 %v1791, 0.0
        %v1846 = vmax.f32 %v1793, 0.0
        %v1847 = vmax.f32 %v1795, 0.0
        %v1848 = vmax.f32 %v1797, 0.0
        %v1849 = vmax.f32 %v1801, 0.0
        %v1850 = vmax.f32 %v1803, 0.0
        %v1851 = vmax.f32 %v1805, 0.0
        %v1852 = vmax.f32 %v1807, 0.0
        %v1853 = vmax.f32 %v1811, 0.0
        %v1854 = vmax.f32 %v1813, 0.0
        %v1855 = vmax.f32 %v1815, 0.0
        %v1856 = vmax.f32 %v1817, 0.0
        %v1857 = vmax.f32 %v1821, 0.0
        %v1858 = vmax.f32 %v1823, 0.0
        %v1859 = vmax.f32 %v1825, 0.0
        %v1860 = vmax.f32 %v1827, 0.0
        %v1861 = vpack.c.bf16 %v1831, %v1829
        %v1862 = vpack.c.bf16 %v1832, %v1830
        %v1863 = vpack.c.bf16 %v1835, %v1833
        %v1864 = vpack.c.bf16 %v1836, %v1834
        %v1865 = vpack.c.bf16 %v1839, %v1837
        %v1866 = vpack.c.bf16 %v1840, %v1838
        %v1867 = vpack.c.bf16 %v1843, %v1841
        %v1868 = vpack.c.bf16 %v1844, %v1842
        %v1869 = vpack.c.bf16 %v1847, %v1845
        %v1870 = vpack.c.bf16 %v1848, %v1846
        %v1871 = vpack.c.bf16 %v1851, %v1849
        %v1872 = vpack.c.bf16 %v1852, %v1850
        %v1873 = vpack.c.bf16 %v1855, %v1853
        %v1874 = vpack.c.bf16 %v1856, %v1854
        %v1875 = vpack.c.bf16 %v1859, %v1857
        %v1876 = vpack.c.bf16 %v1860, %v1858
        %v1877 = vld [vmem:[%s3] sm:$0xf]
        %v1878 = vld [vmem:[%s3 + $0x4] sm:$0xf]
        %v1879 = vld [vmem:[%s3 + $0x8] sm:$0xf]
        %v1880 = vld [vmem:[%s3 + $0xc] sm:$0xf]
        %v1881 = vld [vmem:[%s3 + $0x10] sm:$0xf]
        %v1882 = vld [vmem:[%s3 + $0x14] sm:$0xf]
        %v1883 = vld [vmem:[%s3 + $0x18] sm:$0xf]
        %v1884 = vld [vmem:[%s3 + $0x1c] sm:$0xf]
        %v1885 = vld [vmem:[%s3 + $0x20] sm:$0xf]
        %v1886 = vld [vmem:[%s3 + $0x24] sm:$0xf]
        %v1887 = vld [vmem:[%s3 + $0x28] sm:$0xf]
        %v1888 = vld [vmem:[%s3 + $0x2c] sm:$0xf]
        %v1889 = vld [vmem:[%s3 + $0x30] sm:$0xf]
        %v1890 = vld [vmem:[%s3 + $0x34] sm:$0xf]
        %v1891 = vld [vmem:[%s3 + $0x38] sm:$0xf]
        %v1892 = vld [vmem:[%s3 + $0x3c] sm:$0xf]
        %v1893 = vld [vmem:[%s3 + $0x40] sm:$0xf]
        %v1894 = vld [vmem:[%s3 + $0x44] sm:$0xf]
        %v1895 = vld [vmem:[%s3 + $0x48] sm:$0xf]
        %v1896 = vld [vmem:[%s3 + $0x4c] sm:$0xf]
        %v1897 = vld [vmem:[%s3 + $0x50] sm:$0xf]
        %v1898 = vld [vmem:[%s3 + $0x54] sm:$0xf]
        %v1899 = vld [vmem:[%s3 + $0x58] sm:$0xf]
        %v1900 = vld [vmem:[%s3 + $0x5c] sm:$0xf]
        %v1901 = vld [vmem:[%s3 + $0x60] sm:$0xf]
        %v1902 = vld [vmem:[%s3 + $0x64] sm:$0xf]
        %v1903 = vld [vmem:[%s3 + $0x68] sm:$0xf]
        %v1904 = vld [vmem:[%s3 + $0x6c] sm:$0xf]
        %v1905 = vld [vmem:[%s3 + $0x70] sm:$0xf]
        %v1906 = vld [vmem:[%s3 + $0x74] sm:$0xf]
        %v1907 = vld [vmem:[%s3 + $0x78] sm:$0xf]
        %v1908 = vld [vmem:[%s3 + $0x7c] sm:$0xf]
        %v1909 = vld [vmem:[%s4] sm:$0x1]
        %v1911 = vlaneseq
        %v1912 = vshrl.u32 %v1911, 7
        %v1913 = vsub.s32 0, %v1912
        %v1914 = vrot.slane %v1909, %v1913
        %v1948 = vunpack.c.l.b16 %v1877
        %v1949 = vunpack.c.l.b16 %v1878
        %v1950 = vunpack.c.l.b16 %v1879
        %v1951 = vunpack.c.l.b16 %v1880
        %v1952 = vunpack.c.l.b16 %v1881
        %v1953 = vunpack.c.l.b16 %v1882
        %v1954 = vunpack.c.l.b16 %v1883
        %v1955 = vunpack.c.l.b16 %v1884
        %v1956 = vunpack.c.l.b16 %v1885
        %v1957 = vunpack.c.l.b16 %v1886
        %v1958 = vunpack.c.l.b16 %v1887
        %v1959 = vunpack.c.l.b16 %v1888
        %v1960 = vunpack.c.l.b16 %v1889
        %v1961 = vunpack.c.l.b16 %v1890
        %v1962 = vunpack.c.l.b16 %v1891
        %v1963 = vunpack.c.l.b16 %v1892
        %v1964 = vunpack.c.l.b16 %v1893
        %v1965 = vunpack.c.l.b16 %v1894
        %v1966 = vunpack.c.l.b16 %v1895
        %v1967 = vunpack.c.l.b16 %v1896
        %v1968 = vunpack.c.l.b16 %v1897
        %v1969 = vunpack.c.l.b16 %v1898
        %v1970 = vunpack.c.l.b16 %v1899
        %v1971 = vunpack.c.l.b16 %v1900
        %v1972 = vunpack.c.l.b16 %v1901
        %v1973 = vunpack.c.l.b16 %v1902
        %v1974 = vunpack.c.l.b16 %v1903
        %v1975 = vunpack.c.l.b16 %v1904
        %v1976 = vunpack.c.l.b16 %v1905
        %v1977 = vunpack.c.l.b16 %v1906
        %v1978 = vunpack.c.l.b16 %v1907
        %v1979 = vunpack.c.l.b16 %v1908
        %v1980 = vpack.c.b16 %v1949, %v1948
        %v1981 = vpack.c.b16 %v1951, %v1950
        %v1982 = vpack.c.b16 %v1953, %v1952
        %v1983 = vpack.c.b16 %v1955, %v1954
        %v1984 = vpack.c.b16 %v1957, %v1956
        %v1985 = vpack.c.b16 %v1959, %v1958
        %v1986 = vpack.c.b16 %v1961, %v1960
        %v1987 = vpack.c.b16 %v1963, %v1962
        %v1988 = vpack.c.b16 %v1965, %v1964
        %v1989 = vpack.c.b16 %v1967, %v1966
        %v1990 = vpack.c.b16 %v1969, %v1968
        %v1991 = vpack.c.b16 %v1971, %v1970
        %v1992 = vpack.c.b16 %v1973, %v1972
        %v1993 = vpack.c.b16 %v1975, %v1974
        %v1994 = vpack.c.b16 %v1977, %v1976
        %v1995 = vpack.c.b16 %v1979, %v1978
        %2012 = vmatprep.subr.bf16.mxu0 0
        %2013 = vmatpush1.bf16.msra.mxu0 %v1987
        %2014 = vmatprep.subr.bf16.mxu0 0
        %2015 = vmatpush1.bf16.msra.mxu0 %v1986
        %2016 = vmatprep.subr.bf16.mxu0 0
        %2017 = vmatpush1.bf16.msra.mxu0 %v1985
        %2018 = vmatprep.subr.bf16.mxu0 0
        %2019 = vmatpush1.bf16.msra.mxu0 %v1984
        %2020 = vmatprep.subr.bf16.mxu0 0
        %2021 = vmatpush1.bf16.msra.mxu0 %v1983
        %2022 = vmatprep.subr.bf16.mxu0 0
        %2023 = vmatpush1.bf16.msra.mxu0 %v1982
        %2024 = vmatprep.subr.bf16.mxu0 0
        %2025 = vmatpush1.bf16.msra.mxu0 %v1981
        %2026 = vmatprep.subr.bf16.mxu0 0
        %2027 = vmatpush1.bf16.msra.mxu0 %v1980
        %2028 = vmatprep.subr.bf16.mxu0 0
        %2029 = vmatpush2.bf16.msra.mxu0 %v1995
        %2030 = vmatprep.subr.bf16.mxu0 0
        %2031 = vmatpush2.bf16.msra.mxu0 %v1994
        %2032 = vmatprep.subr.bf16.mxu0 0
        %2033 = vmatpush2.bf16.msra.mxu0 %v1993
        %2034 = vmatprep.subr.bf16.mxu0 0
        %2035 = vmatpush2.bf16.msra.mxu0 %v1992
        %2036 = vmatprep.subr.bf16.mxu0 0
        %2037 = vmatpush2.bf16.msra.mxu0 %v1991
        %2038 = vmatprep.subr.bf16.mxu0 0
        %2039 = vmatpush2.bf16.msra.mxu0 %v1990
        %2040 = vmatprep.subr.bf16.mxu0 0
        %2041 = vmatpush2.bf16.msra.mxu0 %v1989
        %2042 = vmatprep.subr.bf16.mxu0 0
        %2043 = vmatpush2.bf16.msra.mxu0 %v1988
        %2044 = vmatprep.mubr.bf16.mxu0 %v1862
        %2045 = vmatmul.mubr.bf16.gmra.mxu0 %v1861
        %v2046 = vpop.f32.mrf.mxu0
        %v2047 = vadd.f32 %v1914, %v2046
        %v2048 = vpop.f32.mrf.mxu0
        %v2049 = vpop.f32.mrf.mxu0
        %v2050 = vadd.f32 %v1914, %v2049
        %v2051 = vpop.f32.mrf.mxu0
        %2052 = vmatprep.mubr.bf16.mxu0 %v1864
        %2053 = vmatmul.mubr.bf16.gmra.mxu0 %v1863
        %v2054 = vpop.f32.mrf.mxu0
        %v2055 = vadd.f32 %v1914, %v2054
        %v2056 = vpop.f32.mrf.mxu0
        %v2057 = vpop.f32.mrf.mxu0
        %v2058 = vadd.f32 %v1914, %v2057
        %v2059 = vpop.f32.mrf.mxu0
        %2060 = vmatprep.mubr.bf16.mxu0 %v1866
        %2061 = vmatmul.mubr.bf16.gmra.mxu0 %v1865
        %v2062 = vpop.f32.mrf.mxu0
        %v2063 = vadd.f32 %v1914, %v2062
        %v2064 = vpop.f32.mrf.mxu0
        %v2065 = vpop.f32.mrf.mxu0
        %v2066 = vadd.f32 %v1914, %v2065
        %v2067 = vpop.f32.mrf.mxu0
        %2068 = vmatprep.mubr.bf16.mxu0 %v1868
        %2069 = vmatmul.mubr.bf16.gmra.mxu0 %v1867
        %v2070 = vpop.f32.mrf.mxu0
        %v2071 = vadd.f32 %v1914, %v2070
        %v2072 = vpop.f32.mrf.mxu0
        %v2073 = vpop.f32.mrf.mxu0
        %v2074 = vadd.f32 %v1914, %v2073
        %v2075 = vpop.f32.mrf.mxu0
        %2076 = vmatprep.mubr.bf16.mxu0 %v1870
        %2077 = vmatmul.mubr.bf16.gmra.mxu0 %v1869
        %v2078 = vpop.f32.mrf.mxu0
        %v2079 = vadd.f32 %v1914, %v2078
        %v2080 = vpop.f32.mrf.mxu0
        %v2081 = vpop.f32.mrf.mxu0
        %v2082 = vadd.f32 %v1914, %v2081
        %v2083 = vpop.f32.mrf.mxu0
        %2084 = vmatprep.mubr.bf16.mxu0 %v1872
        %2085 = vmatmul.mubr.bf16.gmra.mxu0 %v1871
        %v2086 = vpop.f32.mrf.mxu0
        %v2087 = vadd.f32 %v1914, %v2086
        %v2088 = vpop.f32.mrf.mxu0
        %v2089 = vpop.f32.mrf.mxu0
        %v2090 = vadd.f32 %v1914, %v2089
        %v2091 = vpop.f32.mrf.mxu0
        %2092 = vmatprep.mubr.bf16.mxu0 %v1874
        %2093 = vmatmul.mubr.bf16.gmra.mxu0 %v1873
        %v2094 = vpop.f32.mrf.mxu0
        %v2095 = vadd.f32 %v1914, %v2094
        %v2096 = vpop.f32.mrf.mxu0
        %v2097 = vpop.f32.mrf.mxu0
        %v2098 = vadd.f32 %v1914, %v2097
        %v2099 = vpop.f32.mrf.mxu0
        %2100 = vmatprep.mubr.bf16.mxu0 %v1876
        %2101 = vmatmul.mubr.bf16.gmra.mxu0 %v1875
        %v2102 = vpop.f32.mrf.mxu0
        %v2103 = vadd.f32 %v1914, %v2102
        %v2104 = vpop.f32.mrf.mxu0
        %v2105 = vpop.f32.mrf.mxu0
        %v2106 = vadd.f32 %v1914, %v2105
        %v2107 = vpop.f32.mrf.mxu0
        %2108 = vdwg.mxu0
        %v2109 = vmax.f32 %v2047, 0.0
        %v2110 = vmax.f32 %v2050, 0.0
        %v2111 = vmax.f32 %v2055, 0.0
        %v2112 = vmax.f32 %v2058, 0.0
        %v2113 = vmax.f32 %v2063, 0.0
        %v2114 = vmax.f32 %v2066, 0.0
        %v2115 = vmax.f32 %v2071, 0.0
        %v2116 = vmax.f32 %v2074, 0.0
        %v2117 = vmax.f32 %v2079, 0.0
        %v2118 = vmax.f32 %v2082, 0.0
        %v2119 = vmax.f32 %v2087, 0.0
        %v2120 = vmax.f32 %v2090, 0.0
        %v2121 = vmax.f32 %v2095, 0.0
        %v2122 = vmax.f32 %v2098, 0.0
        %v2123 = vmax.f32 %v2103, 0.0
        %v2124 = vmax.f32 %v2106, 0.0
        %v2125 = vpack.c.bf16 %v2110, %v2109
        %v2126 = vpack.c.bf16 %v2112, %v2111
        %v2127 = vpack.c.bf16 %v2114, %v2113
        %v2128 = vpack.c.bf16 %v2116, %v2115
        %v2129 = vpack.c.bf16 %v2118, %v2117
        %v2130 = vpack.c.bf16 %v2120, %v2119
        %v2131 = vpack.c.bf16 %v2122, %v2121
        %v2132 = vpack.c.bf16 %v2124, %v2123
        %v2133 = vld [vmem:[%s5] sm:$0xf]
        %v2134 = vld [vmem:[%s5 + $0x4] sm:$0xf]
        %v2135 = vld [vmem:[%s5 + $0x8] sm:$0xf]
        %v2136 = vld [vmem:[%s5 + $0xc] sm:$0xf]
        %v2137 = vld [vmem:[%s5 + $0x10] sm:$0xf]
        %v2138 = vld [vmem:[%s5 + $0x14] sm:$0xf]
        %v2139 = vld [vmem:[%s5 + $0x18] sm:$0xf]
        %v2140 = vld [vmem:[%s5 + $0x1c] sm:$0xf]
        %v2141 = vld [vmem:[%s5 + $0x20] sm:$0xf]
        %v2142 = vld [vmem:[%s5 + $0x24] sm:$0xf]
        %v2143 = vld [vmem:[%s5 + $0x28] sm:$0xf]
        %v2144 = vld [vmem:[%s5 + $0x2c] sm:$0xf]
        %v2145 = vld [vmem:[%s5 + $0x30] sm:$0xf]
        %v2146 = vld [vmem:[%s5 + $0x34] sm:$0xf]
        %v2147 = vld [vmem:[%s5 + $0x38] sm:$0xf]
        %v2148 = vld [vmem:[%s5 + $0x3c] sm:$0xf]
        %v2149 = vld [vmem:[%s6] sm:$0x1]
        %v2151 = vlaneseq
        %v2152 = vshrl.u32 %v2151, 7
        %v2153 = vsub.s32 0, %v2152
        %v2154 = vrot.slane %v2149, %v2153
        %v2172 = vunpack.c.l.b16 %v2133
        %v2173 = vunpack.c.l.b16 %v2134
        %v2174 = vunpack.c.l.b16 %v2135
        %v2175 = vunpack.c.l.b16 %v2136
        %v2176 = vunpack.c.l.b16 %v2137
        %v2177 = vunpack.c.l.b16 %v2138
        %v2178 = vunpack.c.l.b16 %v2139
        %v2179 = vunpack.c.l.b16 %v2140
        %v2180 = vunpack.c.l.b16 %v2141
        %v2181 = vunpack.c.l.b16 %v2142
        %v2182 = vunpack.c.l.b16 %v2143
        %v2183 = vunpack.c.l.b16 %v2144
        %v2184 = vunpack.c.l.b16 %v2145
        %v2185 = vunpack.c.l.b16 %v2146
        %v2186 = vunpack.c.l.b16 %v2147
        %v2187 = vunpack.c.l.b16 %v2148
        %v2188 = vpack.c.b16 %v2173, %v2172
        %v2189 = vpack.c.b16 %v2175, %v2174
        %v2190 = vpack.c.b16 %v2177, %v2176
        %v2191 = vpack.c.b16 %v2179, %v2178
        %v2192 = vpack.c.b16 %v2181, %v2180
        %v2193 = vpack.c.b16 %v2183, %v2182
        %v2194 = vpack.c.b16 %v2185, %v2184
        %v2195 = vpack.c.b16 %v2187, %v2186
        %2204 = vmatprep.subr.bf16.mxu0 0
        %2205 = vmatpush1.bf16.msra.mxu0 %v2195
        %2206 = vmatprep.subr.bf16.mxu0 0
        %2207 = vmatpush1.bf16.msra.mxu0 %v2194
        %2208 = vmatprep.subr.bf16.mxu0 0
        %2209 = vmatpush1.bf16.msra.mxu0 %v2193
        %2210 = vmatprep.subr.bf16.mxu0 0
        %2211 = vmatpush1.bf16.msra.mxu0 %v2192
        %2212 = vmatprep.subr.bf16.mxu0 0
        %2213 = vmatpush1.bf16.msra.mxu0 %v2191
        %2214 = vmatprep.subr.bf16.mxu0 0
        %2215 = vmatpush1.bf16.msra.mxu0 %v2190
        %2216 = vmatprep.subr.bf16.mxu0 0
        %2217 = vmatpush1.bf16.msra.mxu0 %v2189
        %2218 = vmatprep.subr.bf16.mxu0 0
        %2219 = vmatpush1.bf16.msra.mxu0 %v2188
        %2220 = vmatprep.subr.bf16.mxu0 0
        %2221 = vmatpush2.bf16.msra.mxu0 0
        %2222 = vmatprep.subr.bf16.mxu0 0
        %2223 = vmatpush2.bf16.msra.mxu0 0
        %2224 = vmatprep.subr.bf16.mxu0 0
        %2225 = vmatpush2.bf16.msra.mxu0 0
        %2226 = vmatprep.subr.bf16.mxu0 0
        %2227 = vmatpush2.bf16.msra.mxu0 0
        %2228 = vmatprep.subr.bf16.mxu0 0
        %2229 = vmatpush2.bf16.msra.mxu0 0
        %2230 = vmatprep.subr.bf16.mxu0 0
        %2231 = vmatpush2.bf16.msra.mxu0 0
        %2232 = vmatprep.subr.bf16.mxu0 0
        %2233 = vmatpush2.bf16.msra.mxu0 0
        %2234 = vmatprep.subr.bf16.mxu0 0
        %2235 = vmatpush2.bf16.msra.mxu0 0
        %2236 = vmatprep.mubr.bf16.mxu0 0
        %2237 = vmatmul.mubr.bf16.gmra.mxu0 %v2125
        %v2238 = vpop.f32.mrf.mxu0
        %v2239 = vadd.f32 %v2154, %v2238
        %v2240 = vpop.f32.mrf.mxu0
        %v2241 = vpop.f32.mrf.mxu0
        %v2242 = vadd.f32 %v2154, %v2241
        %v2243 = vpop.f32.mrf.mxu0
        %2244 = vmatprep.mubr.bf16.mxu0 0
        %2245 = vmatmul.mubr.bf16.gmra.mxu0 %v2126
        %v2246 = vpop.f32.mrf.mxu0
        %v2247 = vadd.f32 %v2154, %v2246
        %v2248 = vpop.f32.mrf.mxu0
        %v2249 = vpop.f32.mrf.mxu0
        %v2250 = vadd.f32 %v2154, %v2249
        %v2251 = vpop.f32.mrf.mxu0
        %2252 = vmatprep.mubr.bf16.mxu0 0
        %2253 = vmatmul.mubr.bf16.gmra.mxu0 %v2127
        %v2254 = vpop.f32.mrf.mxu0
        %v2255 = vadd.f32 %v2154, %v2254
        %v2256 = vpop.f32.mrf.mxu0
        %v2257 = vpop.f32.mrf.mxu0
        %v2258 = vadd.f32 %v2154, %v2257
        %v2259 = vpop.f32.mrf.mxu0
        %2260 = vmatprep.mubr.bf16.mxu0 0
        %2261 = vmatmul.mubr.bf16.gmra.mxu0 %v2128
        %v2262 = vpop.f32.mrf.mxu0
        %v2263 = vadd.f32 %v2154, %v2262
        %v2264 = vpop.f32.mrf.mxu0
        %v2265 = vpop.f32.mrf.mxu0
        %v2266 = vadd.f32 %v2154, %v2265
        %v2267 = vpop.f32.mrf.mxu0
        %2268 = vmatprep.mubr.bf16.mxu0 0
        %2269 = vmatmul.mubr.bf16.gmra.mxu0 %v2129
        %v2270 = vpop.f32.mrf.mxu0
        %v2271 = vadd.f32 %v2154, %v2270
        %v2272 = vpop.f32.mrf.mxu0
        %v2273 = vpop.f32.mrf.mxu0
        %v2274 = vadd.f32 %v2154, %v2273
        %v2275 = vpop.f32.mrf.mxu0
        %2276 = vmatprep.mubr.bf16.mxu0 0
        %2277 = vmatmul.mubr.bf16.gmra.mxu0 %v2130
        %v2278 = vpop.f32.mrf.mxu0
        %v2279 = vadd.f32 %v2154, %v2278
        %v2280 = vpop.f32.mrf.mxu0
        %v2281 = vpop.f32.mrf.mxu0
        %v2282 = vadd.f32 %v2154, %v2281
        %v2283 = vpop.f32.mrf.mxu0
        %2284 = vmatprep.mubr.bf16.mxu0 0
        %2285 = vmatmul.mubr.bf16.gmra.mxu0 %v2131
        %v2286 = vpop.f32.mrf.mxu0
        %v2287 = vadd.f32 %v2154, %v2286
        %v2288 = vpop.f32.mrf.mxu0
        %v2289 = vpop.f32.mrf.mxu0
        %v2290 = vadd.f32 %v2154, %v2289
        %v2291 = vpop.f32.mrf.mxu0
        %2292 = vmatprep.mubr.bf16.mxu0 0
        %2293 = vmatmul.mubr.bf16.gmra.mxu0 %v2132
        %v2294 = vpop.f32.mrf.mxu0
        %v2295 = vadd.f32 %v2154, %v2294
        %v2296 = vpop.f32.mrf.mxu0
        %v2297 = vpop.f32.mrf.mxu0
        %v2298 = vadd.f32 %v2154, %v2297
        %v2299 = vpop.f32.mrf.mxu0
        %2300 = vdwg.mxu0
        %v2301 = vmax.f32 %v2239, 0.0
        %v2302 = vmax.f32 %v2242, 0.0
        %v2303 = vmax.f32 %v2247, 0.0
        %v2304 = vmax.f32 %v2250, 0.0
        %v2305 = vmax.f32 %v2255, 0.0
        %v2306 = vmax.f32 %v2258, 0.0
        %v2307 = vmax.f32 %v2263, 0.0
        %v2308 = vmax.f32 %v2266, 0.0
        %v2309 = vmax.f32 %v2271, 0.0
        %v2310 = vmax.f32 %v2274, 0.0
        %v2311 = vmax.f32 %v2279, 0.0
        %v2312 = vmax.f32 %v2282, 0.0
        %v2313 = vmax.f32 %v2287, 0.0
        %v2314 = vmax.f32 %v2290, 0.0
        %v2315 = vmax.f32 %v2295, 0.0
        %v2316 = vmax.f32 %v2298, 0.0
        %v2317 = vpack.c.bf16 %v2302, %v2301
        %v2318 = vpack.c.bf16 %v2304, %v2303
        %v2319 = vpack.c.bf16 %v2306, %v2305
        %v2320 = vpack.c.bf16 %v2308, %v2307
        %v2321 = vpack.c.bf16 %v2310, %v2309
        %v2322 = vpack.c.bf16 %v2312, %v2311
        %v2323 = vpack.c.bf16 %v2314, %v2313
        %v2324 = vpack.c.bf16 %v2316, %v2315
        %v2325 = vld [vmem:[%s7] sm:$0xf]
        %v2326 = vld [vmem:[%s7 + $0x4] sm:$0xf]
        %v2327 = vld [vmem:[%s7 + $0x8] sm:$0xf]
        %v2328 = vld [vmem:[%s7 + $0xc] sm:$0xf]
        %v2329 = vld [vmem:[%s7 + $0x10] sm:$0xf]
        %v2330 = vld [vmem:[%s7 + $0x14] sm:$0xf]
        %v2331 = vld [vmem:[%s7 + $0x18] sm:$0xf]
        %v2332 = vld [vmem:[%s7 + $0x1c] sm:$0xf]
        %v2333 = vld [vmem:[%s7 + $0x20] sm:$0xf]
        %v2334 = vld [vmem:[%s7 + $0x24] sm:$0xf]
        %v2335 = vld [vmem:[%s7 + $0x28] sm:$0xf]
        %v2336 = vld [vmem:[%s7 + $0x2c] sm:$0xf]
        %v2337 = vld [vmem:[%s7 + $0x30] sm:$0xf]
        %v2338 = vld [vmem:[%s7 + $0x34] sm:$0xf]
        %v2339 = vld [vmem:[%s7 + $0x38] sm:$0xf]
        %v2340 = vld [vmem:[%s7 + $0x3c] sm:$0xf]
        %v2341 = vld [vmem:[%s8] sm:$0x1]
        %v2343 = vlaneseq
        %v2344 = vshrl.u32 %v2343, 7
        %v2345 = vsub.s32 0, %v2344
        %v2346 = vrot.slane %v2341, %v2345
        %v2364 = vunpack.c.l.b16 %v2325
        %v2365 = vunpack.c.l.b16 %v2326
        %v2366 = vunpack.c.l.b16 %v2327
        %v2367 = vunpack.c.l.b16 %v2328
        %v2368 = vunpack.c.l.b16 %v2329
        %v2369 = vunpack.c.l.b16 %v2330
        %v2370 = vunpack.c.l.b16 %v2331
        %v2371 = vunpack.c.l.b16 %v2332
        %v2372 = vunpack.c.l.b16 %v2333
        %v2373 = vunpack.c.l.b16 %v2334
        %v2374 = vunpack.c.l.b16 %v2335
        %v2375 = vunpack.c.l.b16 %v2336
        %v2376 = vunpack.c.l.b16 %v2337
        %v2377 = vunpack.c.l.b16 %v2338
        %v2378 = vunpack.c.l.b16 %v2339
        %v2379 = vunpack.c.l.b16 %v2340
        %v2380 = vpack.c.b16 %v2365, %v2364
        %v2381 = vpack.c.b16 %v2367, %v2366
        %v2382 = vpack.c.b16 %v2369, %v2368
        %v2383 = vpack.c.b16 %v2371, %v2370
        %v2384 = vpack.c.b16 %v2373, %v2372
        %v2385 = vpack.c.b16 %v2375, %v2374
        %v2386 = vpack.c.b16 %v2377, %v2376
        %v2387 = vpack.c.b16 %v2379, %v2378
        %2396 = vmatprep.subr.bf16.mxu0 0
        %2397 = vmatpush1.bf16.msra.mxu0 %v2387
        %2398 = vmatprep.subr.bf16.mxu0 0
        %2399 = vmatpush1.bf16.msra.mxu0 %v2386
        %2400 = vmatprep.subr.bf16.mxu0 0
        %2401 = vmatpush1.bf16.msra.mxu0 %v2385
        %2402 = vmatprep.subr.bf16.mxu0 0
        %2403 = vmatpush1.bf16.msra.mxu0 %v2384
        %2404 = vmatprep.subr.bf16.mxu0 0
        %2405 = vmatpush1.bf16.msra.mxu0 %v2383
        %2406 = vmatprep.subr.bf16.mxu0 0
        %2407 = vmatpush1.bf16.msra.mxu0 %v2382
        %2408 = vmatprep.subr.bf16.mxu0 0
        %2409 = vmatpush1.bf16.msra.mxu0 %v2381
        %2410 = vmatprep.subr.bf16.mxu0 0
        %2411 = vmatpush1.bf16.msra.mxu0 %v2380
        %2412 = vmatprep.subr.bf16.mxu0 0
        %2413 = vmatpush2.bf16.msra.mxu0 0
        %2414 = vmatprep.subr.bf16.mxu0 0
        %2415 = vmatpush2.bf16.msra.mxu0 0
        %2416 = vmatprep.subr.bf16.mxu0 0
        %2417 = vmatpush2.bf16.msra.mxu0 0
        %2418 = vmatprep.subr.bf16.mxu0 0
        %2419 = vmatpush2.bf16.msra.mxu0 0
        %2420 = vmatprep.subr.bf16.mxu0 0
        %2421 = vmatpush2.bf16.msra.mxu0 0
        %2422 = vmatprep.subr.bf16.mxu0 0
        %2423 = vmatpush2.bf16.msra.mxu0 0
        %2424 = vmatprep.subr.bf16.mxu0 0
        %2425 = vmatpush2.bf16.msra.mxu0 0
        %2426 = vmatprep.subr.bf16.mxu0 0
        %2427 = vmatpush2.bf16.msra.mxu0 0
        %2428 = vmatprep.mubr.bf16.mxu0 0
        %2429 = vmatmul.mubr.bf16.gmra.mxu0 %v2317
        %v2430 = vpop.f32.mrf.mxu0
        %v2431 = vadd.f32 %v2346, %v2430
        %v2432 = vpop.f32.mrf.mxu0
        %v2433 = vpop.f32.mrf.mxu0
        %v2434 = vadd.f32 %v2346, %v2433
        %v2435 = vpop.f32.mrf.mxu0
        %2436 = vmatprep.mubr.bf16.mxu0 0
        %2437 = vmatmul.mubr.bf16.gmra.mxu0 %v2318
        %v2438 = vpop.f32.mrf.mxu0
        %v2439 = vadd.f32 %v2346, %v2438
        %v2440 = vpop.f32.mrf.mxu0
        %v2441 = vpop.f32.mrf.mxu0
        %v2442 = vadd.f32 %v2346, %v2441
        %v2443 = vpop.f32.mrf.mxu0
        %2444 = vmatprep.mubr.bf16.mxu0 0
        %2445 = vmatmul.mubr.bf16.gmra.mxu0 %v2319
        %v2446 = vpop.f32.mrf.mxu0
        %v2447 = vadd.f32 %v2346, %v2446
        %v2448 = vpop.f32.mrf.mxu0
        %v2449 = vpop.f32.mrf.mxu0
        %v2450 = vadd.f32 %v2346, %v2449
        %v2451 = vpop.f32.mrf.mxu0
        %2452 = vmatprep.mubr.bf16.mxu0 0
        %2453 = vmatmul.mubr.bf16.gmra.mxu0 %v2320
        %v2454 = vpop.f32.mrf.mxu0
        %v2455 = vadd.f32 %v2346, %v2454
        %v2456 = vpop.f32.mrf.mxu0
        %v2457 = vpop.f32.mrf.mxu0
        %v2458 = vadd.f32 %v2346, %v2457
        %v2459 = vpop.f32.mrf.mxu0
        %2460 = vmatprep.mubr.bf16.mxu0 0
        %2461 = vmatmul.mubr.bf16.gmra.mxu0 %v2321
        %v2462 = vpop.f32.mrf.mxu0
        %v2463 = vadd.f32 %v2346, %v2462
        %v2464 = vpop.f32.mrf.mxu0
        %v2465 = vpop.f32.mrf.mxu0
        %v2466 = vadd.f32 %v2346, %v2465
        %v2467 = vpop.f32.mrf.mxu0
        %2468 = vmatprep.mubr.bf16.mxu0 0
        %2469 = vmatmul.mubr.bf16.gmra.mxu0 %v2322
        %v2470 = vpop.f32.mrf.mxu0
        %v2471 = vadd.f32 %v2346, %v2470
        %v2472 = vpop.f32.mrf.mxu0
        %v2473 = vpop.f32.mrf.mxu0
        %v2474 = vadd.f32 %v2346, %v2473
        %v2475 = vpop.f32.mrf.mxu0
        %2476 = vmatprep.mubr.bf16.mxu0 0
        %2477 = vmatmul.mubr.bf16.gmra.mxu0 %v2323
        %v2478 = vpop.f32.mrf.mxu0
        %v2479 = vadd.f32 %v2346, %v2478
        %v2480 = vpop.f32.mrf.mxu0
        %v2481 = vpop.f32.mrf.mxu0
        %v2482 = vadd.f32 %v2346, %v2481
        %v2483 = vpop.f32.mrf.mxu0
        %2484 = vmatprep.mubr.bf16.mxu0 0
        %2485 = vmatmul.mubr.bf16.gmra.mxu0 %v2324
        %v2486 = vpop.f32.mrf.mxu0
        %v2487 = vadd.f32 %v2346, %v2486
        %v2488 = vpop.f32.mrf.mxu0
        %v2489 = vpop.f32.mrf.mxu0
        %v2490 = vadd.f32 %v2346, %v2489
        %v2491 = vpop.f32.mrf.mxu0
        %2492 = vdwg.mxu0
        %v2493 = vpack.c.bf16 %v2434, %v2431
        %v2494 = vpack.c.bf16 %v2442, %v2439
        %v2495 = vpack.c.bf16 %v2450, %v2447
        %v2496 = vpack.c.bf16 %v2458, %v2455
        %v2497 = vpack.c.bf16 %v2466, %v2463
        %v2498 = vpack.c.bf16 %v2474, %v2471
        %v2499 = vpack.c.bf16 %v2482, %v2479
        %v2500 = vpack.c.bf16 %v2490, %v2487
        %v2501 = vld [vmem:[%s9] sm:$0xf]
        %v2502 = vld [vmem:[%s9 + $0x4] sm:$0xf]
        %v2503 = vld [vmem:[%s9 + $0x8] sm:$0xf]
        %v2504 = vld [vmem:[%s9 + $0xc] sm:$0xf]
        %v2505 = vld [vmem:[%s9 + $0x10] sm:$0xf]
        %v2506 = vld [vmem:[%s9 + $0x14] sm:$0xf]
        %v2507 = vld [vmem:[%s9 + $0x18] sm:$0xf]
        %v2508 = vld [vmem:[%s9 + $0x1c] sm:$0xf]
        %v2509 = vld [vmem:[%s9 + $0x20] sm:$0xf]
        %v2510 = vld [vmem:[%s9 + $0x24] sm:$0xf]
        %v2511 = vld [vmem:[%s9 + $0x28] sm:$0xf]
        %v2512 = vld [vmem:[%s9 + $0x2c] sm:$0xf]
        %v2513 = vld [vmem:[%s9 + $0x30] sm:$0xf]
        %v2514 = vld [vmem:[%s9 + $0x34] sm:$0xf]
        %v2515 = vld [vmem:[%s9 + $0x38] sm:$0xf]
        %v2516 = vld [vmem:[%s9 + $0x3c] sm:$0xf]
        %v2517 = vld [vmem:[%s10] sm:$0x1]
        %v2519 = vlaneseq
        %v2520 = vshrl.u32 %v2519, 7
        %v2521 = vsub.s32 0, %v2520
        %v2522 = vrot.slane %v2517, %v2521
        %v2540 = vunpack.c.l.b16 %v2501
        %v2541 = vunpack.c.l.b16 %v2502
        %v2542 = vunpack.c.l.b16 %v2503
        %v2543 = vunpack.c.l.b16 %v2504
        %v2544 = vunpack.c.l.b16 %v2505
        %v2545 = vunpack.c.l.b16 %v2506
        %v2546 = vunpack.c.l.b16 %v2507
        %v2547 = vunpack.c.l.b16 %v2508
        %v2548 = vunpack.c.l.b16 %v2509
        %v2549 = vunpack.c.l.b16 %v2510
        %v2550 = vunpack.c.l.b16 %v2511
        %v2551 = vunpack.c.l.b16 %v2512
        %v2552 = vunpack.c.l.b16 %v2513
        %v2553 = vunpack.c.l.b16 %v2514
        %v2554 = vunpack.c.l.b16 %v2515
        %v2555 = vunpack.c.l.b16 %v2516
        %v2556 = vpack.c.b16 %v2541, %v2540
        %v2557 = vpack.c.b16 %v2543, %v2542
        %v2558 = vpack.c.b16 %v2545, %v2544
        %v2559 = vpack.c.b16 %v2547, %v2546
        %v2560 = vpack.c.b16 %v2549, %v2548
        %v2561 = vpack.c.b16 %v2551, %v2550
        %v2562 = vpack.c.b16 %v2553, %v2552
        %v2563 = vpack.c.b16 %v2555, %v2554
        %2572 = vmatprep.subr.bf16.mxu0 0
        %2573 = vmatpush1.bf16.msra.mxu0 %v2563
        %2574 = vmatprep.subr.bf16.mxu0 0
        %2575 = vmatpush1.bf16.msra.mxu0 %v2562
        %2576 = vmatprep.subr.bf16.mxu0 0
        %2577 = vmatpush1.bf16.msra.mxu0 %v2561
        %2578 = vmatprep.subr.bf16.mxu0 0
        %2579 = vmatpush1.bf16.msra.mxu0 %v2560
        %2580 = vmatprep.subr.bf16.mxu0 0
        %2581 = vmatpush1.bf16.msra.mxu0 %v2559
        %2582 = vmatprep.subr.bf16.mxu0 0
        %2583 = vmatpush1.bf16.msra.mxu0 %v2558
        %2584 = vmatprep.subr.bf16.mxu0 0
        %2585 = vmatpush1.bf16.msra.mxu0 %v2557
        %2586 = vmatprep.subr.bf16.mxu0 0
        %2587 = vmatpush1.bf16.msra.mxu0 %v2556
        %2588 = vmatprep.subr.bf16.mxu0 0
        %2589 = vmatpush2.bf16.msra.mxu0 0
        %2590 = vmatprep.subr.bf16.mxu0 0
        %2591 = vmatpush2.bf16.msra.mxu0 0
        %2592 = vmatprep.subr.bf16.mxu0 0
        %2593 = vmatpush2.bf16.msra.mxu0 0
        %2594 = vmatprep.subr.bf16.mxu0 0
        %2595 = vmatpush2.bf16.msra.mxu0 0
        %2596 = vmatprep.subr.bf16.mxu0 0
        %2597 = vmatpush2.bf16.msra.mxu0 0
        %2598 = vmatprep.subr.bf16.mxu0 0
        %2599 = vmatpush2.bf16.msra.mxu0 0
        %2600 = vmatprep.subr.bf16.mxu0 0
        %2601 = vmatpush2.bf16.msra.mxu0 0
        %2602 = vmatprep.subr.bf16.mxu0 0
        %2603 = vmatpush2.bf16.msra.mxu0 0
        %2604 = vmatprep.mubr.bf16.mxu0 0
        %2605 = vmatmul.mubr.bf16.gmra.mxu0 %v2493
        %v2606 = vpop.f32.mrf.mxu0
        %v2607 = vadd.f32 %v2522, %v2606
        %v2608 = vpop.f32.mrf.mxu0
        %v2609 = vpop.f32.mrf.mxu0
        %v2610 = vadd.f32 %v2522, %v2609
        %v2611 = vpop.f32.mrf.mxu0
        %2612 = vmatprep.mubr.bf16.mxu0 0
        %2613 = vmatmul.mubr.bf16.gmra.mxu0 %v2494
        %v2614 = vpop.f32.mrf.mxu0
        %v2615 = vadd.f32 %v2522, %v2614
        %v2616 = vpop.f32.mrf.mxu0
        %v2617 = vpop.f32.mrf.mxu0
        %v2618 = vadd.f32 %v2522, %v2617
        %v2619 = vpop.f32.mrf.mxu0
        %2620 = vmatprep.mubr.bf16.mxu0 0
        %2621 = vmatmul.mubr.bf16.gmra.mxu0 %v2495
        %v2622 = vpop.f32.mrf.mxu0
        %v2623 = vadd.f32 %v2522, %v2622
        %v2624 = vpop.f32.mrf.mxu0
        %v2625 = vpop.f32.mrf.mxu0
        %v2626 = vadd.f32 %v2522, %v2625
        %v2627 = vpop.f32.mrf.mxu0
        %2628 = vmatprep.mubr.bf16.mxu0 0
        %2629 = vmatmul.mubr.bf16.gmra.mxu0 %v2496
        %v2630 = vpop.f32.mrf.mxu0
        %v2631 = vadd.f32 %v2522, %v2630
        %v2632 = vpop.f32.mrf.mxu0
        %v2633 = vpop.f32.mrf.mxu0
        %v2634 = vadd.f32 %v2522, %v2633
        %v2635 = vpop.f32.mrf.mxu0
        %2636 = vmatprep.mubr.bf16.mxu0 0
        %2637 = vmatmul.mubr.bf16.gmra.mxu0 %v2497
        %v2638 = vpop.f32.mrf.mxu0
        %v2639 = vadd.f32 %v2522, %v2638
        %v2640 = vpop.f32.mrf.mxu0
        %v2641 = vpop.f32.mrf.mxu0
        %v2642 = vadd.f32 %v2522, %v2641
        %v2643 = vpop.f32.mrf.mxu0
        %2644 = vmatprep.mubr.bf16.mxu0 0
        %2645 = vmatmul.mubr.bf16.gmra.mxu0 %v2498
        %v2646 = vpop.f32.mrf.mxu0
        %v2647 = vadd.f32 %v2522, %v2646
        %v2648 = vpop.f32.mrf.mxu0
        %v2649 = vpop.f32.mrf.mxu0
        %v2650 = vadd.f32 %v2522, %v2649
        %v2651 = vpop.f32.mrf.mxu0
        %2652 = vmatprep.mubr.bf16.mxu0 0
        %2653 = vmatmul.mubr.bf16.gmra.mxu0 %v2499
        %v2654 = vpop.f32.mrf.mxu0
        %v2655 = vadd.f32 %v2522, %v2654
        %v2656 = vpop.f32.mrf.mxu0
        %v2657 = vpop.f32.mrf.mxu0
        %v2658 = vadd.f32 %v2522, %v2657
        %v2659 = vpop.f32.mrf.mxu0
        %2660 = vmatprep.mubr.bf16.mxu0 0
        %2661 = vmatmul.mubr.bf16.gmra.mxu0 %v2500
        %v2662 = vpop.f32.mrf.mxu0
        %v2663 = vadd.f32 %v2522, %v2662
        %v2664 = vpop.f32.mrf.mxu0
        %v2665 = vpop.f32.mrf.mxu0
        %v2666 = vadd.f32 %v2522, %v2665
        %v2667 = vpop.f32.mrf.mxu0
        %2668 = vdwg.mxu0
        %v2669 = vmax.f32 %v2607, 0.0
        %v2670 = vmax.f32 %v2610, 0.0
        %v2671 = vmax.f32 %v2615, 0.0
        %v2672 = vmax.f32 %v2618, 0.0
        %v2673 = vmax.f32 %v2623, 0.0
        %v2674 = vmax.f32 %v2626, 0.0
        %v2675 = vmax.f32 %v2631, 0.0
        %v2676 = vmax.f32 %v2634, 0.0
        %v2677 = vmax.f32 %v2639, 0.0
        %v2678 = vmax.f32 %v2642, 0.0
        %v2679 = vmax.f32 %v2647, 0.0
        %v2680 = vmax.f32 %v2650, 0.0
        %v2681 = vmax.f32 %v2655, 0.0
        %v2682 = vmax.f32 %v2658, 0.0
        %v2683 = vmax.f32 %v2663, 0.0
        %v2684 = vmax.f32 %v2666, 0.0
        %v2685 = vpack.c.bf16 %v2670, %v2669
        %v2686 = vpack.c.bf16 %v2672, %v2671
        %v2687 = vpack.c.bf16 %v2674, %v2673
        %v2688 = vpack.c.bf16 %v2676, %v2675
        %v2689 = vpack.c.bf16 %v2678, %v2677
        %v2690 = vpack.c.bf16 %v2680, %v2679
        %v2691 = vpack.c.bf16 %v2682, %v2681
        %v2692 = vpack.c.bf16 %v2684, %v2683
        %v2693 = vld [vmem:[%s11] sm:$0xf]
        %v2694 = vld [vmem:[%s11 + $0x4] sm:$0xf]
        %v2695 = vld [vmem:[%s11 + $0x8] sm:$0xf]
        %v2696 = vld [vmem:[%s11 + $0xc] sm:$0xf]
        %v2697 = vld [vmem:[%s11 + $0x10] sm:$0xf]
        %v2698 = vld [vmem:[%s11 + $0x14] sm:$0xf]
        %v2699 = vld [vmem:[%s11 + $0x18] sm:$0xf]
        %v2700 = vld [vmem:[%s11 + $0x1c] sm:$0xf]
        %v2701 = vld [vmem:[%s11 + $0x20] sm:$0xf]
        %v2702 = vld [vmem:[%s11 + $0x24] sm:$0xf]
        %v2703 = vld [vmem:[%s11 + $0x28] sm:$0xf]
        %v2704 = vld [vmem:[%s11 + $0x2c] sm:$0xf]
        %v2705 = vld [vmem:[%s11 + $0x30] sm:$0xf]
        %v2706 = vld [vmem:[%s11 + $0x34] sm:$0xf]
        %v2707 = vld [vmem:[%s11 + $0x38] sm:$0xf]
        %v2708 = vld [vmem:[%s11 + $0x3c] sm:$0xf]
        %v2709 = vld [vmem:[%s12] sm:$0x1]
        %v2711 = vlaneseq
        %v2712 = vshrl.u32 %v2711, 7
        %v2713 = vsub.s32 0, %v2712
        %v2714 = vrot.slane %v2709, %v2713
        %v2732 = vunpack.c.l.b16 %v2693
        %v2733 = vunpack.c.l.b16 %v2694
        %v2734 = vunpack.c.l.b16 %v2695
        %v2735 = vunpack.c.l.b16 %v2696
        %v2736 = vunpack.c.l.b16 %v2697
        %v2737 = vunpack.c.l.b16 %v2698
        %v2738 = vunpack.c.l.b16 %v2699
        %v2739 = vunpack.c.l.b16 %v2700
        %v2740 = vunpack.c.l.b16 %v2701
        %v2741 = vunpack.c.l.b16 %v2702
        %v2742 = vunpack.c.l.b16 %v2703
        %v2743 = vunpack.c.l.b16 %v2704
        %v2744 = vunpack.c.l.b16 %v2705
        %v2745 = vunpack.c.l.b16 %v2706
        %v2746 = vunpack.c.l.b16 %v2707
        %v2747 = vunpack.c.l.b16 %v2708
        %v2748 = vpack.c.b16 %v2733, %v2732
        %v2749 = vpack.c.b16 %v2735, %v2734
        %v2750 = vpack.c.b16 %v2737, %v2736
        %v2751 = vpack.c.b16 %v2739, %v2738
        %v2752 = vpack.c.b16 %v2741, %v2740
        %v2753 = vpack.c.b16 %v2743, %v2742
        %v2754 = vpack.c.b16 %v2745, %v2744
        %v2755 = vpack.c.b16 %v2747, %v2746
        %2764 = vmatprep.subr.bf16.mxu0 0
        %2765 = vmatpush1.bf16.msra.mxu0 %v2755
        %2766 = vmatprep.subr.bf16.mxu0 0
        %2767 = vmatpush1.bf16.msra.mxu0 %v2754
        %2768 = vmatprep.subr.bf16.mxu0 0
        %2769 = vmatpush1.bf16.msra.mxu0 %v2753
        %2770 = vmatprep.subr.bf16.mxu0 0
        %2771 = vmatpush1.bf16.msra.mxu0 %v2752
        %2772 = vmatprep.subr.bf16.mxu0 0
        %2773 = vmatpush1.bf16.msra.mxu0 %v2751
        %2774 = vmatprep.subr.bf16.mxu0 0
        %2775 = vmatpush1.bf16.msra.mxu0 %v2750
        %2776 = vmatprep.subr.bf16.mxu0 0
        %2777 = vmatpush1.bf16.msra.mxu0 %v2749
        %2778 = vmatprep.subr.bf16.mxu0 0
        %2779 = vmatpush1.bf16.msra.mxu0 %v2748
        %2780 = vmatprep.subr.bf16.mxu0 0
        %2781 = vmatpush2.bf16.msra.mxu0 0
        %2782 = vmatprep.subr.bf16.mxu0 0
        %2783 = vmatpush2.bf16.msra.mxu0 0
        %2784 = vmatprep.subr.bf16.mxu0 0
        %2785 = vmatpush2.bf16.msra.mxu0 0
        %2786 = vmatprep.subr.bf16.mxu0 0
        %2787 = vmatpush2.bf16.msra.mxu0 0
        %2788 = vmatprep.subr.bf16.mxu0 0
        %2789 = vmatpush2.bf16.msra.mxu0 0
        %2790 = vmatprep.subr.bf16.mxu0 0
        %2791 = vmatpush2.bf16.msra.mxu0 0
        %2792 = vmatprep.subr.bf16.mxu0 0
        %2793 = vmatpush2.bf16.msra.mxu0 0
        %2794 = vmatprep.subr.bf16.mxu0 0
        %2795 = vmatpush2.bf16.msra.mxu0 0
        %2796 = vmatprep.mubr.bf16.mxu0 0
        %2797 = vmatmul.mubr.bf16.gmra.mxu0 %v2685
        %v2798 = vpop.f32.mrf.mxu0
        %v2799 = vadd.f32 %v2714, %v2798
        %v2800 = vpop.f32.mrf.mxu0
        %v2801 = vpop.f32.mrf.mxu0
        %v2802 = vadd.f32 %v2714, %v2801
        %v2803 = vpop.f32.mrf.mxu0
        %2804 = vmatprep.mubr.bf16.mxu0 0
        %2805 = vmatmul.mubr.bf16.gmra.mxu0 %v2686
        %v2806 = vpop.f32.mrf.mxu0
        %v2807 = vadd.f32 %v2714, %v2806
        %v2808 = vpop.f32.mrf.mxu0
        %v2809 = vpop.f32.mrf.mxu0
        %v2810 = vadd.f32 %v2714, %v2809
        %v2811 = vpop.f32.mrf.mxu0
        %2812 = vmatprep.mubr.bf16.mxu0 0
        %2813 = vmatmul.mubr.bf16.gmra.mxu0 %v2687
        %v2814 = vpop.f32.mrf.mxu0
        %v2815 = vadd.f32 %v2714, %v2814
        %v2816 = vpop.f32.mrf.mxu0
        %v2817 = vpop.f32.mrf.mxu0
        %v2818 = vadd.f32 %v2714, %v2817
        %v2819 = vpop.f32.mrf.mxu0
        %2820 = vmatprep.mubr.bf16.mxu0 0
        %2821 = vmatmul.mubr.bf16.gmra.mxu0 %v2688
        %v2822 = vpop.f32.mrf.mxu0
        %v2823 = vadd.f32 %v2714, %v2822
        %v2824 = vpop.f32.mrf.mxu0
        %v2825 = vpop.f32.mrf.mxu0
        %v2826 = vadd.f32 %v2714, %v2825
        %v2827 = vpop.f32.mrf.mxu0
        %2828 = vmatprep.mubr.bf16.mxu0 0
        %2829 = vmatmul.mubr.bf16.gmra.mxu0 %v2689
        %v2830 = vpop.f32.mrf.mxu0
        %v2831 = vadd.f32 %v2714, %v2830
        %v2832 = vpop.f32.mrf.mxu0
        %v2833 = vpop.f32.mrf.mxu0
        %v2834 = vadd.f32 %v2714, %v2833
        %v2835 = vpop.f32.mrf.mxu0
        %2836 = vmatprep.mubr.bf16.mxu0 0
        %2837 = vmatmul.mubr.bf16.gmra.mxu0 %v2690
        %v2838 = vpop.f32.mrf.mxu0
        %v2839 = vadd.f32 %v2714, %v2838
        %v2840 = vpop.f32.mrf.mxu0
        %v2841 = vpop.f32.mrf.mxu0
        %v2842 = vadd.f32 %v2714, %v2841
        %v2843 = vpop.f32.mrf.mxu0
        %2844 = vmatprep.mubr.bf16.mxu0 0
        %2845 = vmatmul.mubr.bf16.gmra.mxu0 %v2691
        %v2846 = vpop.f32.mrf.mxu0
        %v2847 = vadd.f32 %v2714, %v2846
        %v2848 = vpop.f32.mrf.mxu0
        %v2849 = vpop.f32.mrf.mxu0
        %v2850 = vadd.f32 %v2714, %v2849
        %v2851 = vpop.f32.mrf.mxu0
        %2852 = vmatprep.mubr.bf16.mxu0 0
        %2853 = vmatmul.mubr.bf16.gmra.mxu0 %v2692
        %v2854 = vpop.f32.mrf.mxu0
        %v2855 = vadd.f32 %v2714, %v2854
        %v2856 = vpop.f32.mrf.mxu0
        %v2857 = vpop.f32.mrf.mxu0
        %v2858 = vadd.f32 %v2714, %v2857
        %v2859 = vpop.f32.mrf.mxu0
        %2860 = vdwg.mxu0
        %v2861 = vmax.f32 %v2799, 0.0
        %v2862 = vmax.f32 %v2802, 0.0
        %v2863 = vmax.f32 %v2807, 0.0
        %v2864 = vmax.f32 %v2810, 0.0
        %v2865 = vmax.f32 %v2815, 0.0
        %v2866 = vmax.f32 %v2818, 0.0
        %v2867 = vmax.f32 %v2823, 0.0
        %v2868 = vmax.f32 %v2826, 0.0
        %v2869 = vmax.f32 %v2831, 0.0
        %v2870 = vmax.f32 %v2834, 0.0
        %v2871 = vmax.f32 %v2839, 0.0
        %v2872 = vmax.f32 %v2842, 0.0
        %v2873 = vmax.f32 %v2847, 0.0
        %v2874 = vmax.f32 %v2850, 0.0
        %v2875 = vmax.f32 %v2855, 0.0
        %v2876 = vmax.f32 %v2858, 0.0
        %v2877 = vpack.c.bf16 %v2862, %v2861
        %v2878 = vpack.c.bf16 %v2864, %v2863
        %v2879 = vpack.c.bf16 %v2866, %v2865
        %v2880 = vpack.c.bf16 %v2868, %v2867
        %v2881 = vpack.c.bf16 %v2870, %v2869
        %v2882 = vpack.c.bf16 %v2872, %v2871
        %v2883 = vpack.c.bf16 %v2874, %v2873
        %v2884 = vpack.c.bf16 %v2876, %v2875
        %v2885 = vld [vmem:[%s13] sm:$0xf]
        %v2886 = vld [vmem:[%s13 + $0x4] sm:$0xf]
        %v2887 = vld [vmem:[%s13 + $0x8] sm:$0xf]
        %v2888 = vld [vmem:[%s13 + $0xc] sm:$0xf]
        %v2889 = vld [vmem:[%s13 + $0x10] sm:$0xf]
        %v2890 = vld [vmem:[%s13 + $0x14] sm:$0xf]
        %v2891 = vld [vmem:[%s13 + $0x18] sm:$0xf]
        %v2892 = vld [vmem:[%s13 + $0x1c] sm:$0xf]
        %v2893 = vld [vmem:[%s13 + $0x20] sm:$0xf]
        %v2894 = vld [vmem:[%s13 + $0x24] sm:$0xf]
        %v2895 = vld [vmem:[%s13 + $0x28] sm:$0xf]
        %v2896 = vld [vmem:[%s13 + $0x2c] sm:$0xf]
        %v2897 = vld [vmem:[%s13 + $0x30] sm:$0xf]
        %v2898 = vld [vmem:[%s13 + $0x34] sm:$0xf]
        %v2899 = vld [vmem:[%s13 + $0x38] sm:$0xf]
        %v2900 = vld [vmem:[%s13 + $0x3c] sm:$0xf]
        %v2901 = vld [vmem:[%s14] sm:$0x1]
        %v2903 = vlaneseq
        %v2904 = vshrl.u32 %v2903, 7
        %v2905 = vsub.s32 0, %v2904
        %v2906 = vrot.slane %v2901, %v2905
        %v2924 = vunpack.c.l.b16 %v2885
        %v2925 = vunpack.c.l.b16 %v2886
        %v2926 = vunpack.c.l.b16 %v2887
        %v2927 = vunpack.c.l.b16 %v2888
        %v2928 = vunpack.c.l.b16 %v2889
        %v2929 = vunpack.c.l.b16 %v2890
        %v2930 = vunpack.c.l.b16 %v2891
        %v2931 = vunpack.c.l.b16 %v2892
        %v2932 = vunpack.c.l.b16 %v2893
        %v2933 = vunpack.c.l.b16 %v2894
        %v2934 = vunpack.c.l.b16 %v2895
        %v2935 = vunpack.c.l.b16 %v2896
        %v2936 = vunpack.c.l.b16 %v2897
        %v2937 = vunpack.c.l.b16 %v2898
        %v2938 = vunpack.c.l.b16 %v2899
        %v2939 = vunpack.c.l.b16 %v2900
        %v2940 = vpack.c.b16 %v2925, %v2924
        %v2941 = vpack.c.b16 %v2927, %v2926
        %v2942 = vpack.c.b16 %v2929, %v2928
        %v2943 = vpack.c.b16 %v2931, %v2930
        %v2944 = vpack.c.b16 %v2933, %v2932
        %v2945 = vpack.c.b16 %v2935, %v2934
        %v2946 = vpack.c.b16 %v2937, %v2936
        %v2947 = vpack.c.b16 %v2939, %v2938
        %2956 = vmatprep.subr.bf16.mxu0 0
        %2957 = vmatpush1.bf16.msra.mxu0 %v2947
        %2958 = vmatprep.subr.bf16.mxu0 0
        %2959 = vmatpush1.bf16.msra.mxu0 %v2946
        %2960 = vmatprep.subr.bf16.mxu0 0
        %2961 = vmatpush1.bf16.msra.mxu0 %v2945
        %2962 = vmatprep.subr.bf16.mxu0 0
        %2963 = vmatpush1.bf16.msra.mxu0 %v2944
        %2964 = vmatprep.subr.bf16.mxu0 0
        %2965 = vmatpush1.bf16.msra.mxu0 %v2943
        %2966 = vmatprep.subr.bf16.mxu0 0
        %2967 = vmatpush1.bf16.msra.mxu0 %v2942
        %2968 = vmatprep.subr.bf16.mxu0 0
        %2969 = vmatpush1.bf16.msra.mxu0 %v2941
        %2970 = vmatprep.subr.bf16.mxu0 0
        %2971 = vmatpush1.bf16.msra.mxu0 %v2940
        %2972 = vmatprep.subr.bf16.mxu0 0
        %2973 = vmatpush2.bf16.msra.mxu0 0
        %2974 = vmatprep.subr.bf16.mxu0 0
        %2975 = vmatpush2.bf16.msra.mxu0 0
        %2976 = vmatprep.subr.bf16.mxu0 0
        %2977 = vmatpush2.bf16.msra.mxu0 0
        %2978 = vmatprep.subr.bf16.mxu0 0
        %2979 = vmatpush2.bf16.msra.mxu0 0
        %2980 = vmatprep.subr.bf16.mxu0 0
        %2981 = vmatpush2.bf16.msra.mxu0 0
        %2982 = vmatprep.subr.bf16.mxu0 0
        %2983 = vmatpush2.bf16.msra.mxu0 0
        %2984 = vmatprep.subr.bf16.mxu0 0
        %2985 = vmatpush2.bf16.msra.mxu0 0
        %2986 = vmatprep.subr.bf16.mxu0 0
        %2987 = vmatpush2.bf16.msra.mxu0 0
        %2988 = vmatprep.mubr.bf16.mxu0 0
        %2989 = vmatmul.mubr.bf16.gmra.mxu0 %v2877
        %v2990 = vpop.f32.mrf.mxu0
        %v2991 = vadd.f32 %v2906, %v2990
        %v2992 = vpop.f32.mrf.mxu0
        %v2993 = vpop.f32.mrf.mxu0
        %v2994 = vadd.f32 %v2906, %v2993
        %v2995 = vpop.f32.mrf.mxu0
        %2996 = vmatprep.mubr.bf16.mxu0 0
        %2997 = vmatmul.mubr.bf16.gmra.mxu0 %v2878
        %v2998 = vpop.f32.mrf.mxu0
        %v2999 = vadd.f32 %v2906, %v2998
        %v3000 = vpop.f32.mrf.mxu0
        %v3001 = vpop.f32.mrf.mxu0
        %v3002 = vadd.f32 %v2906, %v3001
        %v3003 = vpop.f32.mrf.mxu0
        %3004 = vmatprep.mubr.bf16.mxu0 0
        %3005 = vmatmul.mubr.bf16.gmra.mxu0 %v2879
        %v3006 = vpop.f32.mrf.mxu0
        %v3007 = vadd.f32 %v2906, %v3006
        %v3008 = vpop.f32.mrf.mxu0
        %v3009 = vpop.f32.mrf.mxu0
        %v3010 = vadd.f32 %v2906, %v3009
        %v3011 = vpop.f32.mrf.mxu0
        %3012 = vmatprep.mubr.bf16.mxu0 0
        %3013 = vmatmul.mubr.bf16.gmra.mxu0 %v2880
        %v3014 = vpop.f32.mrf.mxu0
        %v3015 = vadd.f32 %v2906, %v3014
        %v3016 = vpop.f32.mrf.mxu0
        %v3017 = vpop.f32.mrf.mxu0
        %v3018 = vadd.f32 %v2906, %v3017
        %v3019 = vpop.f32.mrf.mxu0
        %3020 = vmatprep.mubr.bf16.mxu0 0
        %3021 = vmatmul.mubr.bf16.gmra.mxu0 %v2881
        %v3022 = vpop.f32.mrf.mxu0
        %v3023 = vadd.f32 %v2906, %v3022
        %v3024 = vpop.f32.mrf.mxu0
        %v3025 = vpop.f32.mrf.mxu0
        %v3026 = vadd.f32 %v2906, %v3025
        %v3027 = vpop.f32.mrf.mxu0
        %3028 = vmatprep.mubr.bf16.mxu0 0
        %3029 = vmatmul.mubr.bf16.gmra.mxu0 %v2882
        %v3030 = vpop.f32.mrf.mxu0
        %v3031 = vadd.f32 %v2906, %v3030
        %v3032 = vpop.f32.mrf.mxu0
        %v3033 = vpop.f32.mrf.mxu0
        %v3034 = vadd.f32 %v2906, %v3033
        %v3035 = vpop.f32.mrf.mxu0
        %3036 = vmatprep.mubr.bf16.mxu0 0
        %3037 = vmatmul.mubr.bf16.gmra.mxu0 %v2883
        %v3038 = vpop.f32.mrf.mxu0
        %v3039 = vadd.f32 %v2906, %v3038
        %v3040 = vpop.f32.mrf.mxu0
        %v3041 = vpop.f32.mrf.mxu0
        %v3042 = vadd.f32 %v2906, %v3041
        %v3043 = vpop.f32.mrf.mxu0
        %3044 = vmatprep.mubr.bf16.mxu0 0
        %3045 = vmatmul.mubr.bf16.gmra.mxu0 %v2884
        %v3046 = vpop.f32.mrf.mxu0
        %v3047 = vadd.f32 %v2906, %v3046
        %v3048 = vpop.f32.mrf.mxu0
        %v3049 = vpop.f32.mrf.mxu0
        %v3050 = vadd.f32 %v2906, %v3049
        %v3051 = vpop.f32.mrf.mxu0
        %3052 = vdwg.mxu0
        %v3053 = vmax.f32 %v2991, 0.0
        %v3054 = vmax.f32 %v2994, 0.0
        %v3055 = vmax.f32 %v2999, 0.0
        %v3056 = vmax.f32 %v3002, 0.0
        %v3057 = vmax.f32 %v3007, 0.0
        %v3058 = vmax.f32 %v3010, 0.0
        %v3059 = vmax.f32 %v3015, 0.0
        %v3060 = vmax.f32 %v3018, 0.0
        %v3061 = vmax.f32 %v3023, 0.0
        %v3062 = vmax.f32 %v3026, 0.0
        %v3063 = vmax.f32 %v3031, 0.0
        %v3064 = vmax.f32 %v3034, 0.0
        %v3065 = vmax.f32 %v3039, 0.0
        %v3066 = vmax.f32 %v3042, 0.0
        %v3067 = vmax.f32 %v3047, 0.0
        %v3068 = vmax.f32 %v3050, 0.0
        %v3069 = vpack.c.bf16 %v3054, %v3053
        %v3070 = vpack.c.bf16 %v3056, %v3055
        %v3071 = vpack.c.bf16 %v3058, %v3057
        %v3072 = vpack.c.bf16 %v3060, %v3059
        %v3073 = vpack.c.bf16 %v3062, %v3061
        %v3074 = vpack.c.bf16 %v3064, %v3063
        %v3075 = vpack.c.bf16 %v3066, %v3065
        %v3076 = vpack.c.bf16 %v3068, %v3067
        %v3077 = vld [vmem:[%s15] sm:$0xff]
        %v3078 = vld [vmem:[%s15 + $0x8] sm:$0xff]
        %v3079 = vld [vmem:[%s15 + $0x10] sm:$0xff]
        %v3080 = vld [vmem:[%s15 + $0x18] sm:$0xf]
        %v3081 = vld [vmem:[%s15 + $0x1c] sm:$0xff]
        %v3082 = vld [vmem:[%s15 + $0x24] sm:$0xff]
        %v3083 = vld [vmem:[%s15 + $0x2c] sm:$0xff]
        %v3084 = vld [vmem:[%s15 + $0x34] sm:$0xf]
        %v3085 = vld [vmem:[%s15 + $0x38] sm:$0xff]
        %v3086 = vld [vmem:[%s15 + $0x40] sm:$0xff]
        %v3087 = vld [vmem:[%s15 + $0x48] sm:$0xff]
        %v3088 = vld [vmem:[%s15 + $0x50] sm:$0xf]
        %v3089 = vld [vmem:[%s15 + $0x54] sm:$0xff]
        %v3090 = vld [vmem:[%s15 + $0x5c] sm:$0xff]
        %v3091 = vld [vmem:[%s15 + $0x64] sm:$0xff]
        %v3092 = vld [vmem:[%s15 + $0x6c] sm:$0xf]
        %v3093 = vld [vmem:[%s15 + $0x70] sm:$0xff]
        %v3094 = vld [vmem:[%s15 + $0x78] sm:$0xff]
        %v3095 = vld [vmem:[%s15 + $0x80] sm:$0xff]
        %v3096 = vld [vmem:[%s15 + $0x88] sm:$0xf]
        %v3097 = vld [vmem:[%s15 + $0x8c] sm:$0xff]
        %v3098 = vld [vmem:[%s15 + $0x94] sm:$0xff]
        %v3099 = vld [vmem:[%s15 + $0x9c] sm:$0xff]
        %v3100 = vld [vmem:[%s15 + $0xa4] sm:$0xf]
        %v3101 = vld [vmem:[%s15 + $0xa8] sm:$0xff]
        %v3102 = vld [vmem:[%s15 + $0xb0] sm:$0xff]
        %v3103 = vld [vmem:[%s15 + $0xb8] sm:$0xff]
        %v3104 = vld [vmem:[%s15 + $0xc0] sm:$0xf]
        %v3105 = vld [vmem:[%s15 + $0xc4] sm:$0xff]
        %v3106 = vld [vmem:[%s15 + $0xcc] sm:$0xff]
        %v3107 = vld [vmem:[%s15 + $0xd4] sm:$0xff]
        %v3108 = vld [vmem:[%s15 + $0xdc] sm:$0xf]
        %v3109 = vld [vmem:[%s15 + $0xe0] sm:$0xff]
        %v3110 = vld [vmem:[%s15 + $0xe8] sm:$0xff]
        %v3111 = vld [vmem:[%s15 + $0xf0] sm:$0xff]
        %v3112 = vld [vmem:[%s15 + $0xf8] sm:$0xf]
        %v3113 = vld [vmem:[%s15 + $0xfc] sm:$0xff]
        %v3114 = vld [vmem:[%s15 + $0x104] sm:$0xff]
        %v3115 = vld [vmem:[%s15 + $0x10c] sm:$0xff]
        %v3116 = vld [vmem:[%s15 + $0x114] sm:$0xf]
        %v3117 = vld [vmem:[%s15 + $0x118] sm:$0xff]
        %v3118 = vld [vmem:[%s15 + $0x120] sm:$0xff]
        %v3119 = vld [vmem:[%s15 + $0x128] sm:$0xff]
        %v3120 = vld [vmem:[%s15 + $0x130] sm:$0xf]
        %v3121 = vld [vmem:[%s15 + $0x134] sm:$0xff]
        %v3122 = vld [vmem:[%s15 + $0x13c] sm:$0xff]
        %v3123 = vld [vmem:[%s15 + $0x144] sm:$0xff]
        %v3124 = vld [vmem:[%s15 + $0x14c] sm:$0xf]
        %v3125 = vld [vmem:[%s15 + $0x150] sm:$0xff]
        %v3126 = vld [vmem:[%s15 + $0x158] sm:$0xff]
        %v3127 = vld [vmem:[%s15 + $0x160] sm:$0xff]
        %v3128 = vld [vmem:[%s15 + $0x168] sm:$0xf]
        %v3129 = vld [vmem:[%s15 + $0x16c] sm:$0xff]
        %v3130 = vld [vmem:[%s15 + $0x174] sm:$0xff]
        %v3131 = vld [vmem:[%s15 + $0x17c] sm:$0xff]
        %v3132 = vld [vmem:[%s15 + $0x184] sm:$0xf]
        %v3133 = vld [vmem:[%s15 + $0x188] sm:$0xff]
        %v3134 = vld [vmem:[%s15 + $0x190] sm:$0xff]
        %v3135 = vld [vmem:[%s15 + $0x198] sm:$0xff]
        %v3136 = vld [vmem:[%s15 + $0x1a0] sm:$0xf]
        %v3137 = vld [vmem:[%s15 + $0x1a4] sm:$0xff]
        %v3138 = vld [vmem:[%s15 + $0x1ac] sm:$0xff]
        %v3139 = vld [vmem:[%s15 + $0x1b4] sm:$0xff]
        %v3140 = vld [vmem:[%s15 + $0x1bc] sm:$0xf]
        %v3141 = vld [vmem:[%s16] sm:$0x7f]
        %v3143 = vlaneseq
        %v3144 = vshrl.u32 %v3143, 7
        %v3145 = vsub.s32 0, %v3144
        %v3146 = vrot.slane %v3141, %v3145
        %v3147 = vlaneseq
        %v3148 = vshrl.u32 %v3147, 7
        %v3149 = vsub.s32 1, %v3148
        %v3150 = vrot.slane %v3141, %v3149
        %v3151 = vlaneseq
        %v3152 = vshrl.u32 %v3151, 7
        %v3153 = vsub.s32 2, %v3152
        %v3154 = vrot.slane %v3141, %v3153
        %v3155 = vlaneseq
        %v3156 = vshrl.u32 %v3155, 7
        %v3157 = vsub.s32 3, %v3156
        %v3158 = vrot.slane %v3141, %v3157
        %v3159 = vlaneseq
        %v3160 = vshrl.u32 %v3159, 7
        %v3161 = vsub.s32 4, %v3160
        %v3162 = vrot.slane %v3141, %v3161
        %v3163 = vlaneseq
        %v3164 = vshrl.u32 %v3163, 7
        %v3165 = vsub.s32 5, %v3164
        %v3166 = vrot.slane %v3141, %v3165
        %v3167 = vlaneseq
        %v3168 = vshrl.u32 %v3167, 7
        %v3169 = vsub.s32 6, %v3168
        %v3170 = vrot.slane %v3141, %v3169
        %v3242 = vunpack.c.l.b16 %v3077
        %v3243 = vunpack.c.h.b16 %v3077
        %v3244 = vunpack.c.l.b16 %v3078
        %v3245 = vunpack.c.h.b16 %v3078
        %v3246 = vunpack.c.l.b16 %v3079
        %v3247 = vunpack.c.h.b16 %v3079
        %v3248 = vunpack.c.l.b16 %v3080
        %v3249 = vunpack.c.l.b16 %v3081
        %v3250 = vunpack.c.h.b16 %v3081
        %v3251 = vunpack.c.l.b16 %v3082
        %v3252 = vunpack.c.h.b16 %v3082
        %v3253 = vunpack.c.l.b16 %v3083
        %v3254 = vunpack.c.h.b16 %v3083
        %v3255 = vunpack.c.l.b16 %v3084
        %v3256 = vunpack.c.l.b16 %v3085
        %v3257 = vunpack.c.h.b16 %v3085
        %v3258 = vunpack.c.l.b16 %v3086
        %v3259 = vunpack.c.h.b16 %v3086
        %v3260 = vunpack.c.l.b16 %v3087
        %v3261 = vunpack.c.h.b16 %v3087
        %v3262 = vunpack.c.l.b16 %v3088
        %v3263 = vunpack.c.l.b16 %v3089
        %v3264 = vunpack.c.h.b16 %v3089
        %v3265 = vunpack.c.l.b16 %v3090
        %v3266 = vunpack.c.h.b16 %v3090
        %v3267 = vunpack.c.l.b16 %v3091
        %v3268 = vunpack.c.h.b16 %v3091
        %v3269 = vunpack.c.l.b16 %v3092
        %v3270 = vunpack.c.l.b16 %v3093
        %v3271 = vunpack.c.h.b16 %v3093
        %v3272 = vunpack.c.l.b16 %v3094
        %v3273 = vunpack.c.h.b16 %v3094
        %v3274 = vunpack.c.l.b16 %v3095
        %v3275 = vunpack.c.h.b16 %v3095
        %v3276 = vunpack.c.l.b16 %v3096
        %v3277 = vunpack.c.l.b16 %v3097
        %v3278 = vunpack.c.h.b16 %v3097
        %v3279 = vunpack.c.l.b16 %v3098
        %v3280 = vunpack.c.h.b16 %v3098
        %v3281 = vunpack.c.l.b16 %v3099
        %v3282 = vunpack.c.h.b16 %v3099
        %v3283 = vunpack.c.l.b16 %v3100
        %v3284 = vunpack.c.l.b16 %v3101
        %v3285 = vunpack.c.h.b16 %v3101
        %v3286 = vunpack.c.l.b16 %v3102
        %v3287 = vunpack.c.h.b16 %v3102
        %v3288 = vunpack.c.l.b16 %v3103
        %v3289 = vunpack.c.h.b16 %v3103
        %v3290 = vunpack.c.l.b16 %v3104
        %v3291 = vunpack.c.l.b16 %v3105
        %v3292 = vunpack.c.h.b16 %v3105
        %v3293 = vunpack.c.l.b16 %v3106
        %v3294 = vunpack.c.h.b16 %v3106
        %v3295 = vunpack.c.l.b16 %v3107
        %v3296 = vunpack.c.h.b16 %v3107
        %v3297 = vunpack.c.l.b16 %v3108
        %v3298 = vunpack.c.l.b16 %v3109
        %v3299 = vunpack.c.h.b16 %v3109
        %v3300 = vunpack.c.l.b16 %v3110
        %v3301 = vunpack.c.h.b16 %v3110
        %v3302 = vunpack.c.l.b16 %v3111
        %v3303 = vunpack.c.h.b16 %v3111
        %v3304 = vunpack.c.l.b16 %v3112
        %v3305 = vunpack.c.l.b16 %v3113
        %v3306 = vunpack.c.h.b16 %v3113
        %v3307 = vunpack.c.l.b16 %v3114
        %v3308 = vunpack.c.h.b16 %v3114
        %v3309 = vunpack.c.l.b16 %v3115
        %v3310 = vunpack.c.h.b16 %v3115
        %v3311 = vunpack.c.l.b16 %v3116
        %v3312 = vunpack.c.l.b16 %v3117
        %v3313 = vunpack.c.h.b16 %v3117
        %v3314 = vunpack.c.l.b16 %v3118
        %v3315 = vunpack.c.h.b16 %v3118
        %v3316 = vunpack.c.l.b16 %v3119
        %v3317 = vunpack.c.h.b16 %v3119
        %v3318 = vunpack.c.l.b16 %v3120
        %v3319 = vunpack.c.l.b16 %v3121
        %v3320 = vunpack.c.h.b16 %v3121
        %v3321 = vunpack.c.l.b16 %v3122
        %v3322 = vunpack.c.h.b16 %v3122
        %v3323 = vunpack.c.l.b16 %v3123
        %v3324 = vunpack.c.h.b16 %v3123
        %v3325 = vunpack.c.l.b16 %v3124
        %v3326 = vunpack.c.l.b16 %v3125
        %v3327 = vunpack.c.h.b16 %v3125
        %v3328 = vunpack.c.l.b16 %v3126
        %v3329 = vunpack.c.h.b16 %v3126
        %v3330 = vunpack.c.l.b16 %v3127
        %v3331 = vunpack.c.h.b16 %v3127
        %v3332 = vunpack.c.l.b16 %v3128
        %v3333 = vunpack.c.l.b16 %v3129
        %v3334 = vunpack.c.h.b16 %v3129
        %v3335 = vunpack.c.l.b16 %v3130
        %v3336 = vunpack.c.h.b16 %v3130
        %v3337 = vunpack.c.l.b16 %v3131
        %v3338 = vunpack.c.h.b16 %v3131
        %v3339 = vunpack.c.l.b16 %v3132
        %v3340 = vunpack.c.l.b16 %v3133
        %v3341 = vunpack.c.h.b16 %v3133
        %v3342 = vunpack.c.l.b16 %v3134
        %v3343 = vunpack.c.h.b16 %v3134
        %v3344 = vunpack.c.l.b16 %v3135
        %v3345 = vunpack.c.h.b16 %v3135
        %v3346 = vunpack.c.l.b16 %v3136
        %v3347 = vunpack.c.l.b16 %v3137
        %v3348 = vunpack.c.h.b16 %v3137
        %v3349 = vunpack.c.l.b16 %v3138
        %v3350 = vunpack.c.h.b16 %v3138
        %v3351 = vunpack.c.l.b16 %v3139
        %v3352 = vunpack.c.h.b16 %v3139
        %v3353 = vunpack.c.l.b16 %v3140
        %v3354 = vpack.c.b16 %v3249, %v3242
        %v3355 = vpack.c.b16 %v3250, %v3243
        %v3356 = vpack.c.b16 %v3251, %v3244
        %v3357 = vpack.c.b16 %v3252, %v3245
        %v3358 = vpack.c.b16 %v3253, %v3246
        %v3359 = vpack.c.b16 %v3254, %v3247
        %v3360 = vpack.c.b16 %v3255, %v3248
        %v3361 = vpack.c.b16 %v3263, %v3256
        %v3362 = vpack.c.b16 %v3264, %v3257
        %v3363 = vpack.c.b16 %v3265, %v3258
        %v3364 = vpack.c.b16 %v3266, %v3259
        %v3365 = vpack.c.b16 %v3267, %v3260
        %v3366 = vpack.c.b16 %v3268, %v3261
        %v3367 = vpack.c.b16 %v3269, %v3262
        %v3368 = vpack.c.b16 %v3277, %v3270
        %v3369 = vpack.c.b16 %v3278, %v3271
        %v3370 = vpack.c.b16 %v3279, %v3272
        %v3371 = vpack.c.b16 %v3280, %v3273
        %v3372 = vpack.c.b16 %v3281, %v3274
        %v3373 = vpack.c.b16 %v3282, %v3275
        %v3374 = vpack.c.b16 %v3283, %v3276
        %v3375 = vpack.c.b16 %v3291, %v3284
        %v3376 = vpack.c.b16 %v3292, %v3285
        %v3377 = vpack.c.b16 %v3293, %v3286
        %v3378 = vpack.c.b16 %v3294, %v3287
        %v3379 = vpack.c.b16 %v3295, %v3288
        %v3380 = vpack.c.b16 %v3296, %v3289
        %v3381 = vpack.c.b16 %v3297, %v3290
        %v3382 = vpack.c.b16 %v3305, %v3298
        %v3383 = vpack.c.b16 %v3306, %v3299
        %v3384 = vpack.c.b16 %v3307, %v3300
        %v3385 = vpack.c.b16 %v3308, %v3301
        %v3386 = vpack.c.b16 %v3309, %v3302
        %v3387 = vpack.c.b16 %v3310, %v3303
        %v3388 = vpack.c.b16 %v3311, %v3304
        %v3389 = vpack.c.b16 %v3319, %v3312
        %v3390 = vpack.c.b16 %v3320, %v3313
        %v3391 = vpack.c.b16 %v3321, %v3314
        %v3392 = vpack.c.b16 %v3322, %v3315
        %v3393 = vpack.c.b16 %v3323, %v3316
        %v3394 = vpack.c.b16 %v3324, %v3317
        %v3395 = vpack.c.b16 %v3325, %v3318
        %v3396 = vpack.c.b16 %v3333, %v3326
        %v3397 = vpack.c.b16 %v3334, %v3327
        %v3398 = vpack.c.b16 %v3335, %v3328
        %v3399 = vpack.c.b16 %v3336, %v3329
        %v3400 = vpack.c.b16 %v3337, %v3330
        %v3401 = vpack.c.b16 %v3338, %v3331
        %v3402 = vpack.c.b16 %v3339, %v3332
        %v3403 = vpack.c.b16 %v3347, %v3340
        %v3404 = vpack.c.b16 %v3348, %v3341
        %v3405 = vpack.c.b16 %v3349, %v3342
        %v3406 = vpack.c.b16 %v3350, %v3343
        %v3407 = vpack.c.b16 %v3351, %v3344
        %v3408 = vpack.c.b16 %v3352, %v3345
        %v3409 = vpack.c.b16 %v3353, %v3346
        %3466 = vmatprep.subr.bf16.mxu0 %v3404
        %3467 = vmatpush1.bf16.msra.mxu0 %v3403
        %3468 = vmatprep.subr.bf16.mxu0 %v3397
        %3469 = vmatpush1.bf16.msra.mxu0 %v3396
        %3470 = vmatprep.subr.bf16.mxu0 %v3390
        %3471 = vmatpush1.bf16.msra.mxu0 %v3389
        %3472 = vmatprep.subr.bf16.mxu0 %v3383
        %3473 = vmatpush1.bf16.msra.mxu0 %v3382
        %3474 = vmatprep.subr.bf16.mxu0 %v3376
        %3475 = vmatpush1.bf16.msra.mxu0 %v3375
        %3476 = vmatprep.subr.bf16.mxu0 %v3369
        %3477 = vmatpush1.bf16.msra.mxu0 %v3368
        %3478 = vmatprep.subr.bf16.mxu0 %v3362
        %3479 = vmatpush1.bf16.msra.mxu0 %v3361
        %3480 = vmatprep.subr.bf16.mxu0 %v3355
        %3481 = vmatpush1.bf16.msra.mxu0 %v3354
        %3482 = vmatprep.subr.bf16.mxu0 0
        %3483 = vmatpush2.bf16.msra.mxu0 0
        %3484 = vmatprep.subr.bf16.mxu0 0
        %3485 = vmatpush2.bf16.msra.mxu0 0
        %3486 = vmatprep.subr.bf16.mxu0 0
        %3487 = vmatpush2.bf16.msra.mxu0 0
        %3488 = vmatprep.subr.bf16.mxu0 0
        %3489 = vmatpush2.bf16.msra.mxu0 0
        %3490 = vmatprep.subr.bf16.mxu0 0
        %3491 = vmatpush2.bf16.msra.mxu0 0
        %3492 = vmatprep.subr.bf16.mxu0 0
        %3493 = vmatpush2.bf16.msra.mxu0 0
        %3494 = vmatprep.subr.bf16.mxu0 0
        %3495 = vmatpush2.bf16.msra.mxu0 0
        %3496 = vmatprep.subr.bf16.mxu0 0
        %3497 = vmatpush2.bf16.msra.mxu0 0
        %3498 = vmatprep.mubr.bf16.mxu0 0
        %3499 = vmatmul.mubr.bf16.gmra.mxu0 %v3069
        %v3500 = vpop.f32.mrf.mxu0
        %v3501 = vadd.f32 %v3146, %v3500
        %v3502 = vpop.f32.mrf.mxu0
        %v3503 = vadd.f32 %v3150, %v3502
        %v3504 = vpop.f32.mrf.mxu0
        %v3505 = vadd.f32 %v3146, %v3504
        %v3506 = vpop.f32.mrf.mxu0
        %v3507 = vadd.f32 %v3150, %v3506
        %3508 = vmatprep.mubr.bf16.mxu0 0
        %3509 = vmatmul.mubr.bf16.gmra.mxu0 %v3070
        %v3510 = vpop.f32.mrf.mxu0
        %v3511 = vadd.f32 %v3146, %v3510
        %v3512 = vpop.f32.mrf.mxu0
        %v3513 = vadd.f32 %v3150, %v3512
        %v3514 = vpop.f32.mrf.mxu0
        %v3515 = vadd.f32 %v3146, %v3514
        %v3516 = vpop.f32.mrf.mxu0
        %v3517 = vadd.f32 %v3150, %v3516
        %3518 = vmatprep.mubr.bf16.mxu0 0
        %3519 = vmatmul.mubr.bf16.gmra.mxu0 %v3071
        %v3520 = vpop.f32.mrf.mxu0
        %v3521 = vadd.f32 %v3146, %v3520
        %v3522 = vpop.f32.mrf.mxu0
        %v3523 = vadd.f32 %v3150, %v3522
        %v3524 = vpop.f32.mrf.mxu0
        %v3525 = vadd.f32 %v3146, %v3524
        %v3526 = vpop.f32.mrf.mxu0
        %v3527 = vadd.f32 %v3150, %v3526
        %3528 = vmatprep.mubr.bf16.mxu0 0
        %3529 = vmatmul.mubr.bf16.gmra.mxu0 %v3072
        %v3530 = vpop.f32.mrf.mxu0
        %v3531 = vadd.f32 %v3146, %v3530
        %v3532 = vpop.f32.mrf.mxu0
        %v3533 = vadd.f32 %v3150, %v3532
        %v3534 = vpop.f32.mrf.mxu0
        %v3535 = vadd.f32 %v3146, %v3534
        %v3536 = vpop.f32.mrf.mxu0
        %v3537 = vadd.f32 %v3150, %v3536
        %3538 = vmatprep.mubr.bf16.mxu0 0
        %3539 = vmatmul.mubr.bf16.gmra.mxu0 %v3073
        %v3540 = vpop.f32.mrf.mxu0
        %v3541 = vadd.f32 %v3146, %v3540
        %v3542 = vpop.f32.mrf.mxu0
        %v3543 = vadd.f32 %v3150, %v3542
        %v3544 = vpop.f32.mrf.mxu0
        %v3545 = vadd.f32 %v3146, %v3544
        %v3546 = vpop.f32.mrf.mxu0
        %v3547 = vadd.f32 %v3150, %v3546
        %3548 = vmatprep.mubr.bf16.mxu0 0
        %3549 = vmatmul.mubr.bf16.gmra.mxu0 %v3074
        %v3550 = vpop.f32.mrf.mxu0
        %v3551 = vadd.f32 %v3146, %v3550
        %v3552 = vpop.f32.mrf.mxu0
        %v3553 = vadd.f32 %v3150, %v3552
        %v3554 = vpop.f32.mrf.mxu0
        %v3555 = vadd.f32 %v3146, %v3554
        %v3556 = vpop.f32.mrf.mxu0
        %v3557 = vadd.f32 %v3150, %v3556
        %3558 = vmatprep.mubr.bf16.mxu0 0
        %3559 = vmatmul.mubr.bf16.gmra.mxu0 %v3075
        %v3560 = vpop.f32.mrf.mxu0
        %v3561 = vadd.f32 %v3146, %v3560
        %v3562 = vpop.f32.mrf.mxu0
        %v3563 = vadd.f32 %v3150, %v3562
        %v3564 = vpop.f32.mrf.mxu0
        %v3565 = vadd.f32 %v3146, %v3564
        %v3566 = vpop.f32.mrf.mxu0
        %v3567 = vadd.f32 %v3150, %v3566
        %3568 = vmatprep.mubr.bf16.mxu0 0
        %3569 = vmatmul.mubr.bf16.gmra.mxu0 %v3076
        %v3570 = vpop.f32.mrf.mxu0
        %v3571 = vadd.f32 %v3146, %v3570
        %v3572 = vpop.f32.mrf.mxu0
        %v3573 = vadd.f32 %v3150, %v3572
        %v3574 = vpop.f32.mrf.mxu0
        %v3575 = vadd.f32 %v3146, %v3574
        %v3576 = vpop.f32.mrf.mxu0
        %v3577 = vadd.f32 %v3150, %v3576
        %3578 = vdwg.mxu0
        %3579 = vmatprep.subr.bf16.mxu0 %v3406
        %3580 = vmatpush1.bf16.msra.mxu0 %v3405
        %3581 = vmatprep.subr.bf16.mxu0 %v3399
        %3582 = vmatpush1.bf16.msra.mxu0 %v3398
        %3583 = vmatprep.subr.bf16.mxu0 %v3392
        %3584 = vmatpush1.bf16.msra.mxu0 %v3391
        %3585 = vmatprep.subr.bf16.mxu0 %v3385
        %3586 = vmatpush1.bf16.msra.mxu0 %v3384
        %3587 = vmatprep.subr.bf16.mxu0 %v3378
        %3588 = vmatpush1.bf16.msra.mxu0 %v3377
        %3589 = vmatprep.subr.bf16.mxu0 %v3371
        %3590 = vmatpush1.bf16.msra.mxu0 %v3370
        %3591 = vmatprep.subr.bf16.mxu0 %v3364
        %3592 = vmatpush1.bf16.msra.mxu0 %v3363
        %3593 = vmatprep.subr.bf16.mxu0 %v3357
        %3594 = vmatpush1.bf16.msra.mxu0 %v3356
        %3595 = vmatprep.subr.bf16.mxu0 0
        %3596 = vmatpush2.bf16.msra.mxu0 0
        %3597 = vmatprep.subr.bf16.mxu0 0
        %3598 = vmatpush2.bf16.msra.mxu0 0
        %3599 = vmatprep.subr.bf16.mxu0 0
        %3600 = vmatpush2.bf16.msra.mxu0 0
        %3601 = vmatprep.subr.bf16.mxu0 0
        %3602 = vmatpush2.bf16.msra.mxu0 0
        %3603 = vmatprep.subr.bf16.mxu0 0
        %3604 = vmatpush2.bf16.msra.mxu0 0
        %3605 = vmatprep.subr.bf16.mxu0 0
        %3606 = vmatpush2.bf16.msra.mxu0 0
        %3607 = vmatprep.subr.bf16.mxu0 0
        %3608 = vmatpush2.bf16.msra.mxu0 0
        %3609 = vmatprep.subr.bf16.mxu0 0
        %3610 = vmatpush2.bf16.msra.mxu0 0
        %3611 = vmatprep.mubr.bf16.mxu0 0
        %3612 = vmatmul.mubr.bf16.gmra.mxu0 %v3069
        %v3613 = vpop.f32.mrf.mxu0
        %v3614 = vadd.f32 %v3154, %v3613
        %v3615 = vpop.f32.mrf.mxu0
        %v3616 = vadd.f32 %v3158, %v3615
        %v3617 = vpop.f32.mrf.mxu0
        %v3618 = vadd.f32 %v3154, %v3617
        %v3619 = vpop.f32.mrf.mxu0
        %v3620 = vadd.f32 %v3158, %v3619
        %3621 = vmatprep.mubr.bf16.mxu0 0
        %3622 = vmatmul.mubr.bf16.gmra.mxu0 %v3070
        %v3623 = vpop.f32.mrf.mxu0
        %v3624 = vadd.f32 %v3154, %v3623
        %v3625 = vpop.f32.mrf.mxu0
        %v3626 = vadd.f32 %v3158, %v3625
        %v3627 = vpop.f32.mrf.mxu0
        %v3628 = vadd.f32 %v3154, %v3627
        %v3629 = vpop.f32.mrf.mxu0
        %v3630 = vadd.f32 %v3158, %v3629
        %3631 = vmatprep.mubr.bf16.mxu0 0
        %3632 = vmatmul.mubr.bf16.gmra.mxu0 %v3071
        %v3633 = vpop.f32.mrf.mxu0
        %v3634 = vadd.f32 %v3154, %v3633
        %v3635 = vpop.f32.mrf.mxu0
        %v3636 = vadd.f32 %v3158, %v3635
        %v3637 = vpop.f32.mrf.mxu0
        %v3638 = vadd.f32 %v3154, %v3637
        %v3639 = vpop.f32.mrf.mxu0
        %v3640 = vadd.f32 %v3158, %v3639
        %3641 = vmatprep.mubr.bf16.mxu0 0
        %3642 = vmatmul.mubr.bf16.gmra.mxu0 %v3072
        %v3643 = vpop.f32.mrf.mxu0
        %v3644 = vadd.f32 %v3154, %v3643
        %v3645 = vpop.f32.mrf.mxu0
        %v3646 = vadd.f32 %v3158, %v3645
        %v3647 = vpop.f32.mrf.mxu0
        %v3648 = vadd.f32 %v3154, %v3647
        %v3649 = vpop.f32.mrf.mxu0
        %v3650 = vadd.f32 %v3158, %v3649
        %3651 = vmatprep.mubr.bf16.mxu0 0
        %3652 = vmatmul.mubr.bf16.gmra.mxu0 %v3073
        %v3653 = vpop.f32.mrf.mxu0
        %v3654 = vadd.f32 %v3154, %v3653
        %v3655 = vpop.f32.mrf.mxu0
        %v3656 = vadd.f32 %v3158, %v3655
        %v3657 = vpop.f32.mrf.mxu0
        %v3658 = vadd.f32 %v3154, %v3657
        %v3659 = vpop.f32.mrf.mxu0
        %v3660 = vadd.f32 %v3158, %v3659
        %3661 = vmatprep.mubr.bf16.mxu0 0
        %3662 = vmatmul.mubr.bf16.gmra.mxu0 %v3074
        %v3663 = vpop.f32.mrf.mxu0
        %v3664 = vadd.f32 %v3154, %v3663
        %v3665 = vpop.f32.mrf.mxu0
        %v3666 = vadd.f32 %v3158, %v3665
        %v3667 = vpop.f32.mrf.mxu0
        %v3668 = vadd.f32 %v3154, %v3667
        %v3669 = vpop.f32.mrf.mxu0
        %v3670 = vadd.f32 %v3158, %v3669
        %3671 = vmatprep.mubr.bf16.mxu0 0
        %3672 = vmatmul.mubr.bf16.gmra.mxu0 %v3075
        %v3673 = vpop.f32.mrf.mxu0
        %v3674 = vadd.f32 %v3154, %v3673
        %v3675 = vpop.f32.mrf.mxu0
        %v3676 = vadd.f32 %v3158, %v3675
        %v3677 = vpop.f32.mrf.mxu0
        %v3678 = vadd.f32 %v3154, %v3677
        %v3679 = vpop.f32.mrf.mxu0
        %v3680 = vadd.f32 %v3158, %v3679
        %3681 = vmatprep.mubr.bf16.mxu0 0
        %3682 = vmatmul.mubr.bf16.gmra.mxu0 %v3076
        %v3683 = vpop.f32.mrf.mxu0
        %v3684 = vadd.f32 %v3154, %v3683
        %v3685 = vpop.f32.mrf.mxu0
        %v3686 = vadd.f32 %v3158, %v3685
        %v3687 = vpop.f32.mrf.mxu0
        %v3688 = vadd.f32 %v3154, %v3687
        %v3689 = vpop.f32.mrf.mxu0
        %v3690 = vadd.f32 %v3158, %v3689
        %3691 = vdwg.mxu0
        %3692 = vmatprep.subr.bf16.mxu0 %v3408
        %3693 = vmatpush1.bf16.msra.mxu0 %v3407
        %3694 = vmatprep.subr.bf16.mxu0 %v3401
        %3695 = vmatpush1.bf16.msra.mxu0 %v3400
        %3696 = vmatprep.subr.bf16.mxu0 %v3394
        %3697 = vmatpush1.bf16.msra.mxu0 %v3393
        %3698 = vmatprep.subr.bf16.mxu0 %v3387
        %3699 = vmatpush1.bf16.msra.mxu0 %v3386
        %3700 = vmatprep.subr.bf16.mxu0 %v3380
        %3701 = vmatpush1.bf16.msra.mxu0 %v3379
        %3702 = vmatprep.subr.bf16.mxu0 %v3373
        %3703 = vmatpush1.bf16.msra.mxu0 %v3372
        %3704 = vmatprep.subr.bf16.mxu0 %v3366
        %3705 = vmatpush1.bf16.msra.mxu0 %v3365
        %3706 = vmatprep.subr.bf16.mxu0 %v3359
        %3707 = vmatpush1.bf16.msra.mxu0 %v3358
        %3708 = vmatprep.subr.bf16.mxu0 0
        %3709 = vmatpush2.bf16.msra.mxu0 0
        %3710 = vmatprep.subr.bf16.mxu0 0
        %3711 = vmatpush2.bf16.msra.mxu0 0
        %3712 = vmatprep.subr.bf16.mxu0 0
        %3713 = vmatpush2.bf16.msra.mxu0 0
        %3714 = vmatprep.subr.bf16.mxu0 0
        %3715 = vmatpush2.bf16.msra.mxu0 0
        %3716 = vmatprep.subr.bf16.mxu0 0
        %3717 = vmatpush2.bf16.msra.mxu0 0
        %3718 = vmatprep.subr.bf16.mxu0 0
        %3719 = vmatpush2.bf16.msra.mxu0 0
        %3720 = vmatprep.subr.bf16.mxu0 0
        %3721 = vmatpush2.bf16.msra.mxu0 0
        %3722 = vmatprep.subr.bf16.mxu0 0
        %3723 = vmatpush2.bf16.msra.mxu0 0
        %3724 = vmatprep.mubr.bf16.mxu0 0
        %3725 = vmatmul.mubr.bf16.gmra.mxu0 %v3069
        %v3726 = vpop.f32.mrf.mxu0
        %v3727 = vadd.f32 %v3162, %v3726
        %v3728 = vpop.f32.mrf.mxu0
        %v3729 = vadd.f32 %v3166, %v3728
        %v3730 = vpop.f32.mrf.mxu0
        %v3731 = vadd.f32 %v3162, %v3730
        %v3732 = vpop.f32.mrf.mxu0
        %v3733 = vadd.f32 %v3166, %v3732
        %3734 = vmatprep.mubr.bf16.mxu0 0
        %3735 = vmatmul.mubr.bf16.gmra.mxu0 %v3070
        %v3736 = vpop.f32.mrf.mxu0
        %v3737 = vadd.f32 %v3162, %v3736
        %v3738 = vpop.f32.mrf.mxu0
        %v3739 = vadd.f32 %v3166, %v3738
        %v3740 = vpop.f32.mrf.mxu0
        %v3741 = vadd.f32 %v3162, %v3740
        %v3742 = vpop.f32.mrf.mxu0
        %v3743 = vadd.f32 %v3166, %v3742
        %3744 = vmatprep.mubr.bf16.mxu0 0
        %3745 = vmatmul.mubr.bf16.gmra.mxu0 %v3071
        %v3746 = vpop.f32.mrf.mxu0
        %v3747 = vadd.f32 %v3162, %v3746
        %v3748 = vpop.f32.mrf.mxu0
        %v3749 = vadd.f32 %v3166, %v3748
        %v3750 = vpop.f32.mrf.mxu0
        %v3751 = vadd.f32 %v3162, %v3750
        %v3752 = vpop.f32.mrf.mxu0
        %v3753 = vadd.f32 %v3166, %v3752
        %3754 = vmatprep.mubr.bf16.mxu0 0
        %3755 = vmatmul.mubr.bf16.gmra.mxu0 %v3072
        %v3756 = vpop.f32.mrf.mxu0
        %v3757 = vadd.f32 %v3162, %v3756
        %v3758 = vpop.f32.mrf.mxu0
        %v3759 = vadd.f32 %v3166, %v3758
        %v3760 = vpop.f32.mrf.mxu0
        %v3761 = vadd.f32 %v3162, %v3760
        %v3762 = vpop.f32.mrf.mxu0
        %v3763 = vadd.f32 %v3166, %v3762
        %3764 = vmatprep.mubr.bf16.mxu0 0
        %3765 = vmatmul.mubr.bf16.gmra.mxu0 %v3073
        %v3766 = vpop.f32.mrf.mxu0
        %v3767 = vadd.f32 %v3162, %v3766
        %v3768 = vpop.f32.mrf.mxu0
        %v3769 = vadd.f32 %v3166, %v3768
        %v3770 = vpop.f32.mrf.mxu0
        %v3771 = vadd.f32 %v3162, %v3770
        %v3772 = vpop.f32.mrf.mxu0
        %v3773 = vadd.f32 %v3166, %v3772
        %3774 = vmatprep.mubr.bf16.mxu0 0
        %3775 = vmatmul.mubr.bf16.gmra.mxu0 %v3074
        %v3776 = vpop.f32.mrf.mxu0
        %v3777 = vadd.f32 %v3162, %v3776
        %v3778 = vpop.f32.mrf.mxu0
        %v3779 = vadd.f32 %v3166, %v3778
        %v3780 = vpop.f32.mrf.mxu0
        %v3781 = vadd.f32 %v3162, %v3780
        %v3782 = vpop.f32.mrf.mxu0
        %v3783 = vadd.f32 %v3166, %v3782
        %3784 = vmatprep.mubr.bf16.mxu0 0
        %3785 = vmatmul.mubr.bf16.gmra.mxu0 %v3075
        %v3786 = vpop.f32.mrf.mxu0
        %v3787 = vadd.f32 %v3162, %v3786
        %v3788 = vpop.f32.mrf.mxu0
        %v3789 = vadd.f32 %v3166, %v3788
        %v3790 = vpop.f32.mrf.mxu0
        %v3791 = vadd.f32 %v3162, %v3790
        %v3792 = vpop.f32.mrf.mxu0
        %v3793 = vadd.f32 %v3166, %v3792
        %3794 = vmatprep.mubr.bf16.mxu0 0
        %3795 = vmatmul.mubr.bf16.gmra.mxu0 %v3076
        %v3796 = vpop.f32.mrf.mxu0
        %v3797 = vadd.f32 %v3162, %v3796
        %v3798 = vpop.f32.mrf.mxu0
        %v3799 = vadd.f32 %v3166, %v3798
        %v3800 = vpop.f32.mrf.mxu0
        %v3801 = vadd.f32 %v3162, %v3800
        %v3802 = vpop.f32.mrf.mxu0
        %v3803 = vadd.f32 %v3166, %v3802
        %3804 = vdwg.mxu0
        %3805 = vmatprep.subr.bf16.mxu0 0
        %3806 = vmatpush1.bf16.msra.mxu0 %v3409
        %3807 = vmatprep.subr.bf16.mxu0 0
        %3808 = vmatpush1.bf16.msra.mxu0 %v3402
        %3809 = vmatprep.subr.bf16.mxu0 0
        %3810 = vmatpush1.bf16.msra.mxu0 %v3395
        %3811 = vmatprep.subr.bf16.mxu0 0
        %3812 = vmatpush1.bf16.msra.mxu0 %v3388
        %3813 = vmatprep.subr.bf16.mxu0 0
        %3814 = vmatpush1.bf16.msra.mxu0 %v3381
        %3815 = vmatprep.subr.bf16.mxu0 0
        %3816 = vmatpush1.bf16.msra.mxu0 %v3374
        %3817 = vmatprep.subr.bf16.mxu0 0
        %3818 = vmatpush1.bf16.msra.mxu0 %v3367
        %3819 = vmatprep.subr.bf16.mxu0 0
        %3820 = vmatpush1.bf16.msra.mxu0 %v3360
        %3821 = vmatprep.subr.bf16.mxu0 0
        %3822 = vmatpush2.bf16.msra.mxu0 0
        %3823 = vmatprep.subr.bf16.mxu0 0
        %3824 = vmatpush2.bf16.msra.mxu0 0
        %3825 = vmatprep.subr.bf16.mxu0 0
        %3826 = vmatpush2.bf16.msra.mxu0 0
        %3827 = vmatprep.subr.bf16.mxu0 0
        %3828 = vmatpush2.bf16.msra.mxu0 0
        %3829 = vmatprep.subr.bf16.mxu0 0
        %3830 = vmatpush2.bf16.msra.mxu0 0
        %3831 = vmatprep.subr.bf16.mxu0 0
        %3832 = vmatpush2.bf16.msra.mxu0 0
        %3833 = vmatprep.subr.bf16.mxu0 0
        %3834 = vmatpush2.bf16.msra.mxu0 0
        %3835 = vmatprep.subr.bf16.mxu0 0
        %3836 = vmatpush2.bf16.msra.mxu0 0
        %3837 = vmatprep.mubr.bf16.mxu0 0
        %3838 = vmatmul.mubr.bf16.gmra.mxu0 %v3069
        %v3839 = vpop.f32.mrf.mxu0
        %v3840 = vadd.f32 %v3170, %v3839
        %v3841 = vpop.f32.mrf.mxu0
        %v3842 = vpop.f32.mrf.mxu0
        %v3843 = vadd.f32 %v3170, %v3842
        %v3844 = vpop.f32.mrf.mxu0
        %3845 = vmatprep.mubr.bf16.mxu0 0
        %3846 = vmatmul.mubr.bf16.gmra.mxu0 %v3070
        %v3847 = vpop.f32.mrf.mxu0
        %v3848 = vadd.f32 %v3170, %v3847
        %v3849 = vpop.f32.mrf.mxu0
        %v3850 = vpop.f32.mrf.mxu0
        %v3851 = vadd.f32 %v3170, %v3850
        %v3852 = vpop.f32.mrf.mxu0
        %3853 = vmatprep.mubr.bf16.mxu0 0
        %3854 = vmatmul.mubr.bf16.gmra.mxu0 %v3071
        %v3855 = vpop.f32.mrf.mxu0
        %v3856 = vadd.f32 %v3170, %v3855
        %v3857 = vpop.f32.mrf.mxu0
        %v3858 = vpop.f32.mrf.mxu0
        %v3859 = vadd.f32 %v3170, %v3858
        %v3860 = vpop.f32.mrf.mxu0
        %3861 = vmatprep.mubr.bf16.mxu0 0
        %3862 = vmatmul.mubr.bf16.gmra.mxu0 %v3072
        %v3863 = vpop.f32.mrf.mxu0
        %v3864 = vadd.f32 %v3170, %v3863
        %v3865 = vpop.f32.mrf.mxu0
        %v3866 = vpop.f32.mrf.mxu0
        %v3867 = vadd.f32 %v3170, %v3866
        %v3868 = vpop.f32.mrf.mxu0
        %3869 = vmatprep.mubr.bf16.mxu0 0
        %3870 = vmatmul.mubr.bf16.gmra.mxu0 %v3073
        %v3871 = vpop.f32.mrf.mxu0
        %v3872 = vadd.f32 %v3170, %v3871
        %v3873 = vpop.f32.mrf.mxu0
        %v3874 = vpop.f32.mrf.mxu0
        %v3875 = vadd.f32 %v3170, %v3874
        %v3876 = vpop.f32.mrf.mxu0
        %3877 = vmatprep.mubr.bf16.mxu0 0
        %3878 = vmatmul.mubr.bf16.gmra.mxu0 %v3074
        %v3879 = vpop.f32.mrf.mxu0
        %v3880 = vadd.f32 %v3170, %v3879
        %v3881 = vpop.f32.mrf.mxu0
        %v3882 = vpop.f32.mrf.mxu0
        %v3883 = vadd.f32 %v3170, %v3882
        %v3884 = vpop.f32.mrf.mxu0
        %3885 = vmatprep.mubr.bf16.mxu0 0
        %3886 = vmatmul.mubr.bf16.gmra.mxu0 %v3075
        %v3887 = vpop.f32.mrf.mxu0
        %v3888 = vadd.f32 %v3170, %v3887
        %v3889 = vpop.f32.mrf.mxu0
        %v3890 = vpop.f32.mrf.mxu0
        %v3891 = vadd.f32 %v3170, %v3890
        %v3892 = vpop.f32.mrf.mxu0
        %3893 = vmatprep.mubr.bf16.mxu0 0
        %3894 = vmatmul.mubr.bf16.gmra.mxu0 %v3076
        %v3895 = vpop.f32.mrf.mxu0
        %v3896 = vadd.f32 %v3170, %v3895
        %v3897 = vpop.f32.mrf.mxu0
        %v3898 = vpop.f32.mrf.mxu0
        %v3899 = vadd.f32 %v3170, %v3898
        %v3900 = vpop.f32.mrf.mxu0
        %3901 = vdwg.mxu0
        %3902 = vst [vmem:[%s559] sm:$0xff] %v3501
        %3903 = vst [vmem:[%s559 + $0x8] sm:$0xff] %v3503
        %3904 = vst [vmem:[%s559 + $0x10] sm:$0xff] %v3614
        %3905 = vst [vmem:[%s559 + $0x18] sm:$0xff] %v3616
        %3906 = vst [vmem:[%s559 + $0x20] sm:$0xff] %v3727
        %3907 = vst [vmem:[%s559 + $0x28] sm:$0xff] %v3729
        %3908 = vst.msk [vmem:[%s559 + $0x30] sm:$0xff] %vm1352, %v3840
        %3909 = vst [vmem:[%s559 + $0x38] sm:$0xff] %v3505
        %3910 = vst [vmem:[%s559 + $0x40] sm:$0xff] %v3507
        %3911 = vst [vmem:[%s559 + $0x48] sm:$0xff] %v3618
        %3912 = vst [vmem:[%s559 + $0x50] sm:$0xff] %v3620
        %3913 = vst [vmem:[%s559 + $0x58] sm:$0xff] %v3731
        %3914 = vst [vmem:[%s559 + $0x60] sm:$0xff] %v3733
        %3915 = vst.msk [vmem:[%s559 + $0x68] sm:$0xff] %vm1352, %v3843
        %3916 = vst [vmem:[%s559 + $0x70] sm:$0xff] %v3511
        %3917 = vst [vmem:[%s559 + $0x78] sm:$0xff] %v3513
        %3918 = vst [vmem:[%s559 + $0x80] sm:$0xff] %v3624
        %3919 = vst [vmem:[%s559 + $0x88] sm:$0xff] %v3626
        %3920 = vst [vmem:[%s559 + $0x90] sm:$0xff] %v3737
        %3921 = vst [vmem:[%s559 + $0x98] sm:$0xff] %v3739
        %3922 = vst.msk [vmem:[%s559 + $0xa0] sm:$0xff] %vm1352, %v3848
        %3923 = vst [vmem:[%s559 + $0xa8] sm:$0xff] %v3515
        %3924 = vst [vmem:[%s559 + $0xb0] sm:$0xff] %v3517
        %3925 = vst [vmem:[%s559 + $0xb8] sm:$0xff] %v3628
        %3926 = vst [vmem:[%s559 + $0xc0] sm:$0xff] %v3630
        %3927 = vst [vmem:[%s559 + $0xc8] sm:$0xff] %v3741
        %3928 = vst [vmem:[%s559 + $0xd0] sm:$0xff] %v3743
        %3929 = vst.msk [vmem:[%s559 + $0xd8] sm:$0xff] %vm1352, %v3851
        %3930 = vst [vmem:[%s559 + $0xe0] sm:$0xff] %v3521
        %3931 = vst [vmem:[%s559 + $0xe8] sm:$0xff] %v3523
        %3932 = vst [vmem:[%s559 + $0xf0] sm:$0xff] %v3634
        %3933 = vst [vmem:[%s559 + $0xf8] sm:$0xff] %v3636
        %3934 = vst [vmem:[%s559 + $0x100] sm:$0xff] %v3747
        %3935 = vst [vmem:[%s559 + $0x108] sm:$0xff] %v3749
        %3936 = vst.msk [vmem:[%s559 + $0x110] sm:$0xff] %vm1352, %v3856
        %3937 = vst [vmem:[%s559 + $0x118] sm:$0xff] %v3525
        %3938 = vst [vmem:[%s559 + $0x120] sm:$0xff] %v3527
        %3939 = vst [vmem:[%s559 + $0x128] sm:$0xff] %v3638
        %3940 = vst [vmem:[%s559 + $0x130] sm:$0xff] %v3640
        %3941 = vst [vmem:[%s559 + $0x138] sm:$0xff] %v3751
        %3942 = vst [vmem:[%s559 + $0x140] sm:$0xff] %v3753
        %3943 = vst.msk [vmem:[%s559 + $0x148] sm:$0xff] %vm1352, %v3859
        %3944 = vst [vmem:[%s559 + $0x150] sm:$0xff] %v3531
        %3945 = vst [vmem:[%s559 + $0x158] sm:$0xff] %v3533
        %3946 = vst [vmem:[%s559 + $0x160] sm:$0xff] %v3644
        %3947 = vst [vmem:[%s559 + $0x168] sm:$0xff] %v3646
        %3948 = vst [vmem:[%s559 + $0x170] sm:$0xff] %v3757
        %3949 = vst [vmem:[%s559 + $0x178] sm:$0xff] %v3759
        %3950 = vst.msk [vmem:[%s559 + $0x180] sm:$0xff] %vm1352, %v3864
        %3951 = vst [vmem:[%s559 + $0x188] sm:$0xff] %v3535
        %3952 = vst [vmem:[%s559 + $0x190] sm:$0xff] %v3537
        %3953 = vst [vmem:[%s559 + $0x198] sm:$0xff] %v3648
        %3954 = vst [vmem:[%s559 + $0x1a0] sm:$0xff] %v3650
        %3955 = vst [vmem:[%s559 + $0x1a8] sm:$0xff] %v3761
        %3956 = vst [vmem:[%s559 + $0x1b0] sm:$0xff] %v3763
        %3957 = vst.msk [vmem:[%s559 + $0x1b8] sm:$0xff] %vm1352, %v3867
        %3958 = vst [vmem:[%s559 + $0x1c0] sm:$0xff] %v3541
        %3959 = vst [vmem:[%s559 + $0x1c8] sm:$0xff] %v3543
        %3960 = vst [vmem:[%s559 + $0x1d0] sm:$0xff] %v3654
        %3961 = vst [vmem:[%s559 + $0x1d8] sm:$0xff] %v3656
        %3962 = vst [vmem:[%s559 + $0x1e0] sm:$0xff] %v3767
        %3963 = vst [vmem:[%s559 + $0x1e8] sm:$0xff] %v3769
        %3964 = vst.msk [vmem:[%s559 + $0x1f0] sm:$0xff] %vm1352, %v3872
        %3965 = vst [vmem:[%s559 + $0x1f8] sm:$0xff] %v3545
        %3966 = vst [vmem:[%s559 + $0x200] sm:$0xff] %v3547
        %3967 = vst [vmem:[%s559 + $0x208] sm:$0xff] %v3658
        %3968 = vst [vmem:[%s559 + $0x210] sm:$0xff] %v3660
        %3969 = vst [vmem:[%s559 + $0x218] sm:$0xff] %v3771
        %3970 = vst [vmem:[%s559 + $0x220] sm:$0xff] %v3773
        %3971 = vst.msk [vmem:[%s559 + $0x228] sm:$0xff] %vm1352, %v3875
        %3972 = vst [vmem:[%s559 + $0x230] sm:$0xff] %v3551
        %3973 = vst [vmem:[%s559 + $0x238] sm:$0xff] %v3553
        %3974 = vst [vmem:[%s559 + $0x240] sm:$0xff] %v3664
        %3975 = vst [vmem:[%s559 + $0x248] sm:$0xff] %v3666
        %3976 = vst [vmem:[%s559 + $0x250] sm:$0xff] %v3777
        %3977 = vst [vmem:[%s559 + $0x258] sm:$0xff] %v3779
        %3978 = vst.msk [vmem:[%s559 + $0x260] sm:$0xff] %vm1352, %v3880
        %3979 = vst [vmem:[%s559 + $0x268] sm:$0xff] %v3555
        %3980 = vst [vmem:[%s559 + $0x270] sm:$0xff] %v3557
        %3981 = vst [vmem:[%s559 + $0x278] sm:$0xff] %v3668
        %3982 = vst [vmem:[%s559 + $0x280] sm:$0xff] %v3670
        %3983 = vst [vmem:[%s559 + $0x288] sm:$0xff] %v3781
        %3984 = vst [vmem:[%s559 + $0x290] sm:$0xff] %v3783
        %3985 = vst.msk [vmem:[%s559 + $0x298] sm:$0xff] %vm1352, %v3883
        %3986 = vst [vmem:[%s559 + $0x2a0] sm:$0xff] %v3561
        %3987 = vst [vmem:[%s559 + $0x2a8] sm:$0xff] %v3563
        %3988 = vst [vmem:[%s559 + $0x2b0] sm:$0xff] %v3674
        %3989 = vst [vmem:[%s559 + $0x2b8] sm:$0xff] %v3676
        %3990 = vst [vmem:[%s559 + $0x2c0] sm:$0xff] %v3787
        %3991 = vst [vmem:[%s559 + $0x2c8] sm:$0xff] %v3789
        %3992 = vst.msk [vmem:[%s559 + $0x2d0] sm:$0xff] %vm1352, %v3888
        %3993 = vst [vmem:[%s559 + $0x2d8] sm:$0xff] %v3565
        %3994 = vst [vmem:[%s559 + $0x2e0] sm:$0xff] %v3567
        %3995 = vst [vmem:[%s559 + $0x2e8] sm:$0xff] %v3678
        %3996 = vst [vmem:[%s559 + $0x2f0] sm:$0xff] %v3680
        %3997 = vst [vmem:[%s559 + $0x2f8] sm:$0xff] %v3791
        %3998 = vst [vmem:[%s559 + $0x300] sm:$0xff] %v3793
        %3999 = vst.msk [vmem:[%s559 + $0x308] sm:$0xff] %vm1352, %v3891
        %4000 = vst [vmem:[%s559 + $0x310] sm:$0xff] %v3571
        %4001 = vst [vmem:[%s559 + $0x318] sm:$0xff] %v3573
        %4002 = vst [vmem:[%s559 + $0x320] sm:$0xff] %v3684
        %4003 = vst [vmem:[%s559 + $0x328] sm:$0xff] %v3686
        %4004 = vst [vmem:[%s559 + $0x330] sm:$0xff] %v3797
        %4005 = vst [vmem:[%s559 + $0x338] sm:$0xff] %v3799
        %4006 = vst.msk [vmem:[%s559 + $0x340] sm:$0xff] %vm1352, %v3896
        %4007 = vst [vmem:[%s559 + $0x348] sm:$0xff] %v3575
        %4008 = vst [vmem:[%s559 + $0x350] sm:$0xff] %v3577
        %4009 = vst [vmem:[%s559 + $0x358] sm:$0xff] %v3688
        %4010 = vst [vmem:[%s559 + $0x360] sm:$0xff] %v3690
        %4011 = vst [vmem:[%s559 + $0x368] sm:$0xff] %v3801
        %4012 = vst [vmem:[%s559 + $0x370] sm:$0xff] %v3803
        %4013 = vst.msk [vmem:[%s559 + $0x378] sm:$0xff] %vm1352, %v3899
        %s4014 = sand.u32 %s401, 1
        %s4015 = scalar_lea.sflag [#allocation3], %s4014
        %s4016 = sand.u32 %s401, 1
        %s4017 = smul.addr %s4016, 896
        %s4018 = scalar_lea.vmem [#allocation2], %s4017
        // Predicated region
        $region89: #{deep_autoencoder.1} parent=87 // pred_check
          %p4019 = pneg %p411
        $region90: #{deep_autoencoder.1} parent=87 // pred_check_branch
          %4021 = sbr.rel (%p4019) target = $region92
        $region91: #{deep_autoencoder.1} parent=87 // pred_region
          %s4022 = smul.u32 16, %s31
          %s4023 = ssub.s32 25, %s4022
          %p4024 = scmp.lt.s32.totalorder %s4023, 16
          %s4025 = scalar_select %p4024, %s4023, 16
          %s4026 = smul.u32 128, %s4025
          %s4027 = smul.u32 %s4026, 7
          %s4029 = ssub.s32 14336, %s4027
          %4030 = vsyncadd %s4015, %s4029
          %p4031 = scmp.ne.s32.totalorder 0, %s4027
          %s4032 = smul.addr %s4022, 7
          %s4033 = smul.addr %s4032, 128
          %s4034 = scalar_lea.hbm %s17, %s4033
          %s4035 = smul.u32 56, %s4025
          %s4036 = sshll.u32 %s4018, 4
          %s4037 = int_to_ptr.vmem [resolvable:$true] %s4036
          %s4038 = sshll.u32 %s4035, 4
          %4042 = dma.vmem_to_hbm [thread:$0]  (%p4031), %s4037, %s4038, %s4034, %s4015, 896, 896, 56
        $region92: #{deep_autoencoder.1} parent=87 // pred_fallthru
          _
      $region88: #{deep_autoencoder.1} parent=5 // pred_fallthru
        _
      %p4043 = scmp.le.s32.totalorder 2, %s26
      // Predicated region
      $region93: #{deep_autoencoder.1} parent=5 // pred_check
        %p4044 = pneg %p4043
      $region94: #{deep_autoencoder.1} parent=5 // pred_check_branch
        %4046 = sbr.rel (%p4044) target = $region96
      $region95: #{deep_autoencoder.1} parent=5 // pred_region
        %s4047 = ssub.s32 %s26, 2
        // Predicated region
        $region97: #{deep_autoencoder.1} parent=95 // pred_check
          %p4048 = pneg %p417
        $region98: #{deep_autoencoder.1} parent=95 // pred_check_branch
          %4050 = sbr.rel (%p4048) target = $region100
        $region99: #{deep_autoencoder.1} parent=95 // pred_region
          %s4051 = sand.u32 %s402, 1
          %s4052 = scalar_lea.sflag [#allocation3], %s4051
          %s4053 = sand.u32 %s402, 1
          %s4054 = smul.addr %s4053, 896
          %s4055 = scalar_lea.vmem [#allocation2], %s4054
          %4056 = dma.done %s4052, 14336
        $region100: #{deep_autoencoder.1} parent=95 // pred_fallthru
          _
      $region96: #{deep_autoencoder.1} parent=5 // pred_fallthru
        _
    $region6: #{deep_autoencoder.1} parent=1 // loop_footer
      %s30 = sadd.s32 1, %s26
    $region7: #{deep_autoencoder.1} parent=1 // loop_footer_branch
      %25 = sbr.rel target = $region3
    $region8: #{deep_autoencoder.1} parent=1 // loop_exit
      _
    %4057 = vsyncpa [#allocation3], 1
    %s4058 = scalar_lea.sflag [#allocation3], 1
    %4059 = vsyncpa %s4058, 1

</llo_original>
